<compile_context>
chip_gen: v7x
topology: tpu7x:2x2x1
jax: 0.10.0
libtpu: 0.0.40
codegen_flags: <defaults>
</compile_context>

<pallas_src>
import functools

import jax
import jax.numpy as jnp
from jax.experimental import pallas as pl
from jax.experimental.pallas import tpu as pltpu


# ---------------------------------------------------------------------------
# Pallas kernel: one invocation, whole problem resident in VMEM.
# ---------------------------------------------------------------------------
def _encoder_block_kernel(
    x_ref,        # (N*S, E)
    wq_ref,       # (E, E)
    wk_ref,       # (E, E)
    wv_ref,       # (E, E)
    wo_ref,       # (H, hd, E)  per-head row blocks of the output projection
    w1_ref,       # (E, FF)
    w2_ref,       # (FF, E)
    vecs_ref,     # (9, E): bq, bk, bv, bo, g1, beta1, b2, g2, beta2
    b1_ref,       # (1, FF)
    o_ref,        # (N*S, E)
    *, n_batch, seq_len, num_heads, head_dim,
):
    x = x_ref[...]                        # (NS, E) f32
    vecs = vecs_ref[...]                  # (9, E)  — packed small vectors
    bq, bk, bv, bo = vecs[0:1], vecs[1:2], vecs[2:3], vecs[3:4]
    g1, beta1 = vecs[4:5], vecs[5:6]
    b2 = vecs[6:7]
    g2, beta2 = vecs[7:8], vecs[8:9]

    def layernorm(z, gamma, beta):
        mu = jnp.mean(z, axis=-1, keepdims=True)
        var = jnp.mean((z - mu) ** 2, axis=-1, keepdims=True)
        return (z - mu) * jax.lax.rsqrt(var + 1e-5) * gamma + beta

    # ---- QKV projections on the flattened (N*S, E) slab (one MXU pass each).
    # TODO(synk): at production sizes cast matmul operands to bf16 on v6e/v7x
    # (keep preferred_element_type=f32 accumulation and f32 elementwise math),
    # and switch attention to a KV-tiled flash-style loop for v7x's 64 MiB VMEM.
    scale = 1.0 / (head_dim ** 0.5)
    q = (jnp.dot(x, wq_ref[...], preferred_element_type=jnp.float32) + bq) * scale
    k = jnp.dot(x, wk_ref[...], preferred_element_type=jnp.float32) + bk
    v = jnp.dot(x, wv_ref[...], preferred_element_type=jnp.float32) + bv

    # ---- Attention: per (batch, head), accumulate each head's context directly
    # through its row block of Wo (no lane-axis concat of head outputs).
    batch_rows = []
    for b in range(n_batch):                       # static unroll (N is small)
        r0 = b * seq_len                           # sublane-aligned slice (S == 8)
        qb = q[r0:r0 + seq_len]
        kb = k[r0:r0 + seq_len]
        vb = v[r0:r0 + seq_len]
        acc = jnp.zeros((seq_len, x.shape[-1]), jnp.float32)
        for h in range(num_heads):                 # static unroll (H is small)
            c0 = h * head_dim
            qh = qb[:, c0:c0 + head_dim]           # (S, hd)
            kh = kb[:, c0:c0 + head_dim]
            vh = vb[:, c0:c0 + head_dim]
            s = jax.lax.dot_general(               # (S, S); q already carries scale
                qh, kh, (((1,), (1,)), ((), ())),
                preferred_element_type=jnp.float32)
            s = s - jnp.max(s, axis=-1, keepdims=True)
            p = jnp.exp(s)
            # NOTE: pl.reciprocal(denom, approx=True) would use the idle EUP slot,
            # but its approximation error is amplified by the two LayerNorms at
            # these small weight scales; exact divide keeps 1e-4 parity with the
            # f32 reference.
            p = p / jnp.sum(p, axis=-1, keepdims=True)
            ctx = jnp.dot(p, vh, preferred_element_type=jnp.float32)       # (S, hd)
            acc = acc + jnp.dot(ctx, wo_ref[h],
                                preferred_element_type=jnp.float32)        # (S, E)
        batch_rows.append(acc)
    attn = jnp.concatenate(batch_rows, axis=0) + bo      # (NS, E)
    # dropout -> identity (inference)

    # ---- LayerNorm 1 (no residual in the reference module) ----
    y = layernorm(attn, g1, beta1)

    # ---- Feed-forward on the flattened slab: Linear -> ReLU -> Linear ----
    h1 = jnp.dot(y, w1_ref[...], preferred_element_type=jnp.float32) + b1_ref[...]
    h1 = jnp.maximum(h1, 0.0)
    y2 = jnp.dot(h1, w2_ref[...], preferred_element_type=jnp.float32) + b2
    # dropout -> identity (inference)

    # ---- LayerNorm 2, single lane-slab store ----
    o_ref[...] = layernorm(y2, g2, beta2).astype(o_ref.dtype)


# ---------------------------------------------------------------------------
# Wrapper
# ---------------------------------------------------------------------------
def encoder_block_pallas(x, params, num_heads):
    N, S, E = x.shape
    FF = params["w1"].shape[1]
    head_dim = E // num_heads
    NS = N * S

    # Flatten activations; reshape Wo into per-head row blocks; pack the small
    # (1, E) vectors into a single array so the kernel has 9 inputs, not 17.
    x2d = x.reshape(NS, E)
    wo_h = params["wo"].reshape(num_heads, head_dim, E)
    vecs = jnp.concatenate(
        [params["bq"], params["bk"], params["bv"], params["bo"],
         params["g1"], params["beta1"], params["b2"],
         params["g2"], params["beta2"]],
        axis=0,
    )  # (9, E)

    args = [x2d, params["wq"], params["wk"], params["wv"], wo_h,
            params["w1"], params["w2"], vecs, params["b1"]]

    kernel = functools.partial(
        _encoder_block_kernel,
        n_batch=N, seq_len=S, num_heads=num_heads, head_dim=head_dim,
    )

    def full_spec(a):
        nd = a.ndim
        return pl.BlockSpec(a.shape, lambda i: (0,) * nd)

    out2d = pl.pallas_call(
        kernel,
        out_shape=jax.ShapeDtypeStruct((NS, E), jnp.float32),
        grid=(1,),                                    # single invocation
        in_specs=[full_spec(a) for a in args],
        out_specs=pl.BlockSpec((NS, E), lambda i: (0, 0)),
        compiler_params=pltpu.CompilerParams(
            dimension_semantics=("arbitrary",),
        ),
    )(*args)
    return out2d.reshape(N, S, E)


# ---------------------------------------------------------------------------
# Pure-JAX reference (mirrors the PyTorch forward, eval mode)
# ---------------------------------------------------------------------------
def encoder_block_ref(x, params, num_heads):
    N, S, E = x.shape
    hd = E // num_heads

    def ln(z, g, b):
        mu = jnp.mean(z, axis=-1, keepdims=True)
        var = jnp.mean((z - mu) ** 2, axis=-1, keepdims=True)
        return (z - mu) / jnp.sqrt(var + 1e-5) * g + b

    q = x @ params["wq"] + params["bq"]
    k = x @ params["wk"] + params["bk"]
    v = x @ params["wv"] + params["bv"]
    q = q.reshape(N, S, num_heads, hd).transpose(0, 2, 1, 3)
    k = k.reshape(N, S, num_heads, hd).transpose(0, 2, 1, 3)
    v = v.reshape(N, S, num_heads, hd).transpose(0, 2, 1, 3)
    s = jnp.einsum("nhqd,nhkd->nhqk", q, k) / jnp.sqrt(hd)
    p = jax.nn.softmax(s, axis=-1)
    a = jnp.einsum("nhqk,nhkd->nhqd", p, v).transpose(0, 2, 1, 3).reshape(N, S, E)
    a = a @ params["wo"] + params["bo"]
    y = ln(a, params["g1"], params["beta1"])
    h = jnp.maximum(y @ params["w1"] + params["b1"], 0.0)
    y2 = h @ params["w2"] + params["b2"]
    return ln(y2, params["g2"], params["beta2"])


# ---------------------------------------------------------------------------
# Main
# ---------------------------------------------------------------------------
if __name__ == "__main__":
    # config: embed_dim=32, num_heads=4, ff_dim=64, dropout=0.0 (eval)
    N, S, E, H, FF = 2, 8, 32, 4, 64

    key = jax.random.PRNGKey(0)
    ks = jax.random.split(key, 16)

    def rnd(k, shape, scale=0.05):
        return scale * jax.random.normal(k, shape, dtype=jnp.float32)

    # All projection weights are stored pre-transposed (in_dim, out_dim) so the
    # kernel computes y = x @ W + b (equivalent to PyTorch's x @ W_pt.T + b).
    params = {
        "wq": rnd(ks[0], (E, E)),  "bq": rnd(ks[1], (1, E)),
        "wk": rnd(ks[2], (E, E)),  "bk": rnd(ks[3], (1, E)),
        "wv": rnd(ks[4], (E, E)),  "bv": rnd(ks[5], (1, E)),
        "wo": rnd(ks[6], (E, E)),  "bo": rnd(ks[7], (1, E)),
        "g1": jnp.ones((1, E), jnp.float32), "beta1": jnp.zeros((1, E), jnp.float32),
        "w1": rnd(ks[8], (E, FF)), "b1": rnd(ks[9], (1, FF)),
        "w2": rnd(ks[10], (FF, E)), "b2": rnd(ks[11], (1, E)),
        "g2": jnp.ones((1, E), jnp.float32), "beta2": jnp.zeros((1, E), jnp.float32),
    }

    x = jax.random.normal(ks[12], (N, S, E), dtype=jnp.float32)

    out = encoder_block_pallas(x, params, num_heads=H)
    out = jax.block_until_ready(out)

    ref = encoder_block_ref(x, params, num_heads=H)
    assert out.shape == (N, S, E)
    assert jnp.allclose(out, ref, atol=1e-4, rtol=1e-4), "mismatch vs reference"

    print("KERNEL_OK")
</pallas_src>

<mosaic_0001>
module attributes {stable_mosaic.version = 11 : i64} {
  func.func @_encoder_block_kernel(%arg0: i32, %arg1: memref<16x32xf32, #tpu.memory_space<vmem>>, %arg2: memref<32x32xf32, #tpu.memory_space<vmem>>, %arg3: memref<32x32xf32, #tpu.memory_space<vmem>>, %arg4: memref<32x32xf32, #tpu.memory_space<vmem>>, %arg5: memref<4x8x32xf32, #tpu.memory_space<vmem>>, %arg6: memref<32x64xf32, #tpu.memory_space<vmem>>, %arg7: memref<64x32xf32, #tpu.memory_space<vmem>>, %arg8: memref<9x32xf32, #tpu.memory_space<vmem>>, %arg9: memref<1x64xf32, #tpu.memory_space<vmem>>, %arg10: memref<16x32xf32, #tpu.memory_space<vmem>>) attributes {dimension_semantics = [#tpu.dimension_semantics<arbitrary>], iteration_bounds = array<i64: 1>, scalar_prefetch = 0 : i64, scratch_operands = 0 : i64, tpu.core_type = #tpu.core_type<tc>, window_params = [{pipeline_mode = #tpu.pipeline_mode<synchronous>, transform_indices = @transform_0, window_bounds = array<i64: 16, 32>}, {pipeline_mode = #tpu.pipeline_mode<synchronous>, transform_indices = @transform_1, window_bounds = array<i64: 32, 32>}, {pipeline_mode = #tpu.pipeline_mode<synchronous>, transform_indices = @transform_2, window_bounds = array<i64: 32, 32>}, {pipeline_mode = #tpu.pipeline_mode<synchronous>, transform_indices = @transform_3, window_bounds = array<i64: 32, 32>}, {pipeline_mode = #tpu.pipeline_mode<synchronous>, transform_indices = @transform_4, window_bounds = array<i64: 4, 8, 32>}, {pipeline_mode = #tpu.pipeline_mode<synchronous>, transform_indices = @transform_5, window_bounds = array<i64: 32, 64>}, {pipeline_mode = #tpu.pipeline_mode<synchronous>, transform_indices = @transform_6, window_bounds = array<i64: 64, 32>}, {pipeline_mode = #tpu.pipeline_mode<synchronous>, transform_indices = @transform_7, window_bounds = array<i64: 9, 32>}, {pipeline_mode = #tpu.pipeline_mode<synchronous>, transform_indices = @transform_8, window_bounds = array<i64: 1, 64>}, {pipeline_mode = #tpu.pipeline_mode<synchronous>, transform_indices = @transform_9, window_bounds = array<i64: 16, 32>}]} {
    %c0 = arith.constant 0 : index
    %c0_0 = arith.constant 0 : index
    %0 = vector.load %arg1[%c0, %c0_0] : memref<16x32xf32, #tpu.memory_space<vmem>>, vector<16x32xf32>
    %c0_1 = arith.constant 0 : index
    %c0_2 = arith.constant 0 : index
    %1 = vector.load %arg8[%c0_1, %c0_2] : memref<9x32xf32, #tpu.memory_space<vmem>>, vector<9x32xf32>
    %2 = vector.extract_strided_slice %1 {offsets = [0, 0], sizes = [1, 32], strides = [1, 1]} : vector<9x32xf32> to vector<1x32xf32>
    %3 = vector.extract_strided_slice %1 {offsets = [1, 0], sizes = [1, 32], strides = [1, 1]} : vector<9x32xf32> to vector<1x32xf32>
    %4 = vector.extract_strided_slice %1 {offsets = [2, 0], sizes = [1, 32], strides = [1, 1]} : vector<9x32xf32> to vector<1x32xf32>
    %5 = vector.extract_strided_slice %1 {offsets = [3, 0], sizes = [1, 32], strides = [1, 1]} : vector<9x32xf32> to vector<1x32xf32>
    %6 = vector.extract_strided_slice %1 {offsets = [4, 0], sizes = [1, 32], strides = [1, 1]} : vector<9x32xf32> to vector<1x32xf32>
    %7 = vector.extract_strided_slice %1 {offsets = [5, 0], sizes = [1, 32], strides = [1, 1]} : vector<9x32xf32> to vector<1x32xf32>
    %8 = vector.extract_strided_slice %1 {offsets = [6, 0], sizes = [1, 32], strides = [1, 1]} : vector<9x32xf32> to vector<1x32xf32>
    %9 = vector.extract_strided_slice %1 {offsets = [7, 0], sizes = [1, 32], strides = [1, 1]} : vector<9x32xf32> to vector<1x32xf32>
    %10 = vector.extract_strided_slice %1 {offsets = [8, 0], sizes = [1, 32], strides = [1, 1]} : vector<9x32xf32> to vector<1x32xf32>
    %c0_3 = arith.constant 0 : index
    %c0_4 = arith.constant 0 : index
    %11 = vector.load %arg2[%c0_3, %c0_4] : memref<32x32xf32, #tpu.memory_space<vmem>>, vector<32x32xf32>
    %cst = arith.constant dense<0.000000e+00> : vector<16x32xf32>
    %12 = tpu.matmul %0, %11, %cst {dimension_numbers = #tpu.dot_dimension_numbers<[1], [0], [0], [1], [0, 0, 1, 1], [], []>} : vector<16x32xf32>, vector<32x32xf32>, vector<16x32xf32> -> vector<16x32xf32>
    %13 = vector.broadcast %2 : vector<1x32xf32> to vector<16x32xf32>
    %14 = arith.addf %12, %13 : vector<16x32xf32>
    %cst_5 = arith.constant 0.353553385 : f32
    %15 = vector.broadcast %cst_5 : f32 to vector<16x32xf32>
    %16 = arith.mulf %14, %15 : vector<16x32xf32>
    %c0_6 = arith.constant 0 : index
    %c0_7 = arith.constant 0 : index
    %17 = vector.load %arg3[%c0_6, %c0_7] : memref<32x32xf32, #tpu.memory_space<vmem>>, vector<32x32xf32>
    %cst_8 = arith.constant dense<0.000000e+00> : vector<16x32xf32>
    %18 = tpu.matmul %0, %17, %cst_8 {dimension_numbers = #tpu.dot_dimension_numbers<[1], [0], [0], [1], [0, 0, 1, 1], [], []>} : vector<16x32xf32>, vector<32x32xf32>, vector<16x32xf32> -> vector<16x32xf32>
    %19 = vector.broadcast %3 : vector<1x32xf32> to vector<16x32xf32>
    %20 = arith.addf %18, %19 : vector<16x32xf32>
    %c0_9 = arith.constant 0 : index
    %c0_10 = arith.constant 0 : index
    %21 = vector.load %arg4[%c0_9, %c0_10] : memref<32x32xf32, #tpu.memory_space<vmem>>, vector<32x32xf32>
    %cst_11 = arith.constant dense<0.000000e+00> : vector<16x32xf32>
    %22 = tpu.matmul %0, %21, %cst_11 {dimension_numbers = #tpu.dot_dimension_numbers<[1], [0], [0], [1], [0, 0, 1, 1], [], []>} : vector<16x32xf32>, vector<32x32xf32>, vector<16x32xf32> -> vector<16x32xf32>
    %23 = vector.broadcast %4 : vector<1x32xf32> to vector<16x32xf32>
    %24 = arith.addf %22, %23 : vector<16x32xf32>
    %25 = vector.extract_strided_slice %16 {offsets = [0, 0], sizes = [8, 32], strides = [1, 1]} : vector<16x32xf32> to vector<8x32xf32>
    %26 = vector.extract_strided_slice %20 {offsets = [0, 0], sizes = [8, 32], strides = [1, 1]} : vector<16x32xf32> to vector<8x32xf32>
    %27 = vector.extract_strided_slice %24 {offsets = [0, 0], sizes = [8, 32], strides = [1, 1]} : vector<16x32xf32> to vector<8x32xf32>
    %cst_12 = arith.constant 0.000000e+00 : f32
    %28 = vector.broadcast %cst_12 : f32 to vector<8x32xf32>
    %29 = vector.extract_strided_slice %25 {offsets = [0, 0], sizes = [8, 8], strides = [1, 1]} : vector<8x32xf32> to vector<8x8xf32>
    %30 = vector.extract_strided_slice %26 {offsets = [0, 0], sizes = [8, 8], strides = [1, 1]} : vector<8x32xf32> to vector<8x8xf32>
    %31 = vector.extract_strided_slice %27 {offsets = [0, 0], sizes = [8, 8], strides = [1, 1]} : vector<8x32xf32> to vector<8x8xf32>
    %cst_13 = arith.constant dense<0.000000e+00> : vector<8x8xf32>
    %32 = tpu.matmul %29, %30, %cst_13 {dimension_numbers = #tpu.dot_dimension_numbers<[1], [1], [0], [0], [0, 0, 1, 0], [], []>} : vector<8x8xf32>, vector<8x8xf32>, vector<8x8xf32> -> vector<8x8xf32>
    %cst_14 = arith.constant dense<0xFF800000> : vector<8xf32>
    %33 = vector.multi_reduction <maximumf>, %32, %cst_14 [1] : vector<8x8xf32> to vector<8xf32>
    %34 = vector.shape_cast %33 : vector<8xf32> to vector<8x1xf32>
    %35 = vector.broadcast %34 : vector<8x1xf32> to vector<8x8xf32>
    %36 = arith.subf %32, %35 : vector<8x8xf32>
    %37 = math.exp %36 : vector<8x8xf32>
    %cst_15 = arith.constant dense<0.000000e+00> : vector<8xf32>
    %38 = vector.multi_reduction <add>, %37, %cst_15 [1] : vector<8x8xf32> to vector<8xf32>
    %39 = vector.shape_cast %38 : vector<8xf32> to vector<8x1xf32>
    %40 = vector.broadcast %39 : vector<8x1xf32> to vector<8x8xf32>
    %41 = arith.divf %37, %40 : vector<8x8xf32>
    %cst_16 = arith.constant dense<0.000000e+00> : vector<8x8xf32>
    %42 = tpu.matmul %41, %31, %cst_16 {dimension_numbers = #tpu.dot_dimension_numbers<[1], [0], [0], [1], [0, 0, 1, 1], [], []>} : vector<8x8xf32>, vector<8x8xf32>, vector<8x8xf32> -> vector<8x8xf32>
    %c0_17 = arith.constant 0 : index
    %c0_18 = arith.constant 0 : index
    %c0_19 = arith.constant 0 : index
    %43 = vector.load %arg5[%c0_17, %c0_18, %c0_19] : memref<4x8x32xf32, #tpu.memory_space<vmem>>, vector<1x8x32xf32>
    %44 = vector.shape_cast %43 : vector<1x8x32xf32> to vector<8x32xf32>
    %cst_20 = arith.constant dense<0.000000e+00> : vector<8x32xf32>
    %45 = tpu.matmul %42, %44, %cst_20 {dimension_numbers = #tpu.dot_dimension_numbers<[1], [0], [0], [1], [0, 0, 1, 1], [], []>} : vector<8x8xf32>, vector<8x32xf32>, vector<8x32xf32> -> vector<8x32xf32>
    %46 = arith.addf %28, %45 : vector<8x32xf32>
    %47 = vector.extract_strided_slice %25 {offsets = [0, 8], sizes = [8, 8], strides = [1, 1]} : vector<8x32xf32> to vector<8x8xf32>
    %48 = vector.extract_strided_slice %26 {offsets = [0, 8], sizes = [8, 8], strides = [1, 1]} : vector<8x32xf32> to vector<8x8xf32>
    %49 = vector.extract_strided_slice %27 {offsets = [0, 8], sizes = [8, 8], strides = [1, 1]} : vector<8x32xf32> to vector<8x8xf32>
    %cst_21 = arith.constant dense<0.000000e+00> : vector<8x8xf32>
    %50 = tpu.matmul %47, %48, %cst_21 {dimension_numbers = #tpu.dot_dimension_numbers<[1], [1], [0], [0], [0, 0, 1, 0], [], []>} : vector<8x8xf32>, vector<8x8xf32>, vector<8x8xf32> -> vector<8x8xf32>
    %cst_22 = arith.constant dense<0xFF800000> : vector<8xf32>
    %51 = vector.multi_reduction <maximumf>, %50, %cst_22 [1] : vector<8x8xf32> to vector<8xf32>
    %52 = vector.shape_cast %51 : vector<8xf32> to vector<8x1xf32>
    %53 = vector.broadcast %52 : vector<8x1xf32> to vector<8x8xf32>
    %54 = arith.subf %50, %53 : vector<8x8xf32>
    %55 = math.exp %54 : vector<8x8xf32>
    %cst_23 = arith.constant dense<0.000000e+00> : vector<8xf32>
    %56 = vector.multi_reduction <add>, %55, %cst_23 [1] : vector<8x8xf32> to vector<8xf32>
    %57 = vector.shape_cast %56 : vector<8xf32> to vector<8x1xf32>
    %58 = vector.broadcast %57 : vector<8x1xf32> to vector<8x8xf32>
    %59 = arith.divf %55, %58 : vector<8x8xf32>
    %cst_24 = arith.constant dense<0.000000e+00> : vector<8x8xf32>
    %60 = tpu.matmul %59, %49, %cst_24 {dimension_numbers = #tpu.dot_dimension_numbers<[1], [0], [0], [1], [0, 0, 1, 1], [], []>} : vector<8x8xf32>, vector<8x8xf32>, vector<8x8xf32> -> vector<8x8xf32>
    %c1 = arith.constant 1 : index
    %c0_25 = arith.constant 0 : index
    %c0_26 = arith.constant 0 : index
    %61 = vector.load %arg5[%c1, %c0_25, %c0_26] : memref<4x8x32xf32, #tpu.memory_space<vmem>>, vector<1x8x32xf32>
    %62 = vector.shape_cast %61 : vector<1x8x32xf32> to vector<8x32xf32>
    %cst_27 = arith.constant dense<0.000000e+00> : vector<8x32xf32>
    %63 = tpu.matmul %60, %62, %cst_27 {dimension_numbers = #tpu.dot_dimension_numbers<[1], [0], [0], [1], [0, 0, 1, 1], [], []>} : vector<8x8xf32>, vector<8x32xf32>, vector<8x32xf32> -> vector<8x32xf32>
    %64 = arith.addf %46, %63 : vector<8x32xf32>
    %65 = vector.extract_strided_slice %25 {offsets = [0, 16], sizes = [8, 8], strides = [1, 1]} : vector<8x32xf32> to vector<8x8xf32>
    %66 = vector.extract_strided_slice %26 {offsets = [0, 16], sizes = [8, 8], strides = [1, 1]} : vector<8x32xf32> to vector<8x8xf32>
    %67 = vector.extract_strided_slice %27 {offsets = [0, 16], sizes = [8, 8], strides = [1, 1]} : vector<8x32xf32> to vector<8x8xf32>
    %cst_28 = arith.constant dense<0.000000e+00> : vector<8x8xf32>
    %68 = tpu.matmul %65, %66, %cst_28 {dimension_numbers = #tpu.dot_dimension_numbers<[1], [1], [0], [0], [0, 0, 1, 0], [], []>} : vector<8x8xf32>, vector<8x8xf32>, vector<8x8xf32> -> vector<8x8xf32>
    %cst_29 = arith.constant dense<0xFF800000> : vector<8xf32>
    %69 = vector.multi_reduction <maximumf>, %68, %cst_29 [1] : vector<8x8xf32> to vector<8xf32>
    %70 = vector.shape_cast %69 : vector<8xf32> to vector<8x1xf32>
    %71 = vector.broadcast %70 : vector<8x1xf32> to vector<8x8xf32>
    %72 = arith.subf %68, %71 : vector<8x8xf32>
    %73 = math.exp %72 : vector<8x8xf32>
    %cst_30 = arith.constant dense<0.000000e+00> : vector<8xf32>
    %74 = vector.multi_reduction <add>, %73, %cst_30 [1] : vector<8x8xf32> to vector<8xf32>
    %75 = vector.shape_cast %74 : vector<8xf32> to vector<8x1xf32>
    %76 = vector.broadcast %75 : vector<8x1xf32> to vector<8x8xf32>
    %77 = arith.divf %73, %76 : vector<8x8xf32>
    %cst_31 = arith.constant dense<0.000000e+00> : vector<8x8xf32>
    %78 = tpu.matmul %77, %67, %cst_31 {dimension_numbers = #tpu.dot_dimension_numbers<[1], [0], [0], [1], [0, 0, 1, 1], [], []>} : vector<8x8xf32>, vector<8x8xf32>, vector<8x8xf32> -> vector<8x8xf32>
    %c2 = arith.constant 2 : index
    %c0_32 = arith.constant 0 : index
    %c0_33 = arith.constant 0 : index
    %79 = vector.load %arg5[%c2, %c0_32, %c0_33] : memref<4x8x32xf32, #tpu.memory_space<vmem>>, vector<1x8x32xf32>
    %80 = vector.shape_cast %79 : vector<1x8x32xf32> to vector<8x32xf32>
    %cst_34 = arith.constant dense<0.000000e+00> : vector<8x32xf32>
    %81 = tpu.matmul %78, %80, %cst_34 {dimension_numbers = #tpu.dot_dimension_numbers<[1], [0], [0], [1], [0, 0, 1, 1], [], []>} : vector<8x8xf32>, vector<8x32xf32>, vector<8x32xf32> -> vector<8x32xf32>
    %82 = arith.addf %64, %81 : vector<8x32xf32>
    %83 = vector.extract_strided_slice %25 {offsets = [0, 24], sizes = [8, 8], strides = [1, 1]} : vector<8x32xf32> to vector<8x8xf32>
    %84 = vector.extract_strided_slice %26 {offsets = [0, 24], sizes = [8, 8], strides = [1, 1]} : vector<8x32xf32> to vector<8x8xf32>
    %85 = vector.extract_strided_slice %27 {offsets = [0, 24], sizes = [8, 8], strides = [1, 1]} : vector<8x32xf32> to vector<8x8xf32>
    %cst_35 = arith.constant dense<0.000000e+00> : vector<8x8xf32>
    %86 = tpu.matmul %83, %84, %cst_35 {dimension_numbers = #tpu.dot_dimension_numbers<[1], [1], [0], [0], [0, 0, 1, 0], [], []>} : vector<8x8xf32>, vector<8x8xf32>, vector<8x8xf32> -> vector<8x8xf32>
    %cst_36 = arith.constant dense<0xFF800000> : vector<8xf32>
    %87 = vector.multi_reduction <maximumf>, %86, %cst_36 [1] : vector<8x8xf32> to vector<8xf32>
    %88 = vector.shape_cast %87 : vector<8xf32> to vector<8x1xf32>
    %89 = vector.broadcast %88 : vector<8x1xf32> to vector<8x8xf32>
    %90 = arith.subf %86, %89 : vector<8x8xf32>
    %91 = math.exp %90 : vector<8x8xf32>
    %cst_37 = arith.constant dense<0.000000e+00> : vector<8xf32>
    %92 = vector.multi_reduction <add>, %91, %cst_37 [1] : vector<8x8xf32> to vector<8xf32>
    %93 = vector.shape_cast %92 : vector<8xf32> to vector<8x1xf32>
    %94 = vector.broadcast %93 : vector<8x1xf32> to vector<8x8xf32>
    %95 = arith.divf %91, %94 : vector<8x8xf32>
    %cst_38 = arith.constant dense<0.000000e+00> : vector<8x8xf32>
    %96 = tpu.matmul %95, %85, %cst_38 {dimension_numbers = #tpu.dot_dimension_numbers<[1], [0], [0], [1], [0, 0, 1, 1], [], []>} : vector<8x8xf32>, vector<8x8xf32>, vector<8x8xf32> -> vector<8x8xf32>
    %c3 = arith.constant 3 : index
    %c0_39 = arith.constant 0 : index
    %c0_40 = arith.constant 0 : index
    %97 = vector.load %arg5[%c3, %c0_39, %c0_40] : memref<4x8x32xf32, #tpu.memory_space<vmem>>, vector<1x8x32xf32>
    %98 = vector.shape_cast %97 : vector<1x8x32xf32> to vector<8x32xf32>
    %cst_41 = arith.constant dense<0.000000e+00> : vector<8x32xf32>
    %99 = tpu.matmul %96, %98, %cst_41 {dimension_numbers = #tpu.dot_dimension_numbers<[1], [0], [0], [1], [0, 0, 1, 1], [], []>} : vector<8x8xf32>, vector<8x32xf32>, vector<8x32xf32> -> vector<8x32xf32>
    %100 = arith.addf %82, %99 : vector<8x32xf32>
    %101 = vector.extract_strided_slice %16 {offsets = [8, 0], sizes = [8, 32], strides = [1, 1]} : vector<16x32xf32> to vector<8x32xf32>
    %102 = vector.extract_strided_slice %20 {offsets = [8, 0], sizes = [8, 32], strides = [1, 1]} : vector<16x32xf32> to vector<8x32xf32>
    %103 = vector.extract_strided_slice %24 {offsets = [8, 0], sizes = [8, 32], strides = [1, 1]} : vector<16x32xf32> to vector<8x32xf32>
    %cst_42 = arith.constant 0.000000e+00 : f32
    %104 = vector.broadcast %cst_42 : f32 to vector<8x32xf32>
    %105 = vector.extract_strided_slice %101 {offsets = [0, 0], sizes = [8, 8], strides = [1, 1]} : vector<8x32xf32> to vector<8x8xf32>
    %106 = vector.extract_strided_slice %102 {offsets = [0, 0], sizes = [8, 8], strides = [1, 1]} : vector<8x32xf32> to vector<8x8xf32>
    %107 = vector.extract_strided_slice %103 {offsets = [0, 0], sizes = [8, 8], strides = [1, 1]} : vector<8x32xf32> to vector<8x8xf32>
    %cst_43 = arith.constant dense<0.000000e+00> : vector<8x8xf32>
    %108 = tpu.matmul %105, %106, %cst_43 {dimension_numbers = #tpu.dot_dimension_numbers<[1], [1], [0], [0], [0, 0, 1, 0], [], []>} : vector<8x8xf32>, vector<8x8xf32>, vector<8x8xf32> -> vector<8x8xf32>
    %cst_44 = arith.constant dense<0xFF800000> : vector<8xf32>
    %109 = vector.multi_reduction <maximumf>, %108, %cst_44 [1] : vector<8x8xf32> to vector<8xf32>
    %110 = vector.shape_cast %109 : vector<8xf32> to vector<8x1xf32>
    %111 = vector.broadcast %110 : vector<8x1xf32> to vector<8x8xf32>
    %112 = arith.subf %108, %111 : vector<8x8xf32>
    %113 = math.exp %112 : vector<8x8xf32>
    %cst_45 = arith.constant dense<0.000000e+00> : vector<8xf32>
    %114 = vector.multi_reduction <add>, %113, %cst_45 [1] : vector<8x8xf32> to vector<8xf32>
    %115 = vector.shape_cast %114 : vector<8xf32> to vector<8x1xf32>
    %116 = vector.broadcast %115 : vector<8x1xf32> to vector<8x8xf32>
    %117 = arith.divf %113, %116 : vector<8x8xf32>
    %cst_46 = arith.constant dense<0.000000e+00> : vector<8x8xf32>
    %118 = tpu.matmul %117, %107, %cst_46 {dimension_numbers = #tpu.dot_dimension_numbers<[1], [0], [0], [1], [0, 0, 1, 1], [], []>} : vector<8x8xf32>, vector<8x8xf32>, vector<8x8xf32> -> vector<8x8xf32>
    %c0_47 = arith.constant 0 : index
    %c0_48 = arith.constant 0 : index
    %c0_49 = arith.constant 0 : index
    %119 = vector.load %arg5[%c0_47, %c0_48, %c0_49] : memref<4x8x32xf32, #tpu.memory_space<vmem>>, vector<1x8x32xf32>
    %120 = vector.shape_cast %119 : vector<1x8x32xf32> to vector<8x32xf32>
    %cst_50 = arith.constant dense<0.000000e+00> : vector<8x32xf32>
    %121 = tpu.matmul %118, %120, %cst_50 {dimension_numbers = #tpu.dot_dimension_numbers<[1], [0], [0], [1], [0, 0, 1, 1], [], []>} : vector<8x8xf32>, vector<8x32xf32>, vector<8x32xf32> -> vector<8x32xf32>
    %122 = arith.addf %104, %121 : vector<8x32xf32>
    %123 = vector.extract_strided_slice %101 {offsets = [0, 8], sizes = [8, 8], strides = [1, 1]} : vector<8x32xf32> to vector<8x8xf32>
    %124 = vector.extract_strided_slice %102 {offsets = [0, 8], sizes = [8, 8], strides = [1, 1]} : vector<8x32xf32> to vector<8x8xf32>
    %125 = vector.extract_strided_slice %103 {offsets = [0, 8], sizes = [8, 8], strides = [1, 1]} : vector<8x32xf32> to vector<8x8xf32>
    %cst_51 = arith.constant dense<0.000000e+00> : vector<8x8xf32>
    %126 = tpu.matmul %123, %124, %cst_51 {dimension_numbers = #tpu.dot_dimension_numbers<[1], [1], [0], [0], [0, 0, 1, 0], [], []>} : vector<8x8xf32>, vector<8x8xf32>, vector<8x8xf32> -> vector<8x8xf32>
    %cst_52 = arith.constant dense<0xFF800000> : vector<8xf32>
    %127 = vector.multi_reduction <maximumf>, %126, %cst_52 [1] : vector<8x8xf32> to vector<8xf32>
    %128 = vector.shape_cast %127 : vector<8xf32> to vector<8x1xf32>
    %129 = vector.broadcast %128 : vector<8x1xf32> to vector<8x8xf32>
    %130 = arith.subf %126, %129 : vector<8x8xf32>
    %131 = math.exp %130 : vector<8x8xf32>
    %cst_53 = arith.constant dense<0.000000e+00> : vector<8xf32>
    %132 = vector.multi_reduction <add>, %131, %cst_53 [1] : vector<8x8xf32> to vector<8xf32>
    %133 = vector.shape_cast %132 : vector<8xf32> to vector<8x1xf32>
    %134 = vector.broadcast %133 : vector<8x1xf32> to vector<8x8xf32>
    %135 = arith.divf %131, %134 : vector<8x8xf32>
    %cst_54 = arith.constant dense<0.000000e+00> : vector<8x8xf32>
    %136 = tpu.matmul %135, %125, %cst_54 {dimension_numbers = #tpu.dot_dimension_numbers<[1], [0], [0], [1], [0, 0, 1, 1], [], []>} : vector<8x8xf32>, vector<8x8xf32>, vector<8x8xf32> -> vector<8x8xf32>
    %c1_55 = arith.constant 1 : index
    %c0_56 = arith.constant 0 : index
    %c0_57 = arith.constant 0 : index
    %137 = vector.load %arg5[%c1_55, %c0_56, %c0_57] : memref<4x8x32xf32, #tpu.memory_space<vmem>>, vector<1x8x32xf32>
    %138 = vector.shape_cast %137 : vector<1x8x32xf32> to vector<8x32xf32>
    %cst_58 = arith.constant dense<0.000000e+00> : vector<8x32xf32>
    %139 = tpu.matmul %136, %138, %cst_58 {dimension_numbers = #tpu.dot_dimension_numbers<[1], [0], [0], [1], [0, 0, 1, 1], [], []>} : vector<8x8xf32>, vector<8x32xf32>, vector<8x32xf32> -> vector<8x32xf32>
    %140 = arith.addf %122, %139 : vector<8x32xf32>
    %141 = vector.extract_strided_slice %101 {offsets = [0, 16], sizes = [8, 8], strides = [1, 1]} : vector<8x32xf32> to vector<8x8xf32>
    %142 = vector.extract_strided_slice %102 {offsets = [0, 16], sizes = [8, 8], strides = [1, 1]} : vector<8x32xf32> to vector<8x8xf32>
    %143 = vector.extract_strided_slice %103 {offsets = [0, 16], sizes = [8, 8], strides = [1, 1]} : vector<8x32xf32> to vector<8x8xf32>
    %cst_59 = arith.constant dense<0.000000e+00> : vector<8x8xf32>
    %144 = tpu.matmul %141, %142, %cst_59 {dimension_numbers = #tpu.dot_dimension_numbers<[1], [1], [0], [0], [0, 0, 1, 0], [], []>} : vector<8x8xf32>, vector<8x8xf32>, vector<8x8xf32> -> vector<8x8xf32>
    %cst_60 = arith.constant dense<0xFF800000> : vector<8xf32>
    %145 = vector.multi_reduction <maximumf>, %144, %cst_60 [1] : vector<8x8xf32> to vector<8xf32>
    %146 = vector.shape_cast %145 : vector<8xf32> to vector<8x1xf32>
    %147 = vector.broadcast %146 : vector<8x1xf32> to vector<8x8xf32>
    %148 = arith.subf %144, %147 : vector<8x8xf32>
    %149 = math.exp %148 : vector<8x8xf32>
    %cst_61 = arith.constant dense<0.000000e+00> : vector<8xf32>
    %150 = vector.multi_reduction <add>, %149, %cst_61 [1] : vector<8x8xf32> to vector<8xf32>
    %151 = vector.shape_cast %150 : vector<8xf32> to vector<8x1xf32>
    %152 = vector.broadcast %151 : vector<8x1xf32> to vector<8x8xf32>
    %153 = arith.divf %149, %152 : vector<8x8xf32>
    %cst_62 = arith.constant dense<0.000000e+00> : vector<8x8xf32>
    %154 = tpu.matmul %153, %143, %cst_62 {dimension_numbers = #tpu.dot_dimension_numbers<[1], [0], [0], [1], [0, 0, 1, 1], [], []>} : vector<8x8xf32>, vector<8x8xf32>, vector<8x8xf32> -> vector<8x8xf32>
    %c2_63 = arith.constant 2 : index
    %c0_64 = arith.constant 0 : index
    %c0_65 = arith.constant 0 : index
    %155 = vector.load %arg5[%c2_63, %c0_64, %c0_65] : memref<4x8x32xf32, #tpu.memory_space<vmem>>, vector<1x8x32xf32>
    %156 = vector.shape_cast %155 : vector<1x8x32xf32> to vector<8x32xf32>
    %cst_66 = arith.constant dense<0.000000e+00> : vector<8x32xf32>
    %157 = tpu.matmul %154, %156, %cst_66 {dimension_numbers = #tpu.dot_dimension_numbers<[1], [0], [0], [1], [0, 0, 1, 1], [], []>} : vector<8x8xf32>, vector<8x32xf32>, vector<8x32xf32> -> vector<8x32xf32>
    %158 = arith.addf %140, %157 : vector<8x32xf32>
    %159 = vector.extract_strided_slice %101 {offsets = [0, 24], sizes = [8, 8], strides = [1, 1]} : vector<8x32xf32> to vector<8x8xf32>
    %160 = vector.extract_strided_slice %102 {offsets = [0, 24], sizes = [8, 8], strides = [1, 1]} : vector<8x32xf32> to vector<8x8xf32>
    %161 = vector.extract_strided_slice %103 {offsets = [0, 24], sizes = [8, 8], strides = [1, 1]} : vector<8x32xf32> to vector<8x8xf32>
    %cst_67 = arith.constant dense<0.000000e+00> : vector<8x8xf32>
    %162 = tpu.matmul %159, %160, %cst_67 {dimension_numbers = #tpu.dot_dimension_numbers<[1], [1], [0], [0], [0, 0, 1, 0], [], []>} : vector<8x8xf32>, vector<8x8xf32>, vector<8x8xf32> -> vector<8x8xf32>
    %cst_68 = arith.constant dense<0xFF800000> : vector<8xf32>
    %163 = vector.multi_reduction <maximumf>, %162, %cst_68 [1] : vector<8x8xf32> to vector<8xf32>
    %164 = vector.shape_cast %163 : vector<8xf32> to vector<8x1xf32>
    %165 = vector.broadcast %164 : vector<8x1xf32> to vector<8x8xf32>
    %166 = arith.subf %162, %165 : vector<8x8xf32>
    %167 = math.exp %166 : vector<8x8xf32>
    %cst_69 = arith.constant dense<0.000000e+00> : vector<8xf32>
    %168 = vector.multi_reduction <add>, %167, %cst_69 [1] : vector<8x8xf32> to vector<8xf32>
    %169 = vector.shape_cast %168 : vector<8xf32> to vector<8x1xf32>
    %170 = vector.broadcast %169 : vector<8x1xf32> to vector<8x8xf32>
    %171 = arith.divf %167, %170 : vector<8x8xf32>
    %cst_70 = arith.constant dense<0.000000e+00> : vector<8x8xf32>
    %172 = tpu.matmul %171, %161, %cst_70 {dimension_numbers = #tpu.dot_dimension_numbers<[1], [0], [0], [1], [0, 0, 1, 1], [], []>} : vector<8x8xf32>, vector<8x8xf32>, vector<8x8xf32> -> vector<8x8xf32>
    %c3_71 = arith.constant 3 : index
    %c0_72 = arith.constant 0 : index
    %c0_73 = arith.constant 0 : index
    %173 = vector.load %arg5[%c3_71, %c0_72, %c0_73] : memref<4x8x32xf32, #tpu.memory_space<vmem>>, vector<1x8x32xf32>
    %174 = vector.shape_cast %173 : vector<1x8x32xf32> to vector<8x32xf32>
    %cst_74 = arith.constant dense<0.000000e+00> : vector<8x32xf32>
    %175 = tpu.matmul %172, %174, %cst_74 {dimension_numbers = #tpu.dot_dimension_numbers<[1], [0], [0], [1], [0, 0, 1, 1], [], []>} : vector<8x8xf32>, vector<8x32xf32>, vector<8x32xf32> -> vector<8x32xf32>
    %176 = arith.addf %158, %175 : vector<8x32xf32>
    %177 = tpu.concatenate %100, %176 in 0 : vector<8x32xf32>, vector<8x32xf32> -> vector<16x32xf32>
    %178 = vector.broadcast %5 : vector<1x32xf32> to vector<16x32xf32>
    %179 = arith.addf %177, %178 : vector<16x32xf32>
    %cst_75 = arith.constant dense<0.000000e+00> : vector<16xf32>
    %180 = vector.multi_reduction <add>, %179, %cst_75 [1] : vector<16x32xf32> to vector<16xf32>
    %181 = vector.shape_cast %180 : vector<16xf32> to vector<16x1xf32>
    %cst_76 = arith.constant 3.200000e+01 : f32
    %182 = vector.broadcast %cst_76 : f32 to vector<16x1xf32>
    %183 = arith.divf %181, %182 : vector<16x1xf32>
    %184 = vector.broadcast %183 : vector<16x1xf32> to vector<16x32xf32>
    %185 = arith.subf %179, %184 : vector<16x32xf32>
    %186 = arith.mulf %185, %185 : vector<16x32xf32>
    %cst_77 = arith.constant dense<0.000000e+00> : vector<16xf32>
    %187 = vector.multi_reduction <add>, %186, %cst_77 [1] : vector<16x32xf32> to vector<16xf32>
    %188 = vector.shape_cast %187 : vector<16xf32> to vector<16x1xf32>
    %cst_78 = arith.constant 3.200000e+01 : f32
    %189 = vector.broadcast %cst_78 : f32 to vector<16x1xf32>
    %190 = arith.divf %188, %189 : vector<16x1xf32>
    %191 = vector.broadcast %183 : vector<16x1xf32> to vector<16x32xf32>
    %192 = arith.subf %179, %191 : vector<16x32xf32>
    %cst_79 = arith.constant 9.99999974E-6 : f32
    %193 = vector.broadcast %cst_79 : f32 to vector<16x1xf32>
    %194 = arith.addf %190, %193 : vector<16x1xf32>
    %195 = math.rsqrt %194 : vector<16x1xf32>
    %196 = vector.broadcast %195 : vector<16x1xf32> to vector<16x32xf32>
    %197 = arith.mulf %192, %196 : vector<16x32xf32>
    %198 = vector.broadcast %6 : vector<1x32xf32> to vector<16x32xf32>
    %199 = arith.mulf %197, %198 : vector<16x32xf32>
    %200 = vector.broadcast %7 : vector<1x32xf32> to vector<16x32xf32>
    %201 = arith.addf %199, %200 : vector<16x32xf32>
    %c0_80 = arith.constant 0 : index
    %c0_81 = arith.constant 0 : index
    %202 = vector.load %arg6[%c0_80, %c0_81] : memref<32x64xf32, #tpu.memory_space<vmem>>, vector<32x64xf32>
    %cst_82 = arith.constant dense<0.000000e+00> : vector<16x64xf32>
    %203 = tpu.matmul %201, %202, %cst_82 {dimension_numbers = #tpu.dot_dimension_numbers<[1], [0], [0], [1], [0, 0, 1, 1], [], []>} : vector<16x32xf32>, vector<32x64xf32>, vector<16x64xf32> -> vector<16x64xf32>
    %c0_83 = arith.constant 0 : index
    %c0_84 = arith.constant 0 : index
    %204 = vector.load %arg9[%c0_83, %c0_84] : memref<1x64xf32, #tpu.memory_space<vmem>>, vector<1x64xf32>
    %205 = vector.broadcast %204 : vector<1x64xf32> to vector<16x64xf32>
    %206 = arith.addf %203, %205 : vector<16x64xf32>
    %cst_85 = arith.constant 0.000000e+00 : f32
    %207 = vector.broadcast %cst_85 : f32 to vector<16x64xf32>
    %208 = arith.maximumf %206, %207 : vector<16x64xf32>
    %c0_86 = arith.constant 0 : index
    %c0_87 = arith.constant 0 : index
    %209 = vector.load %arg7[%c0_86, %c0_87] : memref<64x32xf32, #tpu.memory_space<vmem>>, vector<64x32xf32>
    %cst_88 = arith.constant dense<0.000000e+00> : vector<16x32xf32>
    %210 = tpu.matmul %208, %209, %cst_88 {dimension_numbers = #tpu.dot_dimension_numbers<[1], [0], [0], [1], [0, 0, 1, 1], [], []>} : vector<16x64xf32>, vector<64x32xf32>, vector<16x32xf32> -> vector<16x32xf32>
    %211 = vector.broadcast %8 : vector<1x32xf32> to vector<16x32xf32>
    %212 = arith.addf %210, %211 : vector<16x32xf32>
    %cst_89 = arith.constant dense<0.000000e+00> : vector<16xf32>
    %213 = vector.multi_reduction <add>, %212, %cst_89 [1] : vector<16x32xf32> to vector<16xf32>
    %214 = vector.shape_cast %213 : vector<16xf32> to vector<16x1xf32>
    %cst_90 = arith.constant 3.200000e+01 : f32
    %215 = vector.broadcast %cst_90 : f32 to vector<16x1xf32>
    %216 = arith.divf %214, %215 : vector<16x1xf32>
    %217 = vector.broadcast %216 : vector<16x1xf32> to vector<16x32xf32>
    %218 = arith.subf %212, %217 : vector<16x32xf32>
    %219 = arith.mulf %218, %218 : vector<16x32xf32>
    %cst_91 = arith.constant dense<0.000000e+00> : vector<16xf32>
    %220 = vector.multi_reduction <add>, %219, %cst_91 [1] : vector<16x32xf32> to vector<16xf32>
    %221 = vector.shape_cast %220 : vector<16xf32> to vector<16x1xf32>
    %cst_92 = arith.constant 3.200000e+01 : f32
    %222 = vector.broadcast %cst_92 : f32 to vector<16x1xf32>
    %223 = arith.divf %221, %222 : vector<16x1xf32>
    %224 = vector.broadcast %216 : vector<16x1xf32> to vector<16x32xf32>
    %225 = arith.subf %212, %224 : vector<16x32xf32>
    %cst_93 = arith.constant 9.99999974E-6 : f32
    %226 = vector.broadcast %cst_93 : f32 to vector<16x1xf32>
    %227 = arith.addf %223, %226 : vector<16x1xf32>
    %228 = math.rsqrt %227 : vector<16x1xf32>
    %229 = vector.broadcast %228 : vector<16x1xf32> to vector<16x32xf32>
    %230 = arith.mulf %225, %229 : vector<16x32xf32>
    %231 = vector.broadcast %9 : vector<1x32xf32> to vector<16x32xf32>
    %232 = arith.mulf %230, %231 : vector<16x32xf32>
    %233 = vector.broadcast %10 : vector<1x32xf32> to vector<16x32xf32>
    %234 = arith.addf %232, %233 : vector<16x32xf32>
    %c0_94 = arith.constant 0 : index
    %c0_95 = arith.constant 0 : index
    %235 = vector.load %arg10[%c0_94, %c0_95] : memref<16x32xf32, #tpu.memory_space<vmem>>, vector<16x32xf32>
    tpu.vector_store %arg10[%c0_94, %c0_95], %234 {strides = array<i32>} : memref<16x32xf32, #tpu.memory_space<vmem>>, vector<16x32xf32>,
    return
  }
  func.func @transform_0(%arg0: i32) -> (i32, i32) {
    %c0_i32 = arith.constant 0 : i32
    %c0_i32_0 = arith.constant 0 : i32
    %c0_i32_1 = arith.constant 0 : i32
    return %c0_i32, %c0_i32_0 : i32, i32
  }
  func.func @transform_1(%arg0: i32) -> (i32, i32) {
    %c0_i32 = arith.constant 0 : i32
    %c0_i32_0 = arith.constant 0 : i32
    %c0_i32_1 = arith.constant 0 : i32
    return %c0_i32, %c0_i32_0 : i32, i32
  }
  func.func @transform_2(%arg0: i32) -> (i32, i32) {
    %c0_i32 = arith.constant 0 : i32
    %c0_i32_0 = arith.constant 0 : i32
    %c0_i32_1 = arith.constant 0 : i32
    return %c0_i32, %c0_i32_0 : i32, i32
  }
  func.func @transform_3(%arg0: i32) -> (i32, i32) {
    %c0_i32 = arith.constant 0 : i32
    %c0_i32_0 = arith.constant 0 : i32
    %c0_i32_1 = arith.constant 0 : i32
    return %c0_i32, %c0_i32_0 : i32, i32
  }
  func.func @transform_4(%arg0: i32) -> (i32, i32, i32) {
    %c0_i32 = arith.constant 0 : i32
    %c0_i32_0 = arith.constant 0 : i32
    %c0_i32_1 = arith.constant 0 : i32
    %c0_i32_2 = arith.constant 0 : i32
    return %c0_i32, %c0_i32_0, %c0_i32_1 : i32, i32, i32
  }
  func.func @transform_5(%arg0: i32) -> (i32, i32) {
    %c0_i32 = arith.constant 0 : i32
    %c0_i32_0 = arith.constant 0 : i32
    %c0_i32_1 = arith.constant 0 : i32
    return %c0_i32, %c0_i32_0 : i32, i32
  }
  func.func @transform_6(%arg0: i32) -> (i32, i32) {
    %c0_i32 = arith.constant 0 : i32
    %c0_i32_0 = arith.constant 0 : i32
    %c0_i32_1 = arith.constant 0 : i32
    return %c0_i32, %c0_i32_0 : i32, i32
  }
  func.func @transform_7(%arg0: i32) -> (i32, i32) {
    %c0_i32 = arith.constant 0 : i32
    %c0_i32_0 = arith.constant 0 : i32
    %c0_i32_1 = arith.constant 0 : i32
    return %c0_i32, %c0_i32_0 : i32, i32
  }
  func.func @transform_8(%arg0: i32) -> (i32, i32) {
    %c0_i32 = arith.constant 0 : i32
    %c0_i32_0 = arith.constant 0 : i32
    %c0_i32_1 = arith.constant 0 : i32
    return %c0_i32, %c0_i32_0 : i32, i32
  }
  func.func @transform_9(%arg0: i32) -> (i32, i32) {
    %c0_i32 = arith.constant 0 : i32
    %c0_i32_0 = arith.constant 0 : i32
    %c0_i32_1 = arith.constant 0 : i32
    return %c0_i32, %c0_i32_0 : i32, i32
  }
}

</mosaic_0001>

<llo_original>
// kernel: tpu_custom_call.1
$region0: #{tpu_custom_call.1}
  #allocation0 [shape = 'u32[]', space=smem, size = 0x4, offset = 0x4, fixed_abs, tag = 'smem constant byte address 0x4 - core index']
  #allocation1 [shape = 'u32[144,128]{1,0:T(1,128)}', space=vmem, size = 0x12000, scoped, tag = 'internal scratch']
  %s0 = inlined_call_operand.hbm [shape: f32[16,32], index: 0, kind: input, shape index: {}]
  %s1 = inlined_call_operand.vmem [shape: f32[32,32], index: 1, kind: input, shape index: {}]
  %s2 = inlined_call_operand.vmem [shape: f32[32,32], index: 2, kind: input, shape index: {}]
  %s3 = inlined_call_operand.vmem [shape: f32[32,32], index: 3, kind: input, shape index: {}]
  %s4 = inlined_call_operand.hbm [shape: f32[4,8,32], index: 4, kind: input, shape index: {}]
  %s5 = inlined_call_operand.hbm [shape: f32[32,64], index: 5, kind: input, shape index: {}]
  %s6 = inlined_call_operand.vmem [shape: f32[64,32], index: 6, kind: input, shape index: {}]
  %s7 = inlined_call_operand.vmem [shape: f32[9,32], index: 7, kind: input, shape index: {}]
  %s8 = inlined_call_operand.vmem [shape: f32[1,64], index: 8, kind: input, shape index: {}]
  %s9 = inlined_call_operand.hbm [shape: f32[16,32], index: 9, kind: output, shape index: {}]
  %s10 = sld [smem:[#allocation0]]
  $region58: #{tpu_custom_call.1} parent=0
    _
  %s12 = ssub.s32 1, %s10
  %s13 = scalar_select 0, %s12, %s10
  $region1: #{tpu_custom_call.1} parent=0
    #allocation2 [shape = 'u8[8192]{0}', space=vmem, size = 0x2000, scoped, tag = 'input window, operand 0, single buffered']
    #allocation3 [shape = 's32[1]{0}', space=sflag, size = 0x4, scoped, tag = 'scoped memory for tpu_custom_call.1']
    #allocation4 [shape = 's32[1]{0}', space=sflag, size = 0x4, scoped, tag = 'scoped memory for tpu_custom_call.1']
    #allocation5 [shape = 'u8[16384]{0}', space=vmem, size = 0x4000, scoped, tag = 'input window, operand 4, single buffered']
    #allocation6 [shape = 's32[1]{0}', space=sflag, size = 0x4, scoped, tag = 'scoped memory for tpu_custom_call.1']
    #allocation7 [shape = 'u8[16384]{0}', space=vmem, size = 0x4000, scoped, tag = 'input window, operand 5, single buffered']
    #allocation8 [shape = 'u8[8192]{0}', space=vmem, size = 0x2000, scoped, tag = 'output window, operand 0, single buffered']
    %14 = vsyncpa [#allocation3], 0
    %15 = vsyncpa [#allocation6], 0
    %16 = vsyncpa [#allocation4], 0
    // Predicated region
    $region2: #{tpu_custom_call.1} parent=1 // pred_check
      _
    $region3: #{tpu_custom_call.1} parent=1 // pred_check_branch
      %18 = sbr.rel (0) target = $region5
    $region4: #{tpu_custom_call.1} parent=1 // pred_region
      %s20 = ssub.s32 256, 256
      %21 = vsyncadd [#allocation3], %s20
      %s22 = sshll.u32 [#allocation2], 4
      %s23 = int_to_ptr.vmem [resolvable:$true] %s22
      %28 = dma.hbm_to_vmem [thread:$0]  %s0, 256, %s23, [#allocation3], 128, 128, 8
    $region5: #{tpu_custom_call.1} parent=1 // pred_fallthru
      _
    // Predicated region
    $region6: #{tpu_custom_call.1} parent=1 // pred_check
      _
    $region7: #{tpu_custom_call.1} parent=1 // pred_check_branch
      %30 = sbr.rel (0) target = $region9
    $region8: #{tpu_custom_call.1} parent=1 // pred_region
      _
    $region9: #{tpu_custom_call.1} parent=1 // pred_fallthru
      _
    // Predicated region
    $region10: #{tpu_custom_call.1} parent=1 // pred_check
      _
    $region11: #{tpu_custom_call.1} parent=1 // pred_check_branch
      %32 = sbr.rel (0) target = $region13
    $region12: #{tpu_custom_call.1} parent=1 // pred_region
      _
    $region13: #{tpu_custom_call.1} parent=1 // pred_fallthru
      _
    // Predicated region
    $region14: #{tpu_custom_call.1} parent=1 // pred_check
      _
    $region15: #{tpu_custom_call.1} parent=1 // pred_check_branch
      %34 = sbr.rel (0) target = $region17
    $region16: #{tpu_custom_call.1} parent=1 // pred_region
      _
    $region17: #{tpu_custom_call.1} parent=1 // pred_fallthru
      _
    // Predicated region
    $region18: #{tpu_custom_call.1} parent=1 // pred_check
      _
    $region19: #{tpu_custom_call.1} parent=1 // pred_check_branch
      %36 = sbr.rel (0) target = $region21
    $region20: #{tpu_custom_call.1} parent=1 // pred_region
      %s38 = ssub.s32 512, 512
      %39 = vsyncadd [#allocation6], %s38
      %s40 = sshll.u32 [#allocation5], 4
      %s41 = int_to_ptr.vmem [resolvable:$true] %s40
      %46 = dma.hbm_to_vmem [thread:$0]  %s4, 512, %s41, [#allocation6], 128, 128, 8
    $region21: #{tpu_custom_call.1} parent=1 // pred_fallthru
      _
    // Predicated region
    $region22: #{tpu_custom_call.1} parent=1 // pred_check
      _
    $region23: #{tpu_custom_call.1} parent=1 // pred_check_branch
      %48 = sbr.rel (0) target = $region25
    $region24: #{tpu_custom_call.1} parent=1 // pred_region
      %s50 = ssub.s32 512, 512
      %51 = vsyncadd [#allocation6], %s50
      %s52 = sshll.u32 [#allocation7], 4
      %s53 = int_to_ptr.vmem [resolvable:$true] %s52
      %58 = dma.hbm_to_vmem [thread:$0]  %s5, 512, %s53, [#allocation6], 128, 128, 8
    $region25: #{tpu_custom_call.1} parent=1 // pred_fallthru
      _
    // Predicated region
    $region26: #{tpu_custom_call.1} parent=1 // pred_check
      _
    $region27: #{tpu_custom_call.1} parent=1 // pred_check_branch
      %60 = sbr.rel (0) target = $region29
    $region28: #{tpu_custom_call.1} parent=1 // pred_region
      _
    $region29: #{tpu_custom_call.1} parent=1 // pred_fallthru
      _
    // Predicated region
    $region30: #{tpu_custom_call.1} parent=1 // pred_check
      _
    $region31: #{tpu_custom_call.1} parent=1 // pred_check_branch
      %62 = sbr.rel (0) target = $region33
    $region32: #{tpu_custom_call.1} parent=1 // pred_region
      _
    $region33: #{tpu_custom_call.1} parent=1 // pred_fallthru
      _
    // Predicated region
    $region34: #{tpu_custom_call.1} parent=1 // pred_check
      _
    $region35: #{tpu_custom_call.1} parent=1 // pred_check_branch
      %64 = sbr.rel (0) target = $region37
    $region36: #{tpu_custom_call.1} parent=1 // pred_region
      _
    $region37: #{tpu_custom_call.1} parent=1 // pred_fallthru
      _
    // Predicated region
    $region38: #{tpu_custom_call.1} parent=1 // pred_check
      _
    $region39: #{tpu_custom_call.1} parent=1 // pred_check_branch
      %66 = sbr.rel (0) target = $region41
    $region40: #{tpu_custom_call.1} parent=1 // pred_region
      %67 = dma.done [#allocation3], 256
    $region41: #{tpu_custom_call.1} parent=1 // pred_fallthru
      _
    // Predicated region
    $region42: #{tpu_custom_call.1} parent=1 // pred_check
      _
    $region43: #{tpu_custom_call.1} parent=1 // pred_check_branch
      %69 = sbr.rel (0) target = $region45
    $region44: #{tpu_custom_call.1} parent=1 // pred_region
      %70 = dma.done [#allocation6], 512
    $region45: #{tpu_custom_call.1} parent=1 // pred_fallthru
      _
    // Predicated region
    $region46: #{tpu_custom_call.1} parent=1 // pred_check
      _
    $region47: #{tpu_custom_call.1} parent=1 // pred_check_branch
      %72 = sbr.rel (0) target = $region49
    $region48: #{tpu_custom_call.1} parent=1 // pred_region
      %73 = dma.done [#allocation6], 512
    $region49: #{tpu_custom_call.1} parent=1 // pred_fallthru
      _
    %v74 = vld [vmem:[#allocation2] sm:$0xff]
    %v75 = vld [vmem:[#allocation2 + $0x8] sm:$0xff]
    %v76 = vld [vmem:[%s7] sm:$0xff]
    %v77 = vld [vmem:[%s7 + $0x8] sm:$0x1]
    %v78 = vld [vmem:[%s1] sm:$0xff]
    %v79 = vld [vmem:[%s1 + $0x8] sm:$0xff]
    %v80 = vld [vmem:[%s1 + $0x10] sm:$0xff]
    %v81 = vld [vmem:[%s1 + $0x18] sm:$0xff]
    %v82 = vlaneseq
    %v83 = vshrl.u32 %v82, 7
    %v84 = vsub.s32 0, %v83
    %v85 = vrot.slane %v76, %v84
    %vm86 = vcmask 261120
    %v88 = vsel %vm86, %v74, 0
    %v91 = vsel %vm86, %v75, 0
    %93 = vmatprep.subr.mxu0 0.0
    %94 = vmatpush1.msra.mxu0 %v78
    %95 = vmatprep.subr.mxu0 0.0
    %96 = vmatpush1.msra.mxu0 %v79
    %97 = vmatprep.subr.mxu0 0.0
    %98 = vmatpush1.msra.mxu0 %v80
    %99 = vmatprep.subr.mxu0 0.0
    %100 = vmatpush1.msra.mxu0 %v81
    %101 = vmatprep.subr.mxu0 0.0
    %102 = vmatpush1.msra.mxu0 0.0
    %103 = vmatprep.subr.mxu0 0.0
    %104 = vmatpush1.msra.mxu0 0.0
    %105 = vmatprep.subr.mxu0 0.0
    %106 = vmatpush1.msra.mxu0 0.0
    %107 = vmatprep.subr.mxu0 0.0
    %108 = vmatpush1.msra.mxu0 0.0
    %109 = vmatprep.subr.mxu0 0.0
    %110 = vmatpush1.msra.mxu0 0.0
    %111 = vmatprep.subr.mxu0 0.0
    %112 = vmatpush1.msra.mxu0 0.0
    %113 = vmatprep.subr.mxu0 0.0
    %114 = vmatpush1.msra.mxu0 0.0
    %115 = vmatprep.subr.mxu0 0.0
    %116 = vmatpush1.msra.mxu0 0.0
    %117 = vmatprep.subr.mxu0 0.0
    %118 = vmatpush1.msra.mxu0 0.0
    %119 = vmatprep.subr.mxu0 0.0
    %120 = vmatpush1.msra.mxu0 0.0
    %121 = vmatprep.subr.mxu0 0.0
    %122 = vmatpush1.msra.mxu0 0.0
    %123 = vmatprep.subr.mxu0 0.0
    %124 = vmatpush1.msra.mxu0 0.0
    %125 = vmatprep.subr.mxu0 0.0
    %126 = vmatpush1.msra.mxu0 0.0
    %127 = vmatprep.subr.mxu0 0.0
    %128 = vmatpush1.msra.mxu0 0.0
    %129 = vmatprep.subr.mxu0 0.0
    %130 = vmatpush1.msra.mxu0 0.0
    %131 = vmatprep.subr.mxu0 0.0
    %132 = vmatpush1.msra.mxu0 0.0
    %133 = vmatprep.subr.mxu0 0.0
    %134 = vmatpush1.msra.mxu0 0.0
    %135 = vmatprep.subr.mxu0 0.0
    %136 = vmatpush1.msra.mxu0 0.0
    %137 = vmatprep.subr.mxu0 0.0
    %138 = vmatpush1.msra.mxu0 0.0
    %139 = vmatprep.subr.mxu0 0.0
    %140 = vmatpush1.msra.mxu0 0.0
    %141 = vmatprep.subr.mxu0 0.0
    %142 = vmatpush1.msra.mxu0 0.0
    %143 = vmatprep.subr.mxu0 0.0
    %144 = vmatpush1.msra.mxu0 0.0
    %145 = vmatprep.subr.mxu0 0.0
    %146 = vmatpush1.msra.mxu0 0.0
    %147 = vmatprep.subr.mxu0 0.0
    %148 = vmatpush1.msra.mxu0 0.0
    %149 = vmatprep.subr.mxu0 0.0
    %150 = vmatpush1.msra.mxu0 0.0
    %151 = vmatprep.subr.mxu0 0.0
    %152 = vmatpush1.msra.mxu0 0.0
    %153 = vmatprep.subr.mxu0 0.0
    %154 = vmatpush1.msra.mxu0 0.0
    %155 = vmatprep.subr.mxu0 0.0
    %156 = vmatpush1.msra.mxu0 0.0
    %157 = vmatprep.mubr.f32.mxu0 0.0
    %158 = vmatmul.mubr.f32.gmra.mrb[0].mxu0 %v88
    %v159 = vpop.f32.mrb[0].mxu0
    %v160 = vadd.f32 %v85, %v159
    %v161 = vpop.f32.mrb[0].mxu0
    %162 = vmatprep.mubr.f32.mxu0 0.0
    %163 = vmatmul.mubr.f32.gmra.mrb[0].mxu0 %v91
    %v164 = vpop.f32.mrb[0].mxu0
    %v165 = vadd.f32 %v85, %v164
    %v166 = vpop.f32.mrb[0].mxu0
    %167 = vdwg.mxu0
    %v168 = vmul.f32 %v160, 0.35355338
    %v169 = vmul.f32 %v165, 0.35355338
    %v170 = vld [vmem:[%s2] sm:$0xff]
    %v171 = vld [vmem:[%s2 + $0x8] sm:$0xff]
    %v172 = vld [vmem:[%s2 + $0x10] sm:$0xff]
    %v173 = vld [vmem:[%s2 + $0x18] sm:$0xff]
    %v174 = vlaneseq
    %v175 = vshrl.u32 %v174, 7
    %v176 = vsub.s32 1, %v175
    %v177 = vrot.slane %v76, %v176
    %178 = vmatprep.subr.mxu0 0.0
    %179 = vmatpush1.msra.mxu0 %v170
    %180 = vmatprep.subr.mxu0 0.0
    %181 = vmatpush1.msra.mxu0 %v171
    %182 = vmatprep.subr.mxu0 0.0
    %183 = vmatpush1.msra.mxu0 %v172
    %184 = vmatprep.subr.mxu0 0.0
    %185 = vmatpush1.msra.mxu0 %v173
    %186 = vmatprep.subr.mxu0 0.0
    %187 = vmatpush1.msra.mxu0 0.0
    %188 = vmatprep.subr.mxu0 0.0
    %189 = vmatpush1.msra.mxu0 0.0
    %190 = vmatprep.subr.mxu0 0.0
    %191 = vmatpush1.msra.mxu0 0.0
    %192 = vmatprep.subr.mxu0 0.0
    %193 = vmatpush1.msra.mxu0 0.0
    %194 = vmatprep.subr.mxu0 0.0
    %195 = vmatpush1.msra.mxu0 0.0
    %196 = vmatprep.subr.mxu0 0.0
    %197 = vmatpush1.msra.mxu0 0.0
    %198 = vmatprep.subr.mxu0 0.0
    %199 = vmatpush1.msra.mxu0 0.0
    %200 = vmatprep.subr.mxu0 0.0
    %201 = vmatpush1.msra.mxu0 0.0
    %202 = vmatprep.subr.mxu0 0.0
    %203 = vmatpush1.msra.mxu0 0.0
    %204 = vmatprep.subr.mxu0 0.0
    %205 = vmatpush1.msra.mxu0 0.0
    %206 = vmatprep.subr.mxu0 0.0
    %207 = vmatpush1.msra.mxu0 0.0
    %208 = vmatprep.subr.mxu0 0.0
    %209 = vmatpush1.msra.mxu0 0.0
    %210 = vmatprep.subr.mxu0 0.0
    %211 = vmatpush1.msra.mxu0 0.0
    %212 = vmatprep.subr.mxu0 0.0
    %213 = vmatpush1.msra.mxu0 0.0
    %214 = vmatprep.subr.mxu0 0.0
    %215 = vmatpush1.msra.mxu0 0.0
    %216 = vmatprep.subr.mxu0 0.0
    %217 = vmatpush1.msra.mxu0 0.0
    %218 = vmatprep.subr.mxu0 0.0
    %219 = vmatpush1.msra.mxu0 0.0
    %220 = vmatprep.subr.mxu0 0.0
    %221 = vmatpush1.msra.mxu0 0.0
    %222 = vmatprep.subr.mxu0 0.0
    %223 = vmatpush1.msra.mxu0 0.0
    %224 = vmatprep.subr.mxu0 0.0
    %225 = vmatpush1.msra.mxu0 0.0
    %226 = vmatprep.subr.mxu0 0.0
    %227 = vmatpush1.msra.mxu0 0.0
    %228 = vmatprep.subr.mxu0 0.0
    %229 = vmatpush1.msra.mxu0 0.0
    %230 = vmatprep.subr.mxu0 0.0
    %231 = vmatpush1.msra.mxu0 0.0
    %232 = vmatprep.subr.mxu0 0.0
    %233 = vmatpush1.msra.mxu0 0.0
    %234 = vmatprep.subr.mxu0 0.0
    %235 = vmatpush1.msra.mxu0 0.0
    %236 = vmatprep.subr.mxu0 0.0
    %237 = vmatpush1.msra.mxu0 0.0
    %238 = vmatprep.subr.mxu0 0.0
    %239 = vmatpush1.msra.mxu0 0.0
    %240 = vmatprep.subr.mxu0 0.0
    %241 = vmatpush1.msra.mxu0 0.0
    %242 = vmatprep.mubr.f32.mxu0 0.0
    %243 = vmatmul.mubr.f32.gmra.mrb[0].mxu0 %v88
    %v244 = vpop.f32.mrb[0].mxu0
    %v245 = vadd.f32 %v177, %v244
    %v246 = vpop.f32.mrb[0].mxu0
    %247 = vmatprep.mubr.f32.mxu0 0.0
    %248 = vmatmul.mubr.f32.gmra.mrb[0].mxu0 %v91
    %v249 = vpop.f32.mrb[0].mxu0
    %v250 = vadd.f32 %v177, %v249
    %v251 = vpop.f32.mrb[0].mxu0
    %252 = vdwg.mxu0
    %v253 = vld [vmem:[%s3] sm:$0xff]
    %v254 = vld [vmem:[%s3 + $0x8] sm:$0xff]
    %v255 = vld [vmem:[%s3 + $0x10] sm:$0xff]
    %v256 = vld [vmem:[%s3 + $0x18] sm:$0xff]
    %v257 = vlaneseq
    %v258 = vshrl.u32 %v257, 7
    %v259 = vsub.s32 2, %v258
    %v260 = vrot.slane %v76, %v259
    %261 = vmatprep.subr.mxu0 0.0
    %262 = vmatpush1.msra.mxu0 %v253
    %263 = vmatprep.subr.mxu0 0.0
    %264 = vmatpush1.msra.mxu0 %v254
    %265 = vmatprep.subr.mxu0 0.0
    %266 = vmatpush1.msra.mxu0 %v255
    %267 = vmatprep.subr.mxu0 0.0
    %268 = vmatpush1.msra.mxu0 %v256
    %269 = vmatprep.subr.mxu0 0.0
    %270 = vmatpush1.msra.mxu0 0.0
    %271 = vmatprep.subr.mxu0 0.0
    %272 = vmatpush1.msra.mxu0 0.0
    %273 = vmatprep.subr.mxu0 0.0
    %274 = vmatpush1.msra.mxu0 0.0
    %275 = vmatprep.subr.mxu0 0.0
    %276 = vmatpush1.msra.mxu0 0.0
    %277 = vmatprep.subr.mxu0 0.0
    %278 = vmatpush1.msra.mxu0 0.0
    %279 = vmatprep.subr.mxu0 0.0
    %280 = vmatpush1.msra.mxu0 0.0
    %281 = vmatprep.subr.mxu0 0.0
    %282 = vmatpush1.msra.mxu0 0.0
    %283 = vmatprep.subr.mxu0 0.0
    %284 = vmatpush1.msra.mxu0 0.0
    %285 = vmatprep.subr.mxu0 0.0
    %286 = vmatpush1.msra.mxu0 0.0
    %287 = vmatprep.subr.mxu0 0.0
    %288 = vmatpush1.msra.mxu0 0.0
    %289 = vmatprep.subr.mxu0 0.0
    %290 = vmatpush1.msra.mxu0 0.0
    %291 = vmatprep.subr.mxu0 0.0
    %292 = vmatpush1.msra.mxu0 0.0
    %293 = vmatprep.subr.mxu0 0.0
    %294 = vmatpush1.msra.mxu0 0.0
    %295 = vmatprep.subr.mxu0 0.0
    %296 = vmatpush1.msra.mxu0 0.0
    %297 = vmatprep.subr.mxu0 0.0
    %298 = vmatpush1.msra.mxu0 0.0
    %299 = vmatprep.subr.mxu0 0.0
    %300 = vmatpush1.msra.mxu0 0.0
    %301 = vmatprep.subr.mxu0 0.0
    %302 = vmatpush1.msra.mxu0 0.0
    %303 = vmatprep.subr.mxu0 0.0
    %304 = vmatpush1.msra.mxu0 0.0
    %305 = vmatprep.subr.mxu0 0.0
    %306 = vmatpush1.msra.mxu0 0.0
    %307 = vmatprep.subr.mxu0 0.0
    %308 = vmatpush1.msra.mxu0 0.0
    %309 = vmatprep.subr.mxu0 0.0
    %310 = vmatpush1.msra.mxu0 0.0
    %311 = vmatprep.subr.mxu0 0.0
    %312 = vmatpush1.msra.mxu0 0.0
    %313 = vmatprep.subr.mxu0 0.0
    %314 = vmatpush1.msra.mxu0 0.0
    %315 = vmatprep.subr.mxu0 0.0
    %316 = vmatpush1.msra.mxu0 0.0
    %317 = vmatprep.subr.mxu0 0.0
    %318 = vmatpush1.msra.mxu0 0.0
    %319 = vmatprep.subr.mxu0 0.0
    %320 = vmatpush1.msra.mxu0 0.0
    %321 = vmatprep.subr.mxu0 0.0
    %322 = vmatpush1.msra.mxu0 0.0
    %323 = vmatprep.subr.mxu0 0.0
    %324 = vmatpush1.msra.mxu0 0.0
    %325 = vmatprep.mubr.f32.mxu0 0.0
    %326 = vmatmul.mubr.f32.gmra.mrb[0].mxu0 %v88
    %v327 = vpop.f32.mrb[0].mxu0
    %v328 = vadd.f32 %v260, %v327
    %v329 = vpop.f32.mrb[0].mxu0
    %330 = vmatprep.mubr.f32.mxu0 0.0
    %331 = vmatmul.mubr.f32.gmra.mrb[0].mxu0 %v91
    %v332 = vpop.f32.mrb[0].mxu0
    %v333 = vadd.f32 %v260, %v332
    %v334 = vpop.f32.mrb[0].mxu0
    %335 = vdwg.mxu0
    %vm336 = vcmask 64512
    %v338 = vsel %vm336, %v168, 0
    %v341 = vsel %vm336, %v245, 0
    %343 = vmatprep.subr.mxu0 0.0
    %344 = vmatpush1.xpose.msra.mxu0 %v341
    %345 = vmatprep.subr.mxu0 0.0
    %346 = vmatpush1.xpose.msra.mxu0 0.0
    %347 = vmatprep.subr.mxu0 0.0
    %348 = vmatpush1.xpose.msra.mxu0 0.0
    %349 = vmatprep.subr.mxu0 0.0
    %350 = vmatpush1.xpose.msra.mxu0 0.0
    %351 = vmatprep.subr.mxu0 0.0
    %352 = vmatpush1.xpose.msra.mxu0 0.0
    %353 = vmatprep.subr.mxu0 0.0
    %354 = vmatpush1.xpose.msra.mxu0 0.0
    %355 = vmatprep.subr.mxu0 0.0
    %356 = vmatpush1.xpose.msra.mxu0 0.0
    %357 = vmatprep.subr.mxu0 0.0
    %358 = vmatpush1.xpose.msra.mxu0 0.0
    %359 = vmatprep.subr.mxu0 0.0
    %360 = vmatpush1.xpose.msra.mxu0 0.0
    %361 = vmatprep.subr.mxu0 0.0
    %362 = vmatpush1.xpose.msra.mxu0 0.0
    %363 = vmatprep.subr.mxu0 0.0
    %364 = vmatpush1.xpose.msra.mxu0 0.0
    %365 = vmatprep.subr.mxu0 0.0
    %366 = vmatpush1.xpose.msra.mxu0 0.0
    %367 = vmatprep.subr.mxu0 0.0
    %368 = vmatpush1.xpose.msra.mxu0 0.0
    %369 = vmatprep.subr.mxu0 0.0
    %370 = vmatpush1.xpose.msra.mxu0 0.0
    %371 = vmatprep.subr.mxu0 0.0
    %372 = vmatpush1.xpose.msra.mxu0 0.0
    %373 = vmatprep.subr.mxu0 0.0
    %374 = vmatpush1.xpose.msra.mxu0 0.0
    %375 = vmatprep.subr.mxu0 0.0
    %376 = vmatpush1.xpose.msra.mxu0 0.0
    %377 = vmatprep.subr.mxu0 0.0
    %378 = vmatpush1.xpose.msra.mxu0 0.0
    %379 = vmatprep.subr.mxu0 0.0
    %380 = vmatpush1.xpose.msra.mxu0 0.0
    %381 = vmatprep.subr.mxu0 0.0
    %382 = vmatpush1.xpose.msra.mxu0 0.0
    %383 = vmatprep.subr.mxu0 0.0
    %384 = vmatpush1.xpose.msra.mxu0 0.0
    %385 = vmatprep.subr.mxu0 0.0
    %386 = vmatpush1.xpose.msra.mxu0 0.0
    %387 = vmatprep.subr.mxu0 0.0
    %388 = vmatpush1.xpose.msra.mxu0 0.0
    %389 = vmatprep.subr.mxu0 0.0
    %390 = vmatpush1.xpose.msra.mxu0 0.0
    %391 = vmatprep.subr.mxu0 0.0
    %392 = vmatpush1.xpose.msra.mxu0 0.0
    %393 = vmatprep.subr.mxu0 0.0
    %394 = vmatpush1.xpose.msra.mxu0 0.0
    %395 = vmatprep.subr.mxu0 0.0
    %396 = vmatpush1.xpose.msra.mxu0 0.0
    %397 = vmatprep.subr.mxu0 0.0
    %398 = vmatpush1.xpose.msra.mxu0 0.0
    %399 = vmatprep.subr.mxu0 0.0
    %400 = vmatpush1.xpose.msra.mxu0 0.0
    %401 = vmatprep.subr.mxu0 0.0
    %402 = vmatpush1.xpose.msra.mxu0 0.0
    %403 = vmatprep.subr.mxu0 0.0
    %404 = vmatpush1.xpose.msra.mxu0 0.0
    %405 = vmatprep.subr.mxu0 0.0
    %406 = vmatpush1.xpose.msra.mxu0 0.0
    %407 = vmatprep.mubr.f32.mxu0 0.0
    %408 = vmatmul.mubr.f32.gmra.mrb[0].mxu0 %v338
    %v409 = vpop.f32.mrb[0].mxu0
    %v410 = vadd.f32 0.0, %v409
    %v411 = vpop.f32.mrb[0].mxu0
    %412 = vdwg.mxu0
    %v413 = vsel %vm336, %v410, -inf
    %414 = vmax.xlane.f32.xlu0 %v413
    %v415 = vpop.xlane.xlu0 %414
    %v416 = vsub.f32 %v410, %v415
    %v417 = vmul.f32 %v416, 1.442695
    %v418 = vpow.pop %v417
    %v419 = vsel %vm336, %v418, 0.0
    %420 = vadd.xlane.f32.xlu0 %v419
    %v421 = vpop.xlane.xlu0 %420
    %v422 = vrcp.pop %v421
    %v423 = vmul.f32 %v418, %v422
    %v425 = vsel %vm336, %v423, 0
    %427 = vmatprep.subr.mxu0 0.0
    %428 = vmatpush1.msra.mxu0 %v328
    %429 = vmatprep.subr.mxu0 0.0
    %430 = vmatpush1.msra.mxu0 0.0
    %431 = vmatprep.subr.mxu0 0.0
    %432 = vmatpush1.msra.mxu0 0.0
    %433 = vmatprep.subr.mxu0 0.0
    %434 = vmatpush1.msra.mxu0 0.0
    %435 = vmatprep.subr.mxu0 0.0
    %436 = vmatpush1.msra.mxu0 0.0
    %437 = vmatprep.subr.mxu0 0.0
    %438 = vmatpush1.msra.mxu0 0.0
    %439 = vmatprep.subr.mxu0 0.0
    %440 = vmatpush1.msra.mxu0 0.0
    %441 = vmatprep.subr.mxu0 0.0
    %442 = vmatpush1.msra.mxu0 0.0
    %443 = vmatprep.subr.mxu0 0.0
    %444 = vmatpush1.msra.mxu0 0.0
    %445 = vmatprep.subr.mxu0 0.0
    %446 = vmatpush1.msra.mxu0 0.0
    %447 = vmatprep.subr.mxu0 0.0
    %448 = vmatpush1.msra.mxu0 0.0
    %449 = vmatprep.subr.mxu0 0.0
    %450 = vmatpush1.msra.mxu0 0.0
    %451 = vmatprep.subr.mxu0 0.0
    %452 = vmatpush1.msra.mxu0 0.0
    %453 = vmatprep.subr.mxu0 0.0
    %454 = vmatpush1.msra.mxu0 0.0
    %455 = vmatprep.subr.mxu0 0.0
    %456 = vmatpush1.msra.mxu0 0.0
    %457 = vmatprep.subr.mxu0 0.0
    %458 = vmatpush1.msra.mxu0 0.0
    %459 = vmatprep.subr.mxu0 0.0
    %460 = vmatpush1.msra.mxu0 0.0
    %461 = vmatprep.subr.mxu0 0.0
    %462 = vmatpush1.msra.mxu0 0.0
    %463 = vmatprep.subr.mxu0 0.0
    %464 = vmatpush1.msra.mxu0 0.0
    %465 = vmatprep.subr.mxu0 0.0
    %466 = vmatpush1.msra.mxu0 0.0
    %467 = vmatprep.subr.mxu0 0.0
    %468 = vmatpush1.msra.mxu0 0.0
    %469 = vmatprep.subr.mxu0 0.0
    %470 = vmatpush1.msra.mxu0 0.0
    %471 = vmatprep.subr.mxu0 0.0
    %472 = vmatpush1.msra.mxu0 0.0
    %473 = vmatprep.subr.mxu0 0.0
    %474 = vmatpush1.msra.mxu0 0.0
    %475 = vmatprep.subr.mxu0 0.0
    %476 = vmatpush1.msra.mxu0 0.0
    %477 = vmatprep.subr.mxu0 0.0
    %478 = vmatpush1.msra.mxu0 0.0
    %479 = vmatprep.subr.mxu0 0.0
    %480 = vmatpush1.msra.mxu0 0.0
    %481 = vmatprep.subr.mxu0 0.0
    %482 = vmatpush1.msra.mxu0 0.0
    %483 = vmatprep.subr.mxu0 0.0
    %484 = vmatpush1.msra.mxu0 0.0
    %485 = vmatprep.subr.mxu0 0.0
    %486 = vmatpush1.msra.mxu0 0.0
    %487 = vmatprep.subr.mxu0 0.0
    %488 = vmatpush1.msra.mxu0 0.0
    %489 = vmatprep.subr.mxu0 0.0
    %490 = vmatpush1.msra.mxu0 0.0
    %491 = vmatprep.mubr.f32.mxu0 0.0
    %492 = vmatmul.mubr.f32.gmra.mrb[0].mxu0 %v425
    %v493 = vpop.f32.mrb[0].mxu0
    %v494 = vadd.f32 0.0, %v493
    %v495 = vpop.f32.mrb[0].mxu0
    %496 = vdwg.mxu0
    %v497 = vld [vmem:[#allocation5] sm:$0xff]
    %498 = vrot.lane.b32.xlu0 %v168, 120
    %v499 = vpop.permute.xlu0 %498
    %500 = vrot.lane.b32.xlu0 %v245, 120
    %v501 = vpop.permute.xlu0 %500
    %v502 = vsel %vm336, %v499, 0
    %v504 = vsel %vm336, %v501, 0
    %506 = vmatprep.subr.mxu0 0.0
    %507 = vmatpush1.xpose.msra.mxu0 %v504
    %508 = vmatprep.subr.mxu0 0.0
    %509 = vmatpush1.xpose.msra.mxu0 0.0
    %510 = vmatprep.subr.mxu0 0.0
    %511 = vmatpush1.xpose.msra.mxu0 0.0
    %512 = vmatprep.subr.mxu0 0.0
    %513 = vmatpush1.xpose.msra.mxu0 0.0
    %514 = vmatprep.subr.mxu0 0.0
    %515 = vmatpush1.xpose.msra.mxu0 0.0
    %516 = vmatprep.subr.mxu0 0.0
    %517 = vmatpush1.xpose.msra.mxu0 0.0
    %518 = vmatprep.subr.mxu0 0.0
    %519 = vmatpush1.xpose.msra.mxu0 0.0
    %520 = vmatprep.subr.mxu0 0.0
    %521 = vmatpush1.xpose.msra.mxu0 0.0
    %522 = vmatprep.subr.mxu0 0.0
    %523 = vmatpush1.xpose.msra.mxu0 0.0
    %524 = vmatprep.subr.mxu0 0.0
    %525 = vmatpush1.xpose.msra.mxu0 0.0
    %526 = vmatprep.subr.mxu0 0.0
    %527 = vmatpush1.xpose.msra.mxu0 0.0
    %528 = vmatprep.subr.mxu0 0.0
    %529 = vmatpush1.xpose.msra.mxu0 0.0
    %530 = vmatprep.subr.mxu0 0.0
    %531 = vmatpush1.xpose.msra.mxu0 0.0
    %532 = vmatprep.subr.mxu0 0.0
    %533 = vmatpush1.xpose.msra.mxu0 0.0
    %534 = vmatprep.subr.mxu0 0.0
    %535 = vmatpush1.xpose.msra.mxu0 0.0
    %536 = vmatprep.subr.mxu0 0.0
    %537 = vmatpush1.xpose.msra.mxu0 0.0
    %538 = vmatprep.subr.mxu0 0.0
    %539 = vmatpush1.xpose.msra.mxu0 0.0
    %540 = vmatprep.subr.mxu0 0.0
    %541 = vmatpush1.xpose.msra.mxu0 0.0
    %542 = vmatprep.subr.mxu0 0.0
    %543 = vmatpush1.xpose.msra.mxu0 0.0
    %544 = vmatprep.subr.mxu0 0.0
    %545 = vmatpush1.xpose.msra.mxu0 0.0
    %546 = vmatprep.subr.mxu0 0.0
    %547 = vmatpush1.xpose.msra.mxu0 0.0
    %548 = vmatprep.subr.mxu0 0.0
    %549 = vmatpush1.xpose.msra.mxu0 0.0
    %550 = vmatprep.subr.mxu0 0.0
    %551 = vmatpush1.xpose.msra.mxu0 0.0
    %552 = vmatprep.subr.mxu0 0.0
    %553 = vmatpush1.xpose.msra.mxu0 0.0
    %554 = vmatprep.subr.mxu0 0.0
    %555 = vmatpush1.xpose.msra.mxu0 0.0
    %556 = vmatprep.subr.mxu0 0.0
    %557 = vmatpush1.xpose.msra.mxu0 0.0
    %558 = vmatprep.subr.mxu0 0.0
    %559 = vmatpush1.xpose.msra.mxu0 0.0
    %560 = vmatprep.subr.mxu0 0.0
    %561 = vmatpush1.xpose.msra.mxu0 0.0
    %562 = vmatprep.subr.mxu0 0.0
    %563 = vmatpush1.xpose.msra.mxu0 0.0
    %564 = vmatprep.subr.mxu0 0.0
    %565 = vmatpush1.xpose.msra.mxu0 0.0
    %566 = vmatprep.subr.mxu0 0.0
    %567 = vmatpush1.xpose.msra.mxu0 0.0
    %568 = vmatprep.subr.mxu0 0.0
    %569 = vmatpush1.xpose.msra.mxu0 0.0
    %570 = vmatprep.mubr.f32.mxu0 0.0
    %571 = vmatmul.mubr.f32.gmra.mrb[0].mxu0 %v502
    %v572 = vpop.f32.mrb[0].mxu0
    %v573 = vadd.f32 0.0, %v572
    %v574 = vpop.f32.mrb[0].mxu0
    %575 = vdwg.mxu0
    %v576 = vsel %vm336, %v573, -inf
    %577 = vmax.xlane.f32.xlu0 %v576
    %v578 = vpop.xlane.xlu0 %577
    %v579 = vsub.f32 %v573, %v578
    %v580 = vmul.f32 %v579, 1.442695
    %v581 = vpow.pop %v580
    %v582 = vsel %vm336, %v581, 0.0
    %583 = vadd.xlane.f32.xlu0 %v582
    %v584 = vpop.xlane.xlu0 %583
    %v585 = vrcp.pop %v584
    %v586 = vmul.f32 %v581, %v585
    %588 = vrot.lane.b32.xlu0 %v328, 120
    %v589 = vpop.permute.xlu0 %588
    %v592 = vsel %vm336, %v586, 0
    %594 = vmatprep.subr.mxu0 0.0
    %595 = vmatpush1.msra.mxu0 %v589
    %596 = vmatprep.subr.mxu0 0.0
    %597 = vmatpush1.msra.mxu0 0.0
    %598 = vmatprep.subr.mxu0 0.0
    %599 = vmatpush1.msra.mxu0 0.0
    %600 = vmatprep.subr.mxu0 0.0
    %601 = vmatpush1.msra.mxu0 0.0
    %602 = vmatprep.subr.mxu0 0.0
    %603 = vmatpush1.msra.mxu0 0.0
    %604 = vmatprep.subr.mxu0 0.0
    %605 = vmatpush1.msra.mxu0 0.0
    %606 = vmatprep.subr.mxu0 0.0
    %607 = vmatpush1.msra.mxu0 0.0
    %608 = vmatprep.subr.mxu0 0.0
    %609 = vmatpush1.msra.mxu0 0.0
    %610 = vmatprep.subr.mxu0 0.0
    %611 = vmatpush1.msra.mxu0 0.0
    %612 = vmatprep.subr.mxu0 0.0
    %613 = vmatpush1.msra.mxu0 0.0
    %614 = vmatprep.subr.mxu0 0.0
    %615 = vmatpush1.msra.mxu0 0.0
    %616 = vmatprep.subr.mxu0 0.0
    %617 = vmatpush1.msra.mxu0 0.0
    %618 = vmatprep.subr.mxu0 0.0
    %619 = vmatpush1.msra.mxu0 0.0
    %620 = vmatprep.subr.mxu0 0.0
    %621 = vmatpush1.msra.mxu0 0.0
    %622 = vmatprep.subr.mxu0 0.0
    %623 = vmatpush1.msra.mxu0 0.0
    %624 = vmatprep.subr.mxu0 0.0
    %625 = vmatpush1.msra.mxu0 0.0
    %626 = vmatprep.subr.mxu0 0.0
    %627 = vmatpush1.msra.mxu0 0.0
    %628 = vmatprep.subr.mxu0 0.0
    %629 = vmatpush1.msra.mxu0 0.0
    %630 = vmatprep.subr.mxu0 0.0
    %631 = vmatpush1.msra.mxu0 0.0
    %632 = vmatprep.subr.mxu0 0.0
    %633 = vmatpush1.msra.mxu0 0.0
    %634 = vmatprep.subr.mxu0 0.0
    %635 = vmatpush1.msra.mxu0 0.0
    %636 = vmatprep.subr.mxu0 0.0
    %637 = vmatpush1.msra.mxu0 0.0
    %638 = vmatprep.subr.mxu0 0.0
    %639 = vmatpush1.msra.mxu0 0.0
    %640 = vmatprep.subr.mxu0 0.0
    %641 = vmatpush1.msra.mxu0 0.0
    %642 = vmatprep.subr.mxu0 0.0
    %643 = vmatpush1.msra.mxu0 0.0
    %644 = vmatprep.subr.mxu0 0.0
    %645 = vmatpush1.msra.mxu0 0.0
    %646 = vmatprep.subr.mxu0 0.0
    %647 = vmatpush1.msra.mxu0 0.0
    %648 = vmatprep.subr.mxu0 0.0
    %649 = vmatpush1.msra.mxu0 0.0
    %650 = vmatprep.subr.mxu0 0.0
    %651 = vmatpush1.msra.mxu0 0.0
    %652 = vmatprep.subr.mxu0 0.0
    %653 = vmatpush1.msra.mxu0 0.0
    %654 = vmatprep.subr.mxu0 0.0
    %655 = vmatpush1.msra.mxu0 0.0
    %656 = vmatprep.subr.mxu0 0.0
    %657 = vmatpush1.msra.mxu0 0.0
    %658 = vmatprep.mubr.f32.mxu0 0.0
    %659 = vmatmul.mubr.f32.gmra.mrb[0].mxu0 %v592
    %v660 = vpop.f32.mrb[0].mxu0
    %v661 = vadd.f32 0.0, %v660
    %v662 = vpop.f32.mrb[0].mxu0
    %663 = vdwg.mxu0
    %s664 = scalar_lea.vmem [#allocation5], 8
    %v665 = vld [vmem:[%s664] sm:$0xff]
    %v667 = vsel %vm336, %v661, 0
    %669 = vmatprep.subr.mxu0 0.0
    %670 = vmatpush1.msra.mxu0 %v665
    %671 = vmatprep.subr.mxu0 0.0
    %672 = vmatpush1.msra.mxu0 0.0
    %673 = vmatprep.subr.mxu0 0.0
    %674 = vmatpush1.msra.mxu0 0.0
    %675 = vmatprep.subr.mxu0 0.0
    %676 = vmatpush1.msra.mxu0 0.0
    %677 = vmatprep.subr.mxu0 0.0
    %678 = vmatpush1.msra.mxu0 0.0
    %679 = vmatprep.subr.mxu0 0.0
    %680 = vmatpush1.msra.mxu0 0.0
    %681 = vmatprep.subr.mxu0 0.0
    %682 = vmatpush1.msra.mxu0 0.0
    %683 = vmatprep.subr.mxu0 0.0
    %684 = vmatpush1.msra.mxu0 0.0
    %685 = vmatprep.subr.mxu0 0.0
    %686 = vmatpush1.msra.mxu0 0.0
    %687 = vmatprep.subr.mxu0 0.0
    %688 = vmatpush1.msra.mxu0 0.0
    %689 = vmatprep.subr.mxu0 0.0
    %690 = vmatpush1.msra.mxu0 0.0
    %691 = vmatprep.subr.mxu0 0.0
    %692 = vmatpush1.msra.mxu0 0.0
    %693 = vmatprep.subr.mxu0 0.0
    %694 = vmatpush1.msra.mxu0 0.0
    %695 = vmatprep.subr.mxu0 0.0
    %696 = vmatpush1.msra.mxu0 0.0
    %697 = vmatprep.subr.mxu0 0.0
    %698 = vmatpush1.msra.mxu0 0.0
    %699 = vmatprep.subr.mxu0 0.0
    %700 = vmatpush1.msra.mxu0 0.0
    %701 = vmatprep.subr.mxu0 0.0
    %702 = vmatpush1.msra.mxu0 0.0
    %703 = vmatprep.subr.mxu0 0.0
    %704 = vmatpush1.msra.mxu0 0.0
    %705 = vmatprep.subr.mxu0 0.0
    %706 = vmatpush1.msra.mxu0 0.0
    %707 = vmatprep.subr.mxu0 0.0
    %708 = vmatpush1.msra.mxu0 0.0
    %709 = vmatprep.subr.mxu0 0.0
    %710 = vmatpush1.msra.mxu0 0.0
    %711 = vmatprep.subr.mxu0 0.0
    %712 = vmatpush1.msra.mxu0 0.0
    %713 = vmatprep.subr.mxu0 0.0
    %714 = vmatpush1.msra.mxu0 0.0
    %715 = vmatprep.subr.mxu0 0.0
    %716 = vmatpush1.msra.mxu0 0.0
    %717 = vmatprep.subr.mxu0 0.0
    %718 = vmatpush1.msra.mxu0 0.0
    %719 = vmatprep.subr.mxu0 0.0
    %720 = vmatpush1.msra.mxu0 0.0
    %721 = vmatprep.subr.mxu0 0.0
    %722 = vmatpush1.msra.mxu0 0.0
    %723 = vmatprep.subr.mxu0 0.0
    %724 = vmatpush1.msra.mxu0 0.0
    %725 = vmatprep.subr.mxu0 0.0
    %726 = vmatpush1.msra.mxu0 0.0
    %727 = vmatprep.subr.mxu0 0.0
    %728 = vmatpush1.msra.mxu0 0.0
    %729 = vmatprep.subr.mxu0 0.0
    %730 = vmatpush1.msra.mxu0 0.0
    %731 = vmatprep.subr.mxu0 0.0
    %732 = vmatpush1.msra.mxu0 0.0
    %733 = vmatprep.mubr.f32.mxu0 0.0
    %734 = vmatmul.mubr.f32.gmra.mrb[0].mxu0 %v667
    %v735 = vpop.f32.mrb[0].mxu0
    %v736 = vadd.f32 0.0, %v735
    %v737 = vpop.f32.mrb[0].mxu0
    %738 = vdwg.mxu0
    %v740 = vsel %vm336, %v494, 0
    %742 = vmatprep.subr.mxu0 0.0
    %743 = vmatpush1.msra.mxu0 %v497
    %744 = vmatprep.subr.mxu0 0.0
    %745 = vmatpush1.msra.mxu0 0.0
    %746 = vmatprep.subr.mxu0 0.0
    %747 = vmatpush1.msra.mxu0 0.0
    %748 = vmatprep.subr.mxu0 0.0
    %749 = vmatpush1.msra.mxu0 0.0
    %750 = vmatprep.subr.mxu0 0.0
    %751 = vmatpush1.msra.mxu0 0.0
    %752 = vmatprep.subr.mxu0 0.0
    %753 = vmatpush1.msra.mxu0 0.0
    %754 = vmatprep.subr.mxu0 0.0
    %755 = vmatpush1.msra.mxu0 0.0
    %756 = vmatprep.subr.mxu0 0.0
    %757 = vmatpush1.msra.mxu0 0.0
    %758 = vmatprep.subr.mxu0 0.0
    %759 = vmatpush1.msra.mxu0 0.0
    %760 = vmatprep.subr.mxu0 0.0
    %761 = vmatpush1.msra.mxu0 0.0
    %762 = vmatprep.subr.mxu0 0.0
    %763 = vmatpush1.msra.mxu0 0.0
    %764 = vmatprep.subr.mxu0 0.0
    %765 = vmatpush1.msra.mxu0 0.0
    %766 = vmatprep.subr.mxu0 0.0
    %767 = vmatpush1.msra.mxu0 0.0
    %768 = vmatprep.subr.mxu0 0.0
    %769 = vmatpush1.msra.mxu0 0.0
    %770 = vmatprep.subr.mxu0 0.0
    %771 = vmatpush1.msra.mxu0 0.0
    %772 = vmatprep.subr.mxu0 0.0
    %773 = vmatpush1.msra.mxu0 0.0
    %774 = vmatprep.subr.mxu0 0.0
    %775 = vmatpush1.msra.mxu0 0.0
    %776 = vmatprep.subr.mxu0 0.0
    %777 = vmatpush1.msra.mxu0 0.0
    %778 = vmatprep.subr.mxu0 0.0
    %779 = vmatpush1.msra.mxu0 0.0
    %780 = vmatprep.subr.mxu0 0.0
    %781 = vmatpush1.msra.mxu0 0.0
    %782 = vmatprep.subr.mxu0 0.0
    %783 = vmatpush1.msra.mxu0 0.0
    %784 = vmatprep.subr.mxu0 0.0
    %785 = vmatpush1.msra.mxu0 0.0
    %786 = vmatprep.subr.mxu0 0.0
    %787 = vmatpush1.msra.mxu0 0.0
    %788 = vmatprep.subr.mxu0 0.0
    %789 = vmatpush1.msra.mxu0 0.0
    %790 = vmatprep.subr.mxu0 0.0
    %791 = vmatpush1.msra.mxu0 0.0
    %792 = vmatprep.subr.mxu0 0.0
    %793 = vmatpush1.msra.mxu0 0.0
    %794 = vmatprep.subr.mxu0 0.0
    %795 = vmatpush1.msra.mxu0 0.0
    %796 = vmatprep.subr.mxu0 0.0
    %797 = vmatpush1.msra.mxu0 0.0
    %798 = vmatprep.subr.mxu0 0.0
    %799 = vmatpush1.msra.mxu0 0.0
    %800 = vmatprep.subr.mxu0 0.0
    %801 = vmatpush1.msra.mxu0 0.0
    %802 = vmatprep.subr.mxu0 0.0
    %803 = vmatpush1.msra.mxu0 0.0
    %804 = vmatprep.subr.mxu0 0.0
    %805 = vmatpush1.msra.mxu0 0.0
    %806 = vmatprep.mubr.f32.mxu0 0.0
    %807 = vmatmul.mubr.f32.gmra.mrb[0].mxu0 %v740
    %v808 = vpop.f32.mrb[0].mxu0
    %v809 = vadd.f32 %v736, %v808
    %v810 = vpop.f32.mrb[0].mxu0
    %811 = vdwg.mxu0
    %812 = vrot.lane.b32.xlu0 %v168, 112
    %v813 = vpop.permute.xlu0 %812
    %814 = vrot.lane.b32.xlu0 %v245, 112
    %v815 = vpop.permute.xlu0 %814
    %v816 = vsel %vm336, %v813, 0
    %v818 = vsel %vm336, %v815, 0
    %820 = vmatprep.subr.mxu0 0.0
    %821 = vmatpush1.xpose.msra.mxu0 %v818
    %822 = vmatprep.subr.mxu0 0.0
    %823 = vmatpush1.xpose.msra.mxu0 0.0
    %824 = vmatprep.subr.mxu0 0.0
    %825 = vmatpush1.xpose.msra.mxu0 0.0
    %826 = vmatprep.subr.mxu0 0.0
    %827 = vmatpush1.xpose.msra.mxu0 0.0
    %828 = vmatprep.subr.mxu0 0.0
    %829 = vmatpush1.xpose.msra.mxu0 0.0
    %830 = vmatprep.subr.mxu0 0.0
    %831 = vmatpush1.xpose.msra.mxu0 0.0
    %832 = vmatprep.subr.mxu0 0.0
    %833 = vmatpush1.xpose.msra.mxu0 0.0
    %834 = vmatprep.subr.mxu0 0.0
    %835 = vmatpush1.xpose.msra.mxu0 0.0
    %836 = vmatprep.subr.mxu0 0.0
    %837 = vmatpush1.xpose.msra.mxu0 0.0
    %838 = vmatprep.subr.mxu0 0.0
    %839 = vmatpush1.xpose.msra.mxu0 0.0
    %840 = vmatprep.subr.mxu0 0.0
    %841 = vmatpush1.xpose.msra.mxu0 0.0
    %842 = vmatprep.subr.mxu0 0.0
    %843 = vmatpush1.xpose.msra.mxu0 0.0
    %844 = vmatprep.subr.mxu0 0.0
    %845 = vmatpush1.xpose.msra.mxu0 0.0
    %846 = vmatprep.subr.mxu0 0.0
    %847 = vmatpush1.xpose.msra.mxu0 0.0
    %848 = vmatprep.subr.mxu0 0.0
    %849 = vmatpush1.xpose.msra.mxu0 0.0
    %850 = vmatprep.subr.mxu0 0.0
    %851 = vmatpush1.xpose.msra.mxu0 0.0
    %852 = vmatprep.subr.mxu0 0.0
    %853 = vmatpush1.xpose.msra.mxu0 0.0
    %854 = vmatprep.subr.mxu0 0.0
    %855 = vmatpush1.xpose.msra.mxu0 0.0
    %856 = vmatprep.subr.mxu0 0.0
    %857 = vmatpush1.xpose.msra.mxu0 0.0
    %858 = vmatprep.subr.mxu0 0.0
    %859 = vmatpush1.xpose.msra.mxu0 0.0
    %860 = vmatprep.subr.mxu0 0.0
    %861 = vmatpush1.xpose.msra.mxu0 0.0
    %862 = vmatprep.subr.mxu0 0.0
    %863 = vmatpush1.xpose.msra.mxu0 0.0
    %864 = vmatprep.subr.mxu0 0.0
    %865 = vmatpush1.xpose.msra.mxu0 0.0
    %866 = vmatprep.subr.mxu0 0.0
    %867 = vmatpush1.xpose.msra.mxu0 0.0
    %868 = vmatprep.subr.mxu0 0.0
    %869 = vmatpush1.xpose.msra.mxu0 0.0
    %870 = vmatprep.subr.mxu0 0.0
    %871 = vmatpush1.xpose.msra.mxu0 0.0
    %872 = vmatprep.subr.mxu0 0.0
    %873 = vmatpush1.xpose.msra.mxu0 0.0
    %874 = vmatprep.subr.mxu0 0.0
    %875 = vmatpush1.xpose.msra.mxu0 0.0
    %876 = vmatprep.subr.mxu0 0.0
    %877 = vmatpush1.xpose.msra.mxu0 0.0
    %878 = vmatprep.subr.mxu0 0.0
    %879 = vmatpush1.xpose.msra.mxu0 0.0
    %880 = vmatprep.subr.mxu0 0.0
    %881 = vmatpush1.xpose.msra.mxu0 0.0
    %882 = vmatprep.subr.mxu0 0.0
    %883 = vmatpush1.xpose.msra.mxu0 0.0
    %884 = vmatprep.mubr.f32.mxu0 0.0
    %885 = vmatmul.mubr.f32.gmra.mrb[0].mxu0 %v816
    %v886 = vpop.f32.mrb[0].mxu0
    %v887 = vadd.f32 0.0, %v886
    %v888 = vpop.f32.mrb[0].mxu0
    %889 = vdwg.mxu0
    %v890 = vsel %vm336, %v887, -inf
    %891 = vmax.xlane.f32.xlu0 %v890
    %v892 = vpop.xlane.xlu0 %891
    %v893 = vsub.f32 %v887, %v892
    %v894 = vmul.f32 %v893, 1.442695
    %v895 = vpow.pop %v894
    %v896 = vsel %vm336, %v895, 0.0
    %897 = vadd.xlane.f32.xlu0 %v896
    %v898 = vpop.xlane.xlu0 %897
    %v899 = vrcp.pop %v898
    %v900 = vmul.f32 %v895, %v899
    %901 = vrot.lane.b32.xlu0 %v328, 112
    %v902 = vpop.permute.xlu0 %901
    %v905 = vsel %vm336, %v900, 0
    %907 = vmatprep.subr.mxu0 0.0
    %908 = vmatpush1.msra.mxu0 %v902
    %909 = vmatprep.subr.mxu0 0.0
    %910 = vmatpush1.msra.mxu0 0.0
    %911 = vmatprep.subr.mxu0 0.0
    %912 = vmatpush1.msra.mxu0 0.0
    %913 = vmatprep.subr.mxu0 0.0
    %914 = vmatpush1.msra.mxu0 0.0
    %915 = vmatprep.subr.mxu0 0.0
    %916 = vmatpush1.msra.mxu0 0.0
    %917 = vmatprep.subr.mxu0 0.0
    %918 = vmatpush1.msra.mxu0 0.0
    %919 = vmatprep.subr.mxu0 0.0
    %920 = vmatpush1.msra.mxu0 0.0
    %921 = vmatprep.subr.mxu0 0.0
    %922 = vmatpush1.msra.mxu0 0.0
    %923 = vmatprep.subr.mxu0 0.0
    %924 = vmatpush1.msra.mxu0 0.0
    %925 = vmatprep.subr.mxu0 0.0
    %926 = vmatpush1.msra.mxu0 0.0
    %927 = vmatprep.subr.mxu0 0.0
    %928 = vmatpush1.msra.mxu0 0.0
    %929 = vmatprep.subr.mxu0 0.0
    %930 = vmatpush1.msra.mxu0 0.0
    %931 = vmatprep.subr.mxu0 0.0
    %932 = vmatpush1.msra.mxu0 0.0
    %933 = vmatprep.subr.mxu0 0.0
    %934 = vmatpush1.msra.mxu0 0.0
    %935 = vmatprep.subr.mxu0 0.0
    %936 = vmatpush1.msra.mxu0 0.0
    %937 = vmatprep.subr.mxu0 0.0
    %938 = vmatpush1.msra.mxu0 0.0
    %939 = vmatprep.subr.mxu0 0.0
    %940 = vmatpush1.msra.mxu0 0.0
    %941 = vmatprep.subr.mxu0 0.0
    %942 = vmatpush1.msra.mxu0 0.0
    %943 = vmatprep.subr.mxu0 0.0
    %944 = vmatpush1.msra.mxu0 0.0
    %945 = vmatprep.subr.mxu0 0.0
    %946 = vmatpush1.msra.mxu0 0.0
    %947 = vmatprep.subr.mxu0 0.0
    %948 = vmatpush1.msra.mxu0 0.0
    %949 = vmatprep.subr.mxu0 0.0
    %950 = vmatpush1.msra.mxu0 0.0
    %951 = vmatprep.subr.mxu0 0.0
    %952 = vmatpush1.msra.mxu0 0.0
    %953 = vmatprep.subr.mxu0 0.0
    %954 = vmatpush1.msra.mxu0 0.0
    %955 = vmatprep.subr.mxu0 0.0
    %956 = vmatpush1.msra.mxu0 0.0
    %957 = vmatprep.subr.mxu0 0.0
    %958 = vmatpush1.msra.mxu0 0.0
    %959 = vmatprep.subr.mxu0 0.0
    %960 = vmatpush1.msra.mxu0 0.0
    %961 = vmatprep.subr.mxu0 0.0
    %962 = vmatpush1.msra.mxu0 0.0
    %963 = vmatprep.subr.mxu0 0.0
    %964 = vmatpush1.msra.mxu0 0.0
    %965 = vmatprep.subr.mxu0 0.0
    %966 = vmatpush1.msra.mxu0 0.0
    %967 = vmatprep.subr.mxu0 0.0
    %968 = vmatpush1.msra.mxu0 0.0
    %969 = vmatprep.subr.mxu0 0.0
    %970 = vmatpush1.msra.mxu0 0.0
    %971 = vmatprep.mubr.f32.mxu0 0.0
    %972 = vmatmul.mubr.f32.gmra.mrb[0].mxu0 %v905
    %v973 = vpop.f32.mrb[0].mxu0
    %v974 = vadd.f32 0.0, %v973
    %v975 = vpop.f32.mrb[0].mxu0
    %976 = vdwg.mxu0
    %s977 = scalar_lea.vmem [#allocation5], 16
    %v978 = vld [vmem:[%s977] sm:$0xff]
    %v980 = vsel %vm336, %v974, 0
    %982 = vmatprep.subr.mxu0 0.0
    %983 = vmatpush1.msra.mxu0 %v978
    %984 = vmatprep.subr.mxu0 0.0
    %985 = vmatpush1.msra.mxu0 0.0
    %986 = vmatprep.subr.mxu0 0.0
    %987 = vmatpush1.msra.mxu0 0.0
    %988 = vmatprep.subr.mxu0 0.0
    %989 = vmatpush1.msra.mxu0 0.0
    %990 = vmatprep.subr.mxu0 0.0
    %991 = vmatpush1.msra.mxu0 0.0
    %992 = vmatprep.subr.mxu0 0.0
    %993 = vmatpush1.msra.mxu0 0.0
    %994 = vmatprep.subr.mxu0 0.0
    %995 = vmatpush1.msra.mxu0 0.0
    %996 = vmatprep.subr.mxu0 0.0
    %997 = vmatpush1.msra.mxu0 0.0
    %998 = vmatprep.subr.mxu0 0.0
    %999 = vmatpush1.msra.mxu0 0.0
    %1000 = vmatprep.subr.mxu0 0.0
    %1001 = vmatpush1.msra.mxu0 0.0
    %1002 = vmatprep.subr.mxu0 0.0
    %1003 = vmatpush1.msra.mxu0 0.0
    %1004 = vmatprep.subr.mxu0 0.0
    %1005 = vmatpush1.msra.mxu0 0.0
    %1006 = vmatprep.subr.mxu0 0.0
    %1007 = vmatpush1.msra.mxu0 0.0
    %1008 = vmatprep.subr.mxu0 0.0
    %1009 = vmatpush1.msra.mxu0 0.0
    %1010 = vmatprep.subr.mxu0 0.0
    %1011 = vmatpush1.msra.mxu0 0.0
    %1012 = vmatprep.subr.mxu0 0.0
    %1013 = vmatpush1.msra.mxu0 0.0
    %1014 = vmatprep.subr.mxu0 0.0
    %1015 = vmatpush1.msra.mxu0 0.0
    %1016 = vmatprep.subr.mxu0 0.0
    %1017 = vmatpush1.msra.mxu0 0.0
    %1018 = vmatprep.subr.mxu0 0.0
    %1019 = vmatpush1.msra.mxu0 0.0
    %1020 = vmatprep.subr.mxu0 0.0
    %1021 = vmatpush1.msra.mxu0 0.0
    %1022 = vmatprep.subr.mxu0 0.0
    %1023 = vmatpush1.msra.mxu0 0.0
    %1024 = vmatprep.subr.mxu0 0.0
    %1025 = vmatpush1.msra.mxu0 0.0
    %1026 = vmatprep.subr.mxu0 0.0
    %1027 = vmatpush1.msra.mxu0 0.0
    %1028 = vmatprep.subr.mxu0 0.0
    %1029 = vmatpush1.msra.mxu0 0.0
    %1030 = vmatprep.subr.mxu0 0.0
    %1031 = vmatpush1.msra.mxu0 0.0
    %1032 = vmatprep.subr.mxu0 0.0
    %1033 = vmatpush1.msra.mxu0 0.0
    %1034 = vmatprep.subr.mxu0 0.0
    %1035 = vmatpush1.msra.mxu0 0.0
    %1036 = vmatprep.subr.mxu0 0.0
    %1037 = vmatpush1.msra.mxu0 0.0
    %1038 = vmatprep.subr.mxu0 0.0
    %1039 = vmatpush1.msra.mxu0 0.0
    %1040 = vmatprep.subr.mxu0 0.0
    %1041 = vmatpush1.msra.mxu0 0.0
    %1042 = vmatprep.subr.mxu0 0.0
    %1043 = vmatpush1.msra.mxu0 0.0
    %1044 = vmatprep.subr.mxu0 0.0
    %1045 = vmatpush1.msra.mxu0 0.0
    %1046 = vmatprep.mubr.f32.mxu0 0.0
    %1047 = vmatmul.mubr.f32.gmra.mrb[0].mxu0 %v980
    %v1048 = vpop.f32.mrb[0].mxu0
    %v1049 = vadd.f32 0.0, %v1048
    %v1050 = vpop.f32.mrb[0].mxu0
    %1051 = vdwg.mxu0
    %v1052 = vadd.f32 %v809, %v1049
    %1053 = vrot.lane.b32.xlu0 %v168, 104
    %v1054 = vpop.permute.xlu0 %1053
    %1055 = vrot.lane.b32.xlu0 %v245, 104
    %v1056 = vpop.permute.xlu0 %1055
    %v1057 = vsel %vm336, %v1054, 0
    %v1059 = vsel %vm336, %v1056, 0
    %1061 = vmatprep.subr.mxu0 0.0
    %1062 = vmatpush1.xpose.msra.mxu0 %v1059
    %1063 = vmatprep.subr.mxu0 0.0
    %1064 = vmatpush1.xpose.msra.mxu0 0.0
    %1065 = vmatprep.subr.mxu0 0.0
    %1066 = vmatpush1.xpose.msra.mxu0 0.0
    %1067 = vmatprep.subr.mxu0 0.0
    %1068 = vmatpush1.xpose.msra.mxu0 0.0
    %1069 = vmatprep.subr.mxu0 0.0
    %1070 = vmatpush1.xpose.msra.mxu0 0.0
    %1071 = vmatprep.subr.mxu0 0.0
    %1072 = vmatpush1.xpose.msra.mxu0 0.0
    %1073 = vmatprep.subr.mxu0 0.0
    %1074 = vmatpush1.xpose.msra.mxu0 0.0
    %1075 = vmatprep.subr.mxu0 0.0
    %1076 = vmatpush1.xpose.msra.mxu0 0.0
    %1077 = vmatprep.subr.mxu0 0.0
    %1078 = vmatpush1.xpose.msra.mxu0 0.0
    %1079 = vmatprep.subr.mxu0 0.0
    %1080 = vmatpush1.xpose.msra.mxu0 0.0
    %1081 = vmatprep.subr.mxu0 0.0
    %1082 = vmatpush1.xpose.msra.mxu0 0.0
    %1083 = vmatprep.subr.mxu0 0.0
    %1084 = vmatpush1.xpose.msra.mxu0 0.0
    %1085 = vmatprep.subr.mxu0 0.0
    %1086 = vmatpush1.xpose.msra.mxu0 0.0
    %1087 = vmatprep.subr.mxu0 0.0
    %1088 = vmatpush1.xpose.msra.mxu0 0.0
    %1089 = vmatprep.subr.mxu0 0.0
    %1090 = vmatpush1.xpose.msra.mxu0 0.0
    %1091 = vmatprep.subr.mxu0 0.0
    %1092 = vmatpush1.xpose.msra.mxu0 0.0
    %1093 = vmatprep.subr.mxu0 0.0
    %1094 = vmatpush1.xpose.msra.mxu0 0.0
    %1095 = vmatprep.subr.mxu0 0.0
    %1096 = vmatpush1.xpose.msra.mxu0 0.0
    %1097 = vmatprep.subr.mxu0 0.0
    %1098 = vmatpush1.xpose.msra.mxu0 0.0
    %1099 = vmatprep.subr.mxu0 0.0
    %1100 = vmatpush1.xpose.msra.mxu0 0.0
    %1101 = vmatprep.subr.mxu0 0.0
    %1102 = vmatpush1.xpose.msra.mxu0 0.0
    %1103 = vmatprep.subr.mxu0 0.0
    %1104 = vmatpush1.xpose.msra.mxu0 0.0
    %1105 = vmatprep.subr.mxu0 0.0
    %1106 = vmatpush1.xpose.msra.mxu0 0.0
    %1107 = vmatprep.subr.mxu0 0.0
    %1108 = vmatpush1.xpose.msra.mxu0 0.0
    %1109 = vmatprep.subr.mxu0 0.0
    %1110 = vmatpush1.xpose.msra.mxu0 0.0
    %1111 = vmatprep.subr.mxu0 0.0
    %1112 = vmatpush1.xpose.msra.mxu0 0.0
    %1113 = vmatprep.subr.mxu0 0.0
    %1114 = vmatpush1.xpose.msra.mxu0 0.0
    %1115 = vmatprep.subr.mxu0 0.0
    %1116 = vmatpush1.xpose.msra.mxu0 0.0
    %1117 = vmatprep.subr.mxu0 0.0
    %1118 = vmatpush1.xpose.msra.mxu0 0.0
    %1119 = vmatprep.subr.mxu0 0.0
    %1120 = vmatpush1.xpose.msra.mxu0 0.0
    %1121 = vmatprep.subr.mxu0 0.0
    %1122 = vmatpush1.xpose.msra.mxu0 0.0
    %1123 = vmatprep.subr.mxu0 0.0
    %1124 = vmatpush1.xpose.msra.mxu0 0.0
    %1125 = vmatprep.mubr.f32.mxu0 0.0
    %1126 = vmatmul.mubr.f32.gmra.mrb[0].mxu0 %v1057
    %v1127 = vpop.f32.mrb[0].mxu0
    %v1128 = vadd.f32 0.0, %v1127
    %v1129 = vpop.f32.mrb[0].mxu0
    %1130 = vdwg.mxu0
    %v1131 = vsel %vm336, %v1128, -inf
    %1132 = vmax.xlane.f32.xlu0 %v1131
    %v1133 = vpop.xlane.xlu0 %1132
    %v1134 = vsub.f32 %v1128, %v1133
    %v1135 = vmul.f32 %v1134, 1.442695
    %v1136 = vpow.pop %v1135
    %v1137 = vsel %vm336, %v1136, 0.0
    %1138 = vadd.xlane.f32.xlu0 %v1137
    %v1139 = vpop.xlane.xlu0 %1138
    %v1140 = vrcp.pop %v1139
    %v1141 = vmul.f32 %v1136, %v1140
    %1142 = vrot.lane.b32.xlu0 %v328, 104
    %v1143 = vpop.permute.xlu0 %1142
    %v1146 = vsel %vm336, %v1141, 0
    %1148 = vmatprep.subr.mxu0 0.0
    %1149 = vmatpush1.msra.mxu0 %v1143
    %1150 = vmatprep.subr.mxu0 0.0
    %1151 = vmatpush1.msra.mxu0 0.0
    %1152 = vmatprep.subr.mxu0 0.0
    %1153 = vmatpush1.msra.mxu0 0.0
    %1154 = vmatprep.subr.mxu0 0.0
    %1155 = vmatpush1.msra.mxu0 0.0
    %1156 = vmatprep.subr.mxu0 0.0
    %1157 = vmatpush1.msra.mxu0 0.0
    %1158 = vmatprep.subr.mxu0 0.0
    %1159 = vmatpush1.msra.mxu0 0.0
    %1160 = vmatprep.subr.mxu0 0.0
    %1161 = vmatpush1.msra.mxu0 0.0
    %1162 = vmatprep.subr.mxu0 0.0
    %1163 = vmatpush1.msra.mxu0 0.0
    %1164 = vmatprep.subr.mxu0 0.0
    %1165 = vmatpush1.msra.mxu0 0.0
    %1166 = vmatprep.subr.mxu0 0.0
    %1167 = vmatpush1.msra.mxu0 0.0
    %1168 = vmatprep.subr.mxu0 0.0
    %1169 = vmatpush1.msra.mxu0 0.0
    %1170 = vmatprep.subr.mxu0 0.0
    %1171 = vmatpush1.msra.mxu0 0.0
    %1172 = vmatprep.subr.mxu0 0.0
    %1173 = vmatpush1.msra.mxu0 0.0
    %1174 = vmatprep.subr.mxu0 0.0
    %1175 = vmatpush1.msra.mxu0 0.0
    %1176 = vmatprep.subr.mxu0 0.0
    %1177 = vmatpush1.msra.mxu0 0.0
    %1178 = vmatprep.subr.mxu0 0.0
    %1179 = vmatpush1.msra.mxu0 0.0
    %1180 = vmatprep.subr.mxu0 0.0
    %1181 = vmatpush1.msra.mxu0 0.0
    %1182 = vmatprep.subr.mxu0 0.0
    %1183 = vmatpush1.msra.mxu0 0.0
    %1184 = vmatprep.subr.mxu0 0.0
    %1185 = vmatpush1.msra.mxu0 0.0
    %1186 = vmatprep.subr.mxu0 0.0
    %1187 = vmatpush1.msra.mxu0 0.0
    %1188 = vmatprep.subr.mxu0 0.0
    %1189 = vmatpush1.msra.mxu0 0.0
    %1190 = vmatprep.subr.mxu0 0.0
    %1191 = vmatpush1.msra.mxu0 0.0
    %1192 = vmatprep.subr.mxu0 0.0
    %1193 = vmatpush1.msra.mxu0 0.0
    %1194 = vmatprep.subr.mxu0 0.0
    %1195 = vmatpush1.msra.mxu0 0.0
    %1196 = vmatprep.subr.mxu0 0.0
    %1197 = vmatpush1.msra.mxu0 0.0
    %1198 = vmatprep.subr.mxu0 0.0
    %1199 = vmatpush1.msra.mxu0 0.0
    %1200 = vmatprep.subr.mxu0 0.0
    %1201 = vmatpush1.msra.mxu0 0.0
    %1202 = vmatprep.subr.mxu0 0.0
    %1203 = vmatpush1.msra.mxu0 0.0
    %1204 = vmatprep.subr.mxu0 0.0
    %1205 = vmatpush1.msra.mxu0 0.0
    %1206 = vmatprep.subr.mxu0 0.0
    %1207 = vmatpush1.msra.mxu0 0.0
    %1208 = vmatprep.subr.mxu0 0.0
    %1209 = vmatpush1.msra.mxu0 0.0
    %1210 = vmatprep.subr.mxu0 0.0
    %1211 = vmatpush1.msra.mxu0 0.0
    %1212 = vmatprep.mubr.f32.mxu0 0.0
    %1213 = vmatmul.mubr.f32.gmra.mrb[0].mxu0 %v1146
    %v1214 = vpop.f32.mrb[0].mxu0
    %v1215 = vadd.f32 0.0, %v1214
    %v1216 = vpop.f32.mrb[0].mxu0
    %1217 = vdwg.mxu0
    %s1218 = scalar_lea.vmem [#allocation5], 24
    %v1219 = vld [vmem:[%s1218] sm:$0xff]
    %v1221 = vsel %vm336, %v1215, 0
    %1223 = vmatprep.subr.mxu0 0.0
    %1224 = vmatpush1.msra.mxu0 %v1219
    %1225 = vmatprep.subr.mxu0 0.0
    %1226 = vmatpush1.msra.mxu0 0.0
    %1227 = vmatprep.subr.mxu0 0.0
    %1228 = vmatpush1.msra.mxu0 0.0
    %1229 = vmatprep.subr.mxu0 0.0
    %1230 = vmatpush1.msra.mxu0 0.0
    %1231 = vmatprep.subr.mxu0 0.0
    %1232 = vmatpush1.msra.mxu0 0.0
    %1233 = vmatprep.subr.mxu0 0.0
    %1234 = vmatpush1.msra.mxu0 0.0
    %1235 = vmatprep.subr.mxu0 0.0
    %1236 = vmatpush1.msra.mxu0 0.0
    %1237 = vmatprep.subr.mxu0 0.0
    %1238 = vmatpush1.msra.mxu0 0.0
    %1239 = vmatprep.subr.mxu0 0.0
    %1240 = vmatpush1.msra.mxu0 0.0
    %1241 = vmatprep.subr.mxu0 0.0
    %1242 = vmatpush1.msra.mxu0 0.0
    %1243 = vmatprep.subr.mxu0 0.0
    %1244 = vmatpush1.msra.mxu0 0.0
    %1245 = vmatprep.subr.mxu0 0.0
    %1246 = vmatpush1.msra.mxu0 0.0
    %1247 = vmatprep.subr.mxu0 0.0
    %1248 = vmatpush1.msra.mxu0 0.0
    %1249 = vmatprep.subr.mxu0 0.0
    %1250 = vmatpush1.msra.mxu0 0.0
    %1251 = vmatprep.subr.mxu0 0.0
    %1252 = vmatpush1.msra.mxu0 0.0
    %1253 = vmatprep.subr.mxu0 0.0
    %1254 = vmatpush1.msra.mxu0 0.0
    %1255 = vmatprep.subr.mxu0 0.0
    %1256 = vmatpush1.msra.mxu0 0.0
    %1257 = vmatprep.subr.mxu0 0.0
    %1258 = vmatpush1.msra.mxu0 0.0
    %1259 = vmatprep.subr.mxu0 0.0
    %1260 = vmatpush1.msra.mxu0 0.0
    %1261 = vmatprep.subr.mxu0 0.0
    %1262 = vmatpush1.msra.mxu0 0.0
    %1263 = vmatprep.subr.mxu0 0.0
    %1264 = vmatpush1.msra.mxu0 0.0
    %1265 = vmatprep.subr.mxu0 0.0
    %1266 = vmatpush1.msra.mxu0 0.0
    %1267 = vmatprep.subr.mxu0 0.0
    %1268 = vmatpush1.msra.mxu0 0.0
    %1269 = vmatprep.subr.mxu0 0.0
    %1270 = vmatpush1.msra.mxu0 0.0
    %1271 = vmatprep.subr.mxu0 0.0
    %1272 = vmatpush1.msra.mxu0 0.0
    %1273 = vmatprep.subr.mxu0 0.0
    %1274 = vmatpush1.msra.mxu0 0.0
    %1275 = vmatprep.subr.mxu0 0.0
    %1276 = vmatpush1.msra.mxu0 0.0
    %1277 = vmatprep.subr.mxu0 0.0
    %1278 = vmatpush1.msra.mxu0 0.0
    %1279 = vmatprep.subr.mxu0 0.0
    %1280 = vmatpush1.msra.mxu0 0.0
    %1281 = vmatprep.subr.mxu0 0.0
    %1282 = vmatpush1.msra.mxu0 0.0
    %1283 = vmatprep.subr.mxu0 0.0
    %1284 = vmatpush1.msra.mxu0 0.0
    %1285 = vmatprep.subr.mxu0 0.0
    %1286 = vmatpush1.msra.mxu0 0.0
    %1287 = vmatprep.mubr.f32.mxu0 0.0
    %1288 = vmatmul.mubr.f32.gmra.mrb[0].mxu0 %v1221
    %v1289 = vpop.f32.mrb[0].mxu0
    %v1290 = vadd.f32 0.0, %v1289
    %v1291 = vpop.f32.mrb[0].mxu0
    %1292 = vdwg.mxu0
    %v1293 = vadd.f32 %v1052, %v1290
    %v1295 = vsel %vm336, %v169, 0
    %v1298 = vsel %vm336, %v250, 0
    %1300 = vmatprep.subr.mxu0 0.0
    %1301 = vmatpush1.xpose.msra.mxu0 %v1298
    %1302 = vmatprep.subr.mxu0 0.0
    %1303 = vmatpush1.xpose.msra.mxu0 0.0
    %1304 = vmatprep.subr.mxu0 0.0
    %1305 = vmatpush1.xpose.msra.mxu0 0.0
    %1306 = vmatprep.subr.mxu0 0.0
    %1307 = vmatpush1.xpose.msra.mxu0 0.0
    %1308 = vmatprep.subr.mxu0 0.0
    %1309 = vmatpush1.xpose.msra.mxu0 0.0
    %1310 = vmatprep.subr.mxu0 0.0
    %1311 = vmatpush1.xpose.msra.mxu0 0.0
    %1312 = vmatprep.subr.mxu0 0.0
    %1313 = vmatpush1.xpose.msra.mxu0 0.0
    %1314 = vmatprep.subr.mxu0 0.0
    %1315 = vmatpush1.xpose.msra.mxu0 0.0
    %1316 = vmatprep.subr.mxu0 0.0
    %1317 = vmatpush1.xpose.msra.mxu0 0.0
    %1318 = vmatprep.subr.mxu0 0.0
    %1319 = vmatpush1.xpose.msra.mxu0 0.0
    %1320 = vmatprep.subr.mxu0 0.0
    %1321 = vmatpush1.xpose.msra.mxu0 0.0
    %1322 = vmatprep.subr.mxu0 0.0
    %1323 = vmatpush1.xpose.msra.mxu0 0.0
    %1324 = vmatprep.subr.mxu0 0.0
    %1325 = vmatpush1.xpose.msra.mxu0 0.0
    %1326 = vmatprep.subr.mxu0 0.0
    %1327 = vmatpush1.xpose.msra.mxu0 0.0
    %1328 = vmatprep.subr.mxu0 0.0
    %1329 = vmatpush1.xpose.msra.mxu0 0.0
    %1330 = vmatprep.subr.mxu0 0.0
    %1331 = vmatpush1.xpose.msra.mxu0 0.0
    %1332 = vmatprep.subr.mxu0 0.0
    %1333 = vmatpush1.xpose.msra.mxu0 0.0
    %1334 = vmatprep.subr.mxu0 0.0
    %1335 = vmatpush1.xpose.msra.mxu0 0.0
    %1336 = vmatprep.subr.mxu0 0.0
    %1337 = vmatpush1.xpose.msra.mxu0 0.0
    %1338 = vmatprep.subr.mxu0 0.0
    %1339 = vmatpush1.xpose.msra.mxu0 0.0
    %1340 = vmatprep.subr.mxu0 0.0
    %1341 = vmatpush1.xpose.msra.mxu0 0.0
    %1342 = vmatprep.subr.mxu0 0.0
    %1343 = vmatpush1.xpose.msra.mxu0 0.0
    %1344 = vmatprep.subr.mxu0 0.0
    %1345 = vmatpush1.xpose.msra.mxu0 0.0
    %1346 = vmatprep.subr.mxu0 0.0
    %1347 = vmatpush1.xpose.msra.mxu0 0.0
    %1348 = vmatprep.subr.mxu0 0.0
    %1349 = vmatpush1.xpose.msra.mxu0 0.0
    %1350 = vmatprep.subr.mxu0 0.0
    %1351 = vmatpush1.xpose.msra.mxu0 0.0
    %1352 = vmatprep.subr.mxu0 0.0
    %1353 = vmatpush1.xpose.msra.mxu0 0.0
    %1354 = vmatprep.subr.mxu0 0.0
    %1355 = vmatpush1.xpose.msra.mxu0 0.0
    %1356 = vmatprep.subr.mxu0 0.0
    %1357 = vmatpush1.xpose.msra.mxu0 0.0
    %1358 = vmatprep.subr.mxu0 0.0
    %1359 = vmatpush1.xpose.msra.mxu0 0.0
    %1360 = vmatprep.subr.mxu0 0.0
    %1361 = vmatpush1.xpose.msra.mxu0 0.0
    %1362 = vmatprep.subr.mxu0 0.0
    %1363 = vmatpush1.xpose.msra.mxu0 0.0
    %1364 = vmatprep.mubr.f32.mxu0 0.0
    %1365 = vmatmul.mubr.f32.gmra.mrb[0].mxu0 %v1295
    %v1366 = vpop.f32.mrb[0].mxu0
    %v1367 = vadd.f32 0.0, %v1366
    %v1368 = vpop.f32.mrb[0].mxu0
    %1369 = vdwg.mxu0
    %v1370 = vsel %vm336, %v1367, -inf
    %1371 = vmax.xlane.f32.xlu0 %v1370
    %v1372 = vpop.xlane.xlu0 %1371
    %v1373 = vsub.f32 %v1367, %v1372
    %v1374 = vmul.f32 %v1373, 1.442695
    %v1375 = vpow.pop %v1374
    %v1376 = vsel %vm336, %v1375, 0.0
    %1377 = vadd.xlane.f32.xlu0 %v1376
    %v1378 = vpop.xlane.xlu0 %1377
    %v1379 = vrcp.pop %v1378
    %v1380 = vmul.f32 %v1375, %v1379
    %v1382 = vsel %vm336, %v1380, 0
    %1384 = vmatprep.subr.mxu0 0.0
    %1385 = vmatpush1.msra.mxu0 %v333
    %1386 = vmatprep.subr.mxu0 0.0
    %1387 = vmatpush1.msra.mxu0 0.0
    %1388 = vmatprep.subr.mxu0 0.0
    %1389 = vmatpush1.msra.mxu0 0.0
    %1390 = vmatprep.subr.mxu0 0.0
    %1391 = vmatpush1.msra.mxu0 0.0
    %1392 = vmatprep.subr.mxu0 0.0
    %1393 = vmatpush1.msra.mxu0 0.0
    %1394 = vmatprep.subr.mxu0 0.0
    %1395 = vmatpush1.msra.mxu0 0.0
    %1396 = vmatprep.subr.mxu0 0.0
    %1397 = vmatpush1.msra.mxu0 0.0
    %1398 = vmatprep.subr.mxu0 0.0
    %1399 = vmatpush1.msra.mxu0 0.0
    %1400 = vmatprep.subr.mxu0 0.0
    %1401 = vmatpush1.msra.mxu0 0.0
    %1402 = vmatprep.subr.mxu0 0.0
    %1403 = vmatpush1.msra.mxu0 0.0
    %1404 = vmatprep.subr.mxu0 0.0
    %1405 = vmatpush1.msra.mxu0 0.0
    %1406 = vmatprep.subr.mxu0 0.0
    %1407 = vmatpush1.msra.mxu0 0.0
    %1408 = vmatprep.subr.mxu0 0.0
    %1409 = vmatpush1.msra.mxu0 0.0
    %1410 = vmatprep.subr.mxu0 0.0
    %1411 = vmatpush1.msra.mxu0 0.0
    %1412 = vmatprep.subr.mxu0 0.0
    %1413 = vmatpush1.msra.mxu0 0.0
    %1414 = vmatprep.subr.mxu0 0.0
    %1415 = vmatpush1.msra.mxu0 0.0
    %1416 = vmatprep.subr.mxu0 0.0
    %1417 = vmatpush1.msra.mxu0 0.0
    %1418 = vmatprep.subr.mxu0 0.0
    %1419 = vmatpush1.msra.mxu0 0.0
    %1420 = vmatprep.subr.mxu0 0.0
    %1421 = vmatpush1.msra.mxu0 0.0
    %1422 = vmatprep.subr.mxu0 0.0
    %1423 = vmatpush1.msra.mxu0 0.0
    %1424 = vmatprep.subr.mxu0 0.0
    %1425 = vmatpush1.msra.mxu0 0.0
    %1426 = vmatprep.subr.mxu0 0.0
    %1427 = vmatpush1.msra.mxu0 0.0
    %1428 = vmatprep.subr.mxu0 0.0
    %1429 = vmatpush1.msra.mxu0 0.0
    %1430 = vmatprep.subr.mxu0 0.0
    %1431 = vmatpush1.msra.mxu0 0.0
    %1432 = vmatprep.subr.mxu0 0.0
    %1433 = vmatpush1.msra.mxu0 0.0
    %1434 = vmatprep.subr.mxu0 0.0
    %1435 = vmatpush1.msra.mxu0 0.0
    %1436 = vmatprep.subr.mxu0 0.0
    %1437 = vmatpush1.msra.mxu0 0.0
    %1438 = vmatprep.subr.mxu0 0.0
    %1439 = vmatpush1.msra.mxu0 0.0
    %1440 = vmatprep.subr.mxu0 0.0
    %1441 = vmatpush1.msra.mxu0 0.0
    %1442 = vmatprep.subr.mxu0 0.0
    %1443 = vmatpush1.msra.mxu0 0.0
    %1444 = vmatprep.subr.mxu0 0.0
    %1445 = vmatpush1.msra.mxu0 0.0
    %1446 = vmatprep.subr.mxu0 0.0
    %1447 = vmatpush1.msra.mxu0 0.0
    %1448 = vmatprep.mubr.f32.mxu0 0.0
    %1449 = vmatmul.mubr.f32.gmra.mrb[0].mxu0 %v1382
    %v1450 = vpop.f32.mrb[0].mxu0
    %v1451 = vadd.f32 0.0, %v1450
    %v1452 = vpop.f32.mrb[0].mxu0
    %1453 = vdwg.mxu0
    %1454 = vrot.lane.b32.xlu0 %v169, 120
    %v1455 = vpop.permute.xlu0 %1454
    %1456 = vrot.lane.b32.xlu0 %v250, 120
    %v1457 = vpop.permute.xlu0 %1456
    %v1458 = vsel %vm336, %v1455, 0
    %v1460 = vsel %vm336, %v1457, 0
    %1462 = vmatprep.subr.mxu0 0.0
    %1463 = vmatpush1.xpose.msra.mxu0 %v1460
    %1464 = vmatprep.subr.mxu0 0.0
    %1465 = vmatpush1.xpose.msra.mxu0 0.0
    %1466 = vmatprep.subr.mxu0 0.0
    %1467 = vmatpush1.xpose.msra.mxu0 0.0
    %1468 = vmatprep.subr.mxu0 0.0
    %1469 = vmatpush1.xpose.msra.mxu0 0.0
    %1470 = vmatprep.subr.mxu0 0.0
    %1471 = vmatpush1.xpose.msra.mxu0 0.0
    %1472 = vmatprep.subr.mxu0 0.0
    %1473 = vmatpush1.xpose.msra.mxu0 0.0
    %1474 = vmatprep.subr.mxu0 0.0
    %1475 = vmatpush1.xpose.msra.mxu0 0.0
    %1476 = vmatprep.subr.mxu0 0.0
    %1477 = vmatpush1.xpose.msra.mxu0 0.0
    %1478 = vmatprep.subr.mxu0 0.0
    %1479 = vmatpush1.xpose.msra.mxu0 0.0
    %1480 = vmatprep.subr.mxu0 0.0
    %1481 = vmatpush1.xpose.msra.mxu0 0.0
    %1482 = vmatprep.subr.mxu0 0.0
    %1483 = vmatpush1.xpose.msra.mxu0 0.0
    %1484 = vmatprep.subr.mxu0 0.0
    %1485 = vmatpush1.xpose.msra.mxu0 0.0
    %1486 = vmatprep.subr.mxu0 0.0
    %1487 = vmatpush1.xpose.msra.mxu0 0.0
    %1488 = vmatprep.subr.mxu0 0.0
    %1489 = vmatpush1.xpose.msra.mxu0 0.0
    %1490 = vmatprep.subr.mxu0 0.0
    %1491 = vmatpush1.xpose.msra.mxu0 0.0
    %1492 = vmatprep.subr.mxu0 0.0
    %1493 = vmatpush1.xpose.msra.mxu0 0.0
    %1494 = vmatprep.subr.mxu0 0.0
    %1495 = vmatpush1.xpose.msra.mxu0 0.0
    %1496 = vmatprep.subr.mxu0 0.0
    %1497 = vmatpush1.xpose.msra.mxu0 0.0
    %1498 = vmatprep.subr.mxu0 0.0
    %1499 = vmatpush1.xpose.msra.mxu0 0.0
    %1500 = vmatprep.subr.mxu0 0.0
    %1501 = vmatpush1.xpose.msra.mxu0 0.0
    %1502 = vmatprep.subr.mxu0 0.0
    %1503 = vmatpush1.xpose.msra.mxu0 0.0
    %1504 = vmatprep.subr.mxu0 0.0
    %1505 = vmatpush1.xpose.msra.mxu0 0.0
    %1506 = vmatprep.subr.mxu0 0.0
    %1507 = vmatpush1.xpose.msra.mxu0 0.0
    %1508 = vmatprep.subr.mxu0 0.0
    %1509 = vmatpush1.xpose.msra.mxu0 0.0
    %1510 = vmatprep.subr.mxu0 0.0
    %1511 = vmatpush1.xpose.msra.mxu0 0.0
    %1512 = vmatprep.subr.mxu0 0.0
    %1513 = vmatpush1.xpose.msra.mxu0 0.0
    %1514 = vmatprep.subr.mxu0 0.0
    %1515 = vmatpush1.xpose.msra.mxu0 0.0
    %1516 = vmatprep.subr.mxu0 0.0
    %1517 = vmatpush1.xpose.msra.mxu0 0.0
    %1518 = vmatprep.subr.mxu0 0.0
    %1519 = vmatpush1.xpose.msra.mxu0 0.0
    %1520 = vmatprep.subr.mxu0 0.0
    %1521 = vmatpush1.xpose.msra.mxu0 0.0
    %1522 = vmatprep.subr.mxu0 0.0
    %1523 = vmatpush1.xpose.msra.mxu0 0.0
    %1524 = vmatprep.subr.mxu0 0.0
    %1525 = vmatpush1.xpose.msra.mxu0 0.0
    %1526 = vmatprep.mubr.f32.mxu0 0.0
    %1527 = vmatmul.mubr.f32.gmra.mrb[0].mxu0 %v1458
    %v1528 = vpop.f32.mrb[0].mxu0
    %v1529 = vadd.f32 0.0, %v1528
    %v1530 = vpop.f32.mrb[0].mxu0
    %1531 = vdwg.mxu0
    %v1532 = vsel %vm336, %v1529, -inf
    %1533 = vmax.xlane.f32.xlu0 %v1532
    %v1534 = vpop.xlane.xlu0 %1533
    %v1535 = vsub.f32 %v1529, %v1534
    %v1536 = vmul.f32 %v1535, 1.442695
    %v1537 = vpow.pop %v1536
    %v1538 = vsel %vm336, %v1537, 0.0
    %1539 = vadd.xlane.f32.xlu0 %v1538
    %v1540 = vpop.xlane.xlu0 %1539
    %v1541 = vrcp.pop %v1540
    %v1542 = vmul.f32 %v1537, %v1541
    %1544 = vrot.lane.b32.xlu0 %v333, 120
    %v1545 = vpop.permute.xlu0 %1544
    %v1548 = vsel %vm336, %v1542, 0
    %1550 = vmatprep.subr.mxu0 0.0
    %1551 = vmatpush1.msra.mxu0 %v1545
    %1552 = vmatprep.subr.mxu0 0.0
    %1553 = vmatpush1.msra.mxu0 0.0
    %1554 = vmatprep.subr.mxu0 0.0
    %1555 = vmatpush1.msra.mxu0 0.0
    %1556 = vmatprep.subr.mxu0 0.0
    %1557 = vmatpush1.msra.mxu0 0.0
    %1558 = vmatprep.subr.mxu0 0.0
    %1559 = vmatpush1.msra.mxu0 0.0
    %1560 = vmatprep.subr.mxu0 0.0
    %1561 = vmatpush1.msra.mxu0 0.0
    %1562 = vmatprep.subr.mxu0 0.0
    %1563 = vmatpush1.msra.mxu0 0.0
    %1564 = vmatprep.subr.mxu0 0.0
    %1565 = vmatpush1.msra.mxu0 0.0
    %1566 = vmatprep.subr.mxu0 0.0
    %1567 = vmatpush1.msra.mxu0 0.0
    %1568 = vmatprep.subr.mxu0 0.0
    %1569 = vmatpush1.msra.mxu0 0.0
    %1570 = vmatprep.subr.mxu0 0.0
    %1571 = vmatpush1.msra.mxu0 0.0
    %1572 = vmatprep.subr.mxu0 0.0
    %1573 = vmatpush1.msra.mxu0 0.0
    %1574 = vmatprep.subr.mxu0 0.0
    %1575 = vmatpush1.msra.mxu0 0.0
    %1576 = vmatprep.subr.mxu0 0.0
    %1577 = vmatpush1.msra.mxu0 0.0
    %1578 = vmatprep.subr.mxu0 0.0
    %1579 = vmatpush1.msra.mxu0 0.0
    %1580 = vmatprep.subr.mxu0 0.0
    %1581 = vmatpush1.msra.mxu0 0.0
    %1582 = vmatprep.subr.mxu0 0.0
    %1583 = vmatpush1.msra.mxu0 0.0
    %1584 = vmatprep.subr.mxu0 0.0
    %1585 = vmatpush1.msra.mxu0 0.0
    %1586 = vmatprep.subr.mxu0 0.0
    %1587 = vmatpush1.msra.mxu0 0.0
    %1588 = vmatprep.subr.mxu0 0.0
    %1589 = vmatpush1.msra.mxu0 0.0
    %1590 = vmatprep.subr.mxu0 0.0
    %1591 = vmatpush1.msra.mxu0 0.0
    %1592 = vmatprep.subr.mxu0 0.0
    %1593 = vmatpush1.msra.mxu0 0.0
    %1594 = vmatprep.subr.mxu0 0.0
    %1595 = vmatpush1.msra.mxu0 0.0
    %1596 = vmatprep.subr.mxu0 0.0
    %1597 = vmatpush1.msra.mxu0 0.0
    %1598 = vmatprep.subr.mxu0 0.0
    %1599 = vmatpush1.msra.mxu0 0.0
    %1600 = vmatprep.subr.mxu0 0.0
    %1601 = vmatpush1.msra.mxu0 0.0
    %1602 = vmatprep.subr.mxu0 0.0
    %1603 = vmatpush1.msra.mxu0 0.0
    %1604 = vmatprep.subr.mxu0 0.0
    %1605 = vmatpush1.msra.mxu0 0.0
    %1606 = vmatprep.subr.mxu0 0.0
    %1607 = vmatpush1.msra.mxu0 0.0
    %1608 = vmatprep.subr.mxu0 0.0
    %1609 = vmatpush1.msra.mxu0 0.0
    %1610 = vmatprep.subr.mxu0 0.0
    %1611 = vmatpush1.msra.mxu0 0.0
    %1612 = vmatprep.subr.mxu0 0.0
    %1613 = vmatpush1.msra.mxu0 0.0
    %1614 = vmatprep.mubr.f32.mxu0 0.0
    %1615 = vmatmul.mubr.f32.gmra.mrb[0].mxu0 %v1548
    %v1616 = vpop.f32.mrb[0].mxu0
    %v1617 = vadd.f32 0.0, %v1616
    %v1618 = vpop.f32.mrb[0].mxu0
    %1619 = vdwg.mxu0
    %v1621 = vsel %vm336, %v1617, 0
    %1623 = vmatprep.subr.mxu0 0.0
    %1624 = vmatpush1.msra.mxu0 %v665
    %1625 = vmatprep.subr.mxu0 0.0
    %1626 = vmatpush1.msra.mxu0 0.0
    %1627 = vmatprep.subr.mxu0 0.0
    %1628 = vmatpush1.msra.mxu0 0.0
    %1629 = vmatprep.subr.mxu0 0.0
    %1630 = vmatpush1.msra.mxu0 0.0
    %1631 = vmatprep.subr.mxu0 0.0
    %1632 = vmatpush1.msra.mxu0 0.0
    %1633 = vmatprep.subr.mxu0 0.0
    %1634 = vmatpush1.msra.mxu0 0.0
    %1635 = vmatprep.subr.mxu0 0.0
    %1636 = vmatpush1.msra.mxu0 0.0
    %1637 = vmatprep.subr.mxu0 0.0
    %1638 = vmatpush1.msra.mxu0 0.0
    %1639 = vmatprep.subr.mxu0 0.0
    %1640 = vmatpush1.msra.mxu0 0.0
    %1641 = vmatprep.subr.mxu0 0.0
    %1642 = vmatpush1.msra.mxu0 0.0
    %1643 = vmatprep.subr.mxu0 0.0
    %1644 = vmatpush1.msra.mxu0 0.0
    %1645 = vmatprep.subr.mxu0 0.0
    %1646 = vmatpush1.msra.mxu0 0.0
    %1647 = vmatprep.subr.mxu0 0.0
    %1648 = vmatpush1.msra.mxu0 0.0
    %1649 = vmatprep.subr.mxu0 0.0
    %1650 = vmatpush1.msra.mxu0 0.0
    %1651 = vmatprep.subr.mxu0 0.0
    %1652 = vmatpush1.msra.mxu0 0.0
    %1653 = vmatprep.subr.mxu0 0.0
    %1654 = vmatpush1.msra.mxu0 0.0
    %1655 = vmatprep.subr.mxu0 0.0
    %1656 = vmatpush1.msra.mxu0 0.0
    %1657 = vmatprep.subr.mxu0 0.0
    %1658 = vmatpush1.msra.mxu0 0.0
    %1659 = vmatprep.subr.mxu0 0.0
    %1660 = vmatpush1.msra.mxu0 0.0
    %1661 = vmatprep.subr.mxu0 0.0
    %1662 = vmatpush1.msra.mxu0 0.0
    %1663 = vmatprep.subr.mxu0 0.0
    %1664 = vmatpush1.msra.mxu0 0.0
    %1665 = vmatprep.subr.mxu0 0.0
    %1666 = vmatpush1.msra.mxu0 0.0
    %1667 = vmatprep.subr.mxu0 0.0
    %1668 = vmatpush1.msra.mxu0 0.0
    %1669 = vmatprep.subr.mxu0 0.0
    %1670 = vmatpush1.msra.mxu0 0.0
    %1671 = vmatprep.subr.mxu0 0.0
    %1672 = vmatpush1.msra.mxu0 0.0
    %1673 = vmatprep.subr.mxu0 0.0
    %1674 = vmatpush1.msra.mxu0 0.0
    %1675 = vmatprep.subr.mxu0 0.0
    %1676 = vmatpush1.msra.mxu0 0.0
    %1677 = vmatprep.subr.mxu0 0.0
    %1678 = vmatpush1.msra.mxu0 0.0
    %1679 = vmatprep.subr.mxu0 0.0
    %1680 = vmatpush1.msra.mxu0 0.0
    %1681 = vmatprep.subr.mxu0 0.0
    %1682 = vmatpush1.msra.mxu0 0.0
    %1683 = vmatprep.subr.mxu0 0.0
    %1684 = vmatpush1.msra.mxu0 0.0
    %1685 = vmatprep.subr.mxu0 0.0
    %1686 = vmatpush1.msra.mxu0 0.0
    %1687 = vmatprep.mubr.f32.mxu0 0.0
    %1688 = vmatmul.mubr.f32.gmra.mrb[0].mxu0 %v1621
    %v1689 = vpop.f32.mrb[0].mxu0
    %v1690 = vadd.f32 0.0, %v1689
    %v1691 = vpop.f32.mrb[0].mxu0
    %1692 = vdwg.mxu0
    %v1694 = vsel %vm336, %v1451, 0
    %1696 = vmatprep.subr.mxu0 0.0
    %1697 = vmatpush1.msra.mxu0 %v497
    %1698 = vmatprep.subr.mxu0 0.0
    %1699 = vmatpush1.msra.mxu0 0.0
    %1700 = vmatprep.subr.mxu0 0.0
    %1701 = vmatpush1.msra.mxu0 0.0
    %1702 = vmatprep.subr.mxu0 0.0
    %1703 = vmatpush1.msra.mxu0 0.0
    %1704 = vmatprep.subr.mxu0 0.0
    %1705 = vmatpush1.msra.mxu0 0.0
    %1706 = vmatprep.subr.mxu0 0.0
    %1707 = vmatpush1.msra.mxu0 0.0
    %1708 = vmatprep.subr.mxu0 0.0
    %1709 = vmatpush1.msra.mxu0 0.0
    %1710 = vmatprep.subr.mxu0 0.0
    %1711 = vmatpush1.msra.mxu0 0.0
    %1712 = vmatprep.subr.mxu0 0.0
    %1713 = vmatpush1.msra.mxu0 0.0
    %1714 = vmatprep.subr.mxu0 0.0
    %1715 = vmatpush1.msra.mxu0 0.0
    %1716 = vmatprep.subr.mxu0 0.0
    %1717 = vmatpush1.msra.mxu0 0.0
    %1718 = vmatprep.subr.mxu0 0.0
    %1719 = vmatpush1.msra.mxu0 0.0
    %1720 = vmatprep.subr.mxu0 0.0
    %1721 = vmatpush1.msra.mxu0 0.0
    %1722 = vmatprep.subr.mxu0 0.0
    %1723 = vmatpush1.msra.mxu0 0.0
    %1724 = vmatprep.subr.mxu0 0.0
    %1725 = vmatpush1.msra.mxu0 0.0
    %1726 = vmatprep.subr.mxu0 0.0
    %1727 = vmatpush1.msra.mxu0 0.0
    %1728 = vmatprep.subr.mxu0 0.0
    %1729 = vmatpush1.msra.mxu0 0.0
    %1730 = vmatprep.subr.mxu0 0.0
    %1731 = vmatpush1.msra.mxu0 0.0
    %1732 = vmatprep.subr.mxu0 0.0
    %1733 = vmatpush1.msra.mxu0 0.0
    %1734 = vmatprep.subr.mxu0 0.0
    %1735 = vmatpush1.msra.mxu0 0.0
    %1736 = vmatprep.subr.mxu0 0.0
    %1737 = vmatpush1.msra.mxu0 0.0
    %1738 = vmatprep.subr.mxu0 0.0
    %1739 = vmatpush1.msra.mxu0 0.0
    %1740 = vmatprep.subr.mxu0 0.0
    %1741 = vmatpush1.msra.mxu0 0.0
    %1742 = vmatprep.subr.mxu0 0.0
    %1743 = vmatpush1.msra.mxu0 0.0
    %1744 = vmatprep.subr.mxu0 0.0
    %1745 = vmatpush1.msra.mxu0 0.0
    %1746 = vmatprep.subr.mxu0 0.0
    %1747 = vmatpush1.msra.mxu0 0.0
    %1748 = vmatprep.subr.mxu0 0.0
    %1749 = vmatpush1.msra.mxu0 0.0
    %1750 = vmatprep.subr.mxu0 0.0
    %1751 = vmatpush1.msra.mxu0 0.0
    %1752 = vmatprep.subr.mxu0 0.0
    %1753 = vmatpush1.msra.mxu0 0.0
    %1754 = vmatprep.subr.mxu0 0.0
    %1755 = vmatpush1.msra.mxu0 0.0
    %1756 = vmatprep.subr.mxu0 0.0
    %1757 = vmatpush1.msra.mxu0 0.0
    %1758 = vmatprep.subr.mxu0 0.0
    %1759 = vmatpush1.msra.mxu0 0.0
    %1760 = vmatprep.mubr.f32.mxu0 0.0
    %1761 = vmatmul.mubr.f32.gmra.mrb[0].mxu0 %v1694
    %v1762 = vpop.f32.mrb[0].mxu0
    %v1763 = vadd.f32 %v1690, %v1762
    %v1764 = vpop.f32.mrb[0].mxu0
    %1765 = vdwg.mxu0
    %1766 = vrot.lane.b32.xlu0 %v169, 112
    %v1767 = vpop.permute.xlu0 %1766
    %1768 = vrot.lane.b32.xlu0 %v250, 112
    %v1769 = vpop.permute.xlu0 %1768
    %v1770 = vsel %vm336, %v1767, 0
    %v1772 = vsel %vm336, %v1769, 0
    %1774 = vmatprep.subr.mxu0 0.0
    %1775 = vmatpush1.xpose.msra.mxu0 %v1772
    %1776 = vmatprep.subr.mxu0 0.0
    %1777 = vmatpush1.xpose.msra.mxu0 0.0
    %1778 = vmatprep.subr.mxu0 0.0
    %1779 = vmatpush1.xpose.msra.mxu0 0.0
    %1780 = vmatprep.subr.mxu0 0.0
    %1781 = vmatpush1.xpose.msra.mxu0 0.0
    %1782 = vmatprep.subr.mxu0 0.0
    %1783 = vmatpush1.xpose.msra.mxu0 0.0
    %1784 = vmatprep.subr.mxu0 0.0
    %1785 = vmatpush1.xpose.msra.mxu0 0.0
    %1786 = vmatprep.subr.mxu0 0.0
    %1787 = vmatpush1.xpose.msra.mxu0 0.0
    %1788 = vmatprep.subr.mxu0 0.0
    %1789 = vmatpush1.xpose.msra.mxu0 0.0
    %1790 = vmatprep.subr.mxu0 0.0
    %1791 = vmatpush1.xpose.msra.mxu0 0.0
    %1792 = vmatprep.subr.mxu0 0.0
    %1793 = vmatpush1.xpose.msra.mxu0 0.0
    %1794 = vmatprep.subr.mxu0 0.0
    %1795 = vmatpush1.xpose.msra.mxu0 0.0
    %1796 = vmatprep.subr.mxu0 0.0
    %1797 = vmatpush1.xpose.msra.mxu0 0.0
    %1798 = vmatprep.subr.mxu0 0.0
    %1799 = vmatpush1.xpose.msra.mxu0 0.0
    %1800 = vmatprep.subr.mxu0 0.0
    %1801 = vmatpush1.xpose.msra.mxu0 0.0
    %1802 = vmatprep.subr.mxu0 0.0
    %1803 = vmatpush1.xpose.msra.mxu0 0.0
    %1804 = vmatprep.subr.mxu0 0.0
    %1805 = vmatpush1.xpose.msra.mxu0 0.0
    %1806 = vmatprep.subr.mxu0 0.0
    %1807 = vmatpush1.xpose.msra.mxu0 0.0
    %1808 = vmatprep.subr.mxu0 0.0
    %1809 = vmatpush1.xpose.msra.mxu0 0.0
    %1810 = vmatprep.subr.mxu0 0.0
    %1811 = vmatpush1.xpose.msra.mxu0 0.0
    %1812 = vmatprep.subr.mxu0 0.0
    %1813 = vmatpush1.xpose.msra.mxu0 0.0
    %1814 = vmatprep.subr.mxu0 0.0
    %1815 = vmatpush1.xpose.msra.mxu0 0.0
    %1816 = vmatprep.subr.mxu0 0.0
    %1817 = vmatpush1.xpose.msra.mxu0 0.0
    %1818 = vmatprep.subr.mxu0 0.0
    %1819 = vmatpush1.xpose.msra.mxu0 0.0
    %1820 = vmatprep.subr.mxu0 0.0
    %1821 = vmatpush1.xpose.msra.mxu0 0.0
    %1822 = vmatprep.subr.mxu0 0.0
    %1823 = vmatpush1.xpose.msra.mxu0 0.0
    %1824 = vmatprep.subr.mxu0 0.0
    %1825 = vmatpush1.xpose.msra.mxu0 0.0
    %1826 = vmatprep.subr.mxu0 0.0
    %1827 = vmatpush1.xpose.msra.mxu0 0.0
    %1828 = vmatprep.subr.mxu0 0.0
    %1829 = vmatpush1.xpose.msra.mxu0 0.0
    %1830 = vmatprep.subr.mxu0 0.0
    %1831 = vmatpush1.xpose.msra.mxu0 0.0
    %1832 = vmatprep.subr.mxu0 0.0
    %1833 = vmatpush1.xpose.msra.mxu0 0.0
    %1834 = vmatprep.subr.mxu0 0.0
    %1835 = vmatpush1.xpose.msra.mxu0 0.0
    %1836 = vmatprep.subr.mxu0 0.0
    %1837 = vmatpush1.xpose.msra.mxu0 0.0
    %1838 = vmatprep.mubr.f32.mxu0 0.0
    %1839 = vmatmul.mubr.f32.gmra.mrb[0].mxu0 %v1770
    %v1840 = vpop.f32.mrb[0].mxu0
    %v1841 = vadd.f32 0.0, %v1840
    %v1842 = vpop.f32.mrb[0].mxu0
    %1843 = vdwg.mxu0
    %v1844 = vsel %vm336, %v1841, -inf
    %1845 = vmax.xlane.f32.xlu0 %v1844
    %v1846 = vpop.xlane.xlu0 %1845
    %v1847 = vsub.f32 %v1841, %v1846
    %v1848 = vmul.f32 %v1847, 1.442695
    %v1849 = vpow.pop %v1848
    %v1850 = vsel %vm336, %v1849, 0.0
    %1851 = vadd.xlane.f32.xlu0 %v1850
    %v1852 = vpop.xlane.xlu0 %1851
    %v1853 = vrcp.pop %v1852
    %v1854 = vmul.f32 %v1849, %v1853
    %1855 = vrot.lane.b32.xlu0 %v333, 112
    %v1856 = vpop.permute.xlu0 %1855
    %v1859 = vsel %vm336, %v1854, 0
    %1861 = vmatprep.subr.mxu0 0.0
    %1862 = vmatpush1.msra.mxu0 %v1856
    %1863 = vmatprep.subr.mxu0 0.0
    %1864 = vmatpush1.msra.mxu0 0.0
    %1865 = vmatprep.subr.mxu0 0.0
    %1866 = vmatpush1.msra.mxu0 0.0
    %1867 = vmatprep.subr.mxu0 0.0
    %1868 = vmatpush1.msra.mxu0 0.0
    %1869 = vmatprep.subr.mxu0 0.0
    %1870 = vmatpush1.msra.mxu0 0.0
    %1871 = vmatprep.subr.mxu0 0.0
    %1872 = vmatpush1.msra.mxu0 0.0
    %1873 = vmatprep.subr.mxu0 0.0
    %1874 = vmatpush1.msra.mxu0 0.0
    %1875 = vmatprep.subr.mxu0 0.0
    %1876 = vmatpush1.msra.mxu0 0.0
    %1877 = vmatprep.subr.mxu0 0.0
    %1878 = vmatpush1.msra.mxu0 0.0
    %1879 = vmatprep.subr.mxu0 0.0
    %1880 = vmatpush1.msra.mxu0 0.0
    %1881 = vmatprep.subr.mxu0 0.0
    %1882 = vmatpush1.msra.mxu0 0.0
    %1883 = vmatprep.subr.mxu0 0.0
    %1884 = vmatpush1.msra.mxu0 0.0
    %1885 = vmatprep.subr.mxu0 0.0
    %1886 = vmatpush1.msra.mxu0 0.0
    %1887 = vmatprep.subr.mxu0 0.0
    %1888 = vmatpush1.msra.mxu0 0.0
    %1889 = vmatprep.subr.mxu0 0.0
    %1890 = vmatpush1.msra.mxu0 0.0
    %1891 = vmatprep.subr.mxu0 0.0
    %1892 = vmatpush1.msra.mxu0 0.0
    %1893 = vmatprep.subr.mxu0 0.0
    %1894 = vmatpush1.msra.mxu0 0.0
    %1895 = vmatprep.subr.mxu0 0.0
    %1896 = vmatpush1.msra.mxu0 0.0
    %1897 = vmatprep.subr.mxu0 0.0
    %1898 = vmatpush1.msra.mxu0 0.0
    %1899 = vmatprep.subr.mxu0 0.0
    %1900 = vmatpush1.msra.mxu0 0.0
    %1901 = vmatprep.subr.mxu0 0.0
    %1902 = vmatpush1.msra.mxu0 0.0
    %1903 = vmatprep.subr.mxu0 0.0
    %1904 = vmatpush1.msra.mxu0 0.0
    %1905 = vmatprep.subr.mxu0 0.0
    %1906 = vmatpush1.msra.mxu0 0.0
    %1907 = vmatprep.subr.mxu0 0.0
    %1908 = vmatpush1.msra.mxu0 0.0
    %1909 = vmatprep.subr.mxu0 0.0
    %1910 = vmatpush1.msra.mxu0 0.0
    %1911 = vmatprep.subr.mxu0 0.0
    %1912 = vmatpush1.msra.mxu0 0.0
    %1913 = vmatprep.subr.mxu0 0.0
    %1914 = vmatpush1.msra.mxu0 0.0
    %1915 = vmatprep.subr.mxu0 0.0
    %1916 = vmatpush1.msra.mxu0 0.0
    %1917 = vmatprep.subr.mxu0 0.0
    %1918 = vmatpush1.msra.mxu0 0.0
    %1919 = vmatprep.subr.mxu0 0.0
    %1920 = vmatpush1.msra.mxu0 0.0
    %1921 = vmatprep.subr.mxu0 0.0
    %1922 = vmatpush1.msra.mxu0 0.0
    %1923 = vmatprep.subr.mxu0 0.0
    %1924 = vmatpush1.msra.mxu0 0.0
    %1925 = vmatprep.mubr.f32.mxu0 0.0
    %1926 = vmatmul.mubr.f32.gmra.mrb[0].mxu0 %v1859
    %v1927 = vpop.f32.mrb[0].mxu0
    %v1928 = vadd.f32 0.0, %v1927
    %v1929 = vpop.f32.mrb[0].mxu0
    %1930 = vdwg.mxu0
    %v1932 = vsel %vm336, %v1928, 0
    %1934 = vmatprep.subr.mxu0 0.0
    %1935 = vmatpush1.msra.mxu0 %v978
    %1936 = vmatprep.subr.mxu0 0.0
    %1937 = vmatpush1.msra.mxu0 0.0
    %1938 = vmatprep.subr.mxu0 0.0
    %1939 = vmatpush1.msra.mxu0 0.0
    %1940 = vmatprep.subr.mxu0 0.0
    %1941 = vmatpush1.msra.mxu0 0.0
    %1942 = vmatprep.subr.mxu0 0.0
    %1943 = vmatpush1.msra.mxu0 0.0
    %1944 = vmatprep.subr.mxu0 0.0
    %1945 = vmatpush1.msra.mxu0 0.0
    %1946 = vmatprep.subr.mxu0 0.0
    %1947 = vmatpush1.msra.mxu0 0.0
    %1948 = vmatprep.subr.mxu0 0.0
    %1949 = vmatpush1.msra.mxu0 0.0
    %1950 = vmatprep.subr.mxu0 0.0
    %1951 = vmatpush1.msra.mxu0 0.0
    %1952 = vmatprep.subr.mxu0 0.0
    %1953 = vmatpush1.msra.mxu0 0.0
    %1954 = vmatprep.subr.mxu0 0.0
    %1955 = vmatpush1.msra.mxu0 0.0
    %1956 = vmatprep.subr.mxu0 0.0
    %1957 = vmatpush1.msra.mxu0 0.0
    %1958 = vmatprep.subr.mxu0 0.0
    %1959 = vmatpush1.msra.mxu0 0.0
    %1960 = vmatprep.subr.mxu0 0.0
    %1961 = vmatpush1.msra.mxu0 0.0
    %1962 = vmatprep.subr.mxu0 0.0
    %1963 = vmatpush1.msra.mxu0 0.0
    %1964 = vmatprep.subr.mxu0 0.0
    %1965 = vmatpush1.msra.mxu0 0.0
    %1966 = vmatprep.subr.mxu0 0.0
    %1967 = vmatpush1.msra.mxu0 0.0
    %1968 = vmatprep.subr.mxu0 0.0
    %1969 = vmatpush1.msra.mxu0 0.0
    %1970 = vmatprep.subr.mxu0 0.0
    %1971 = vmatpush1.msra.mxu0 0.0
    %1972 = vmatprep.subr.mxu0 0.0
    %1973 = vmatpush1.msra.mxu0 0.0
    %1974 = vmatprep.subr.mxu0 0.0
    %1975 = vmatpush1.msra.mxu0 0.0
    %1976 = vmatprep.subr.mxu0 0.0
    %1977 = vmatpush1.msra.mxu0 0.0
    %1978 = vmatprep.subr.mxu0 0.0
    %1979 = vmatpush1.msra.mxu0 0.0
    %1980 = vmatprep.subr.mxu0 0.0
    %1981 = vmatpush1.msra.mxu0 0.0
    %1982 = vmatprep.subr.mxu0 0.0
    %1983 = vmatpush1.msra.mxu0 0.0
    %1984 = vmatprep.subr.mxu0 0.0
    %1985 = vmatpush1.msra.mxu0 0.0
    %1986 = vmatprep.subr.mxu0 0.0
    %1987 = vmatpush1.msra.mxu0 0.0
    %1988 = vmatprep.subr.mxu0 0.0
    %1989 = vmatpush1.msra.mxu0 0.0
    %1990 = vmatprep.subr.mxu0 0.0
    %1991 = vmatpush1.msra.mxu0 0.0
    %1992 = vmatprep.subr.mxu0 0.0
    %1993 = vmatpush1.msra.mxu0 0.0
    %1994 = vmatprep.subr.mxu0 0.0
    %1995 = vmatpush1.msra.mxu0 0.0
    %1996 = vmatprep.subr.mxu0 0.0
    %1997 = vmatpush1.msra.mxu0 0.0
    %1998 = vmatprep.mubr.f32.mxu0 0.0
    %1999 = vmatmul.mubr.f32.gmra.mrb[0].mxu0 %v1932
    %v2000 = vpop.f32.mrb[0].mxu0
    %v2001 = vadd.f32 0.0, %v2000
    %v2002 = vpop.f32.mrb[0].mxu0
    %2003 = vdwg.mxu0
    %v2004 = vadd.f32 %v1763, %v2001
    %2005 = vrot.lane.b32.xlu0 %v169, 104
    %v2006 = vpop.permute.xlu0 %2005
    %2007 = vrot.lane.b32.xlu0 %v250, 104
    %v2008 = vpop.permute.xlu0 %2007
    %v2009 = vsel %vm336, %v2006, 0
    %v2011 = vsel %vm336, %v2008, 0
    %2013 = vmatprep.subr.mxu0 0.0
    %2014 = vmatpush1.xpose.msra.mxu0 %v2011
    %2015 = vmatprep.subr.mxu0 0.0
    %2016 = vmatpush1.xpose.msra.mxu0 0.0
    %2017 = vmatprep.subr.mxu0 0.0
    %2018 = vmatpush1.xpose.msra.mxu0 0.0
    %2019 = vmatprep.subr.mxu0 0.0
    %2020 = vmatpush1.xpose.msra.mxu0 0.0
    %2021 = vmatprep.subr.mxu0 0.0
    %2022 = vmatpush1.xpose.msra.mxu0 0.0
    %2023 = vmatprep.subr.mxu0 0.0
    %2024 = vmatpush1.xpose.msra.mxu0 0.0
    %2025 = vmatprep.subr.mxu0 0.0
    %2026 = vmatpush1.xpose.msra.mxu0 0.0
    %2027 = vmatprep.subr.mxu0 0.0
    %2028 = vmatpush1.xpose.msra.mxu0 0.0
    %2029 = vmatprep.subr.mxu0 0.0
    %2030 = vmatpush1.xpose.msra.mxu0 0.0
    %2031 = vmatprep.subr.mxu0 0.0
    %2032 = vmatpush1.xpose.msra.mxu0 0.0
    %2033 = vmatprep.subr.mxu0 0.0
    %2034 = vmatpush1.xpose.msra.mxu0 0.0
    %2035 = vmatprep.subr.mxu0 0.0
    %2036 = vmatpush1.xpose.msra.mxu0 0.0
    %2037 = vmatprep.subr.mxu0 0.0
    %2038 = vmatpush1.xpose.msra.mxu0 0.0
    %2039 = vmatprep.subr.mxu0 0.0
    %2040 = vmatpush1.xpose.msra.mxu0 0.0
    %2041 = vmatprep.subr.mxu0 0.0
    %2042 = vmatpush1.xpose.msra.mxu0 0.0
    %2043 = vmatprep.subr.mxu0 0.0
    %2044 = vmatpush1.xpose.msra.mxu0 0.0
    %2045 = vmatprep.subr.mxu0 0.0
    %2046 = vmatpush1.xpose.msra.mxu0 0.0
    %2047 = vmatprep.subr.mxu0 0.0
    %2048 = vmatpush1.xpose.msra.mxu0 0.0
    %2049 = vmatprep.subr.mxu0 0.0
    %2050 = vmatpush1.xpose.msra.mxu0 0.0
    %2051 = vmatprep.subr.mxu0 0.0
    %2052 = vmatpush1.xpose.msra.mxu0 0.0
    %2053 = vmatprep.subr.mxu0 0.0
    %2054 = vmatpush1.xpose.msra.mxu0 0.0
    %2055 = vmatprep.subr.mxu0 0.0
    %2056 = vmatpush1.xpose.msra.mxu0 0.0
    %2057 = vmatprep.subr.mxu0 0.0
    %2058 = vmatpush1.xpose.msra.mxu0 0.0
    %2059 = vmatprep.subr.mxu0 0.0
    %2060 = vmatpush1.xpose.msra.mxu0 0.0
    %2061 = vmatprep.subr.mxu0 0.0
    %2062 = vmatpush1.xpose.msra.mxu0 0.0
    %2063 = vmatprep.subr.mxu0 0.0
    %2064 = vmatpush1.xpose.msra.mxu0 0.0
    %2065 = vmatprep.subr.mxu0 0.0
    %2066 = vmatpush1.xpose.msra.mxu0 0.0
    %2067 = vmatprep.subr.mxu0 0.0
    %2068 = vmatpush1.xpose.msra.mxu0 0.0
    %2069 = vmatprep.subr.mxu0 0.0
    %2070 = vmatpush1.xpose.msra.mxu0 0.0
    %2071 = vmatprep.subr.mxu0 0.0
    %2072 = vmatpush1.xpose.msra.mxu0 0.0
    %2073 = vmatprep.subr.mxu0 0.0
    %2074 = vmatpush1.xpose.msra.mxu0 0.0
    %2075 = vmatprep.subr.mxu0 0.0
    %2076 = vmatpush1.xpose.msra.mxu0 0.0
    %2077 = vmatprep.mubr.f32.mxu0 0.0
    %2078 = vmatmul.mubr.f32.gmra.mrb[0].mxu0 %v2009
    %v2079 = vpop.f32.mrb[0].mxu0
    %v2080 = vadd.f32 0.0, %v2079
    %v2081 = vpop.f32.mrb[0].mxu0
    %2082 = vdwg.mxu0
    %v2083 = vsel %vm336, %v2080, -inf
    %2084 = vmax.xlane.f32.xlu0 %v2083
    %v2085 = vpop.xlane.xlu0 %2084
    %v2086 = vsub.f32 %v2080, %v2085
    %v2087 = vmul.f32 %v2086, 1.442695
    %v2088 = vpow.pop %v2087
    %v2089 = vsel %vm336, %v2088, 0.0
    %2090 = vadd.xlane.f32.xlu0 %v2089
    %v2091 = vpop.xlane.xlu0 %2090
    %v2092 = vrcp.pop %v2091
    %v2093 = vmul.f32 %v2088, %v2092
    %2094 = vrot.lane.b32.xlu0 %v333, 104
    %v2095 = vpop.permute.xlu0 %2094
    %v2098 = vsel %vm336, %v2093, 0
    %2100 = vmatprep.subr.mxu0 0.0
    %2101 = vmatpush1.msra.mxu0 %v2095
    %2102 = vmatprep.subr.mxu0 0.0
    %2103 = vmatpush1.msra.mxu0 0.0
    %2104 = vmatprep.subr.mxu0 0.0
    %2105 = vmatpush1.msra.mxu0 0.0
    %2106 = vmatprep.subr.mxu0 0.0
    %2107 = vmatpush1.msra.mxu0 0.0
    %2108 = vmatprep.subr.mxu0 0.0
    %2109 = vmatpush1.msra.mxu0 0.0
    %2110 = vmatprep.subr.mxu0 0.0
    %2111 = vmatpush1.msra.mxu0 0.0
    %2112 = vmatprep.subr.mxu0 0.0
    %2113 = vmatpush1.msra.mxu0 0.0
    %2114 = vmatprep.subr.mxu0 0.0
    %2115 = vmatpush1.msra.mxu0 0.0
    %2116 = vmatprep.subr.mxu0 0.0
    %2117 = vmatpush1.msra.mxu0 0.0
    %2118 = vmatprep.subr.mxu0 0.0
    %2119 = vmatpush1.msra.mxu0 0.0
    %2120 = vmatprep.subr.mxu0 0.0
    %2121 = vmatpush1.msra.mxu0 0.0
    %2122 = vmatprep.subr.mxu0 0.0
    %2123 = vmatpush1.msra.mxu0 0.0
    %2124 = vmatprep.subr.mxu0 0.0
    %2125 = vmatpush1.msra.mxu0 0.0
    %2126 = vmatprep.subr.mxu0 0.0
    %2127 = vmatpush1.msra.mxu0 0.0
    %2128 = vmatprep.subr.mxu0 0.0
    %2129 = vmatpush1.msra.mxu0 0.0
    %2130 = vmatprep.subr.mxu0 0.0
    %2131 = vmatpush1.msra.mxu0 0.0
    %2132 = vmatprep.subr.mxu0 0.0
    %2133 = vmatpush1.msra.mxu0 0.0
    %2134 = vmatprep.subr.mxu0 0.0
    %2135 = vmatpush1.msra.mxu0 0.0
    %2136 = vmatprep.subr.mxu0 0.0
    %2137 = vmatpush1.msra.mxu0 0.0
    %2138 = vmatprep.subr.mxu0 0.0
    %2139 = vmatpush1.msra.mxu0 0.0
    %2140 = vmatprep.subr.mxu0 0.0
    %2141 = vmatpush1.msra.mxu0 0.0
    %2142 = vmatprep.subr.mxu0 0.0
    %2143 = vmatpush1.msra.mxu0 0.0
    %2144 = vmatprep.subr.mxu0 0.0
    %2145 = vmatpush1.msra.mxu0 0.0
    %2146 = vmatprep.subr.mxu0 0.0
    %2147 = vmatpush1.msra.mxu0 0.0
    %2148 = vmatprep.subr.mxu0 0.0
    %2149 = vmatpush1.msra.mxu0 0.0
    %2150 = vmatprep.subr.mxu0 0.0
    %2151 = vmatpush1.msra.mxu0 0.0
    %2152 = vmatprep.subr.mxu0 0.0
    %2153 = vmatpush1.msra.mxu0 0.0
    %2154 = vmatprep.subr.mxu0 0.0
    %2155 = vmatpush1.msra.mxu0 0.0
    %2156 = vmatprep.subr.mxu0 0.0
    %2157 = vmatpush1.msra.mxu0 0.0
    %2158 = vmatprep.subr.mxu0 0.0
    %2159 = vmatpush1.msra.mxu0 0.0
    %2160 = vmatprep.subr.mxu0 0.0
    %2161 = vmatpush1.msra.mxu0 0.0
    %2162 = vmatprep.subr.mxu0 0.0
    %2163 = vmatpush1.msra.mxu0 0.0
    %2164 = vmatprep.mubr.f32.mxu0 0.0
    %2165 = vmatmul.mubr.f32.gmra.mrb[0].mxu0 %v2098
    %v2166 = vpop.f32.mrb[0].mxu0
    %v2167 = vadd.f32 0.0, %v2166
    %v2168 = vpop.f32.mrb[0].mxu0
    %2169 = vdwg.mxu0
    %v2171 = vsel %vm336, %v2167, 0
    %2173 = vmatprep.subr.mxu0 0.0
    %2174 = vmatpush1.msra.mxu0 %v1219
    %2175 = vmatprep.subr.mxu0 0.0
    %2176 = vmatpush1.msra.mxu0 0.0
    %2177 = vmatprep.subr.mxu0 0.0
    %2178 = vmatpush1.msra.mxu0 0.0
    %2179 = vmatprep.subr.mxu0 0.0
    %2180 = vmatpush1.msra.mxu0 0.0
    %2181 = vmatprep.subr.mxu0 0.0
    %2182 = vmatpush1.msra.mxu0 0.0
    %2183 = vmatprep.subr.mxu0 0.0
    %2184 = vmatpush1.msra.mxu0 0.0
    %2185 = vmatprep.subr.mxu0 0.0
    %2186 = vmatpush1.msra.mxu0 0.0
    %2187 = vmatprep.subr.mxu0 0.0
    %2188 = vmatpush1.msra.mxu0 0.0
    %2189 = vmatprep.subr.mxu0 0.0
    %2190 = vmatpush1.msra.mxu0 0.0
    %2191 = vmatprep.subr.mxu0 0.0
    %2192 = vmatpush1.msra.mxu0 0.0
    %2193 = vmatprep.subr.mxu0 0.0
    %2194 = vmatpush1.msra.mxu0 0.0
    %2195 = vmatprep.subr.mxu0 0.0
    %2196 = vmatpush1.msra.mxu0 0.0
    %2197 = vmatprep.subr.mxu0 0.0
    %2198 = vmatpush1.msra.mxu0 0.0
    %2199 = vmatprep.subr.mxu0 0.0
    %2200 = vmatpush1.msra.mxu0 0.0
    %2201 = vmatprep.subr.mxu0 0.0
    %2202 = vmatpush1.msra.mxu0 0.0
    %2203 = vmatprep.subr.mxu0 0.0
    %2204 = vmatpush1.msra.mxu0 0.0
    %2205 = vmatprep.subr.mxu0 0.0
    %2206 = vmatpush1.msra.mxu0 0.0
    %2207 = vmatprep.subr.mxu0 0.0
    %2208 = vmatpush1.msra.mxu0 0.0
    %2209 = vmatprep.subr.mxu0 0.0
    %2210 = vmatpush1.msra.mxu0 0.0
    %2211 = vmatprep.subr.mxu0 0.0
    %2212 = vmatpush1.msra.mxu0 0.0
    %2213 = vmatprep.subr.mxu0 0.0
    %2214 = vmatpush1.msra.mxu0 0.0
    %2215 = vmatprep.subr.mxu0 0.0
    %2216 = vmatpush1.msra.mxu0 0.0
    %2217 = vmatprep.subr.mxu0 0.0
    %2218 = vmatpush1.msra.mxu0 0.0
    %2219 = vmatprep.subr.mxu0 0.0
    %2220 = vmatpush1.msra.mxu0 0.0
    %2221 = vmatprep.subr.mxu0 0.0
    %2222 = vmatpush1.msra.mxu0 0.0
    %2223 = vmatprep.subr.mxu0 0.0
    %2224 = vmatpush1.msra.mxu0 0.0
    %2225 = vmatprep.subr.mxu0 0.0
    %2226 = vmatpush1.msra.mxu0 0.0
    %2227 = vmatprep.subr.mxu0 0.0
    %2228 = vmatpush1.msra.mxu0 0.0
    %2229 = vmatprep.subr.mxu0 0.0
    %2230 = vmatpush1.msra.mxu0 0.0
    %2231 = vmatprep.subr.mxu0 0.0
    %2232 = vmatpush1.msra.mxu0 0.0
    %2233 = vmatprep.subr.mxu0 0.0
    %2234 = vmatpush1.msra.mxu0 0.0
    %2235 = vmatprep.subr.mxu0 0.0
    %2236 = vmatpush1.msra.mxu0 0.0
    %2237 = vmatprep.mubr.f32.mxu0 0.0
    %2238 = vmatmul.mubr.f32.gmra.mrb[0].mxu0 %v2171
    %v2239 = vpop.f32.mrb[0].mxu0
    %v2240 = vadd.f32 0.0, %v2239
    %v2241 = vpop.f32.mrb[0].mxu0
    %2242 = vdwg.mxu0
    %v2243 = vadd.f32 %v2004, %v2240
    %v2244 = vlaneseq
    %v2245 = vshrl.u32 %v2244, 7
    %v2246 = vsub.s32 3, %v2245
    %v2247 = vrot.slane %v76, %v2246
    %v2248 = vadd.f32 %v1293, %v2247
    %v2249 = vadd.f32 %v2243, %v2247
    %v2250 = vsel %vm86, %v2248, 0.0
    %2251 = vadd.xlane.f32.xlu0 %v2250
    %v2252 = vpop.xlane.xlu0 %2251
    %v2253 = vsel %vm86, %v2249, 0.0
    %2254 = vadd.xlane.f32.xlu0 %v2253
    %v2255 = vpop.xlane.xlu0 %2254
    %v2256 = vrcp.pop 32.0
    %v2257 = vmul.f32 %v2252, %v2256
    %v2258 = vmul.f32 %v2255, %v2256
    %v2259 = vsub.f32 %v2248, %v2257
    %v2260 = vsub.f32 %v2249, %v2258
    %v2261 = vmul.f32 %v2259, %v2259
    %v2262 = vmul.f32 %v2260, %v2260
    %v2263 = vsel %vm86, %v2261, 0.0
    %2264 = vadd.xlane.f32.xlu0 %v2263
    %v2265 = vpop.xlane.xlu0 %2264
    %v2266 = vsel %vm86, %v2262, 0.0
    %2267 = vadd.xlane.f32.xlu0 %v2266
    %v2268 = vpop.xlane.xlu0 %2267
    %v2269 = vmul.f32 %v2265, %v2256
    %v2270 = vmul.f32 %v2268, %v2256
    %v2271 = vadd.f32 %v2269, 1e-05
    %v2272 = vadd.f32 %v2270, 1e-05
    %v2273 = vrsqrt.pop %v2271
    %v2274 = vrsqrt.pop %v2272
    %v2275 = vmul.f32 %v2259, %v2273
    %v2276 = vmul.f32 %v2260, %v2274
    %v2277 = vlaneseq
    %v2278 = vshrl.u32 %v2277, 7
    %v2279 = vsub.s32 4, %v2278
    %v2280 = vrot.slane %v76, %v2279
    %v2281 = vmul.f32 %v2275, %v2280
    %v2282 = vmul.f32 %v2276, %v2280
    %v2283 = vlaneseq
    %v2284 = vshrl.u32 %v2283, 7
    %v2285 = vsub.s32 5, %v2284
    %v2286 = vrot.slane %v76, %v2285
    %v2287 = vadd.f32 %v2281, %v2286
    %v2288 = vadd.f32 %v2282, %v2286
    %v2289 = vld [vmem:[#allocation7] sm:$0xff]
    %v2290 = vld [vmem:[#allocation7 + $0x8] sm:$0xff]
    %v2291 = vld [vmem:[#allocation7 + $0x10] sm:$0xff]
    %v2292 = vld [vmem:[#allocation7 + $0x18] sm:$0xff]
    %v2293 = vld [vmem:[%s8] sm:$0x1]
    %v2295 = vlaneseq
    %v2296 = vshrl.u32 %v2295, 7
    %v2297 = vsub.s32 0, %v2296
    %v2298 = vrot.slane %v2293, %v2297
    %v2301 = vsel %vm86, %v2287, 0
    %v2304 = vsel %vm86, %v2288, 0
    %2306 = vmatprep.subr.mxu0 0.0
    %2307 = vmatpush1.msra.mxu0 %v2289
    %2308 = vmatprep.subr.mxu0 0.0
    %2309 = vmatpush1.msra.mxu0 %v2290
    %2310 = vmatprep.subr.mxu0 0.0
    %2311 = vmatpush1.msra.mxu0 %v2291
    %2312 = vmatprep.subr.mxu0 0.0
    %2313 = vmatpush1.msra.mxu0 %v2292
    %2314 = vmatprep.subr.mxu0 0.0
    %2315 = vmatpush1.msra.mxu0 0.0
    %2316 = vmatprep.subr.mxu0 0.0
    %2317 = vmatpush1.msra.mxu0 0.0
    %2318 = vmatprep.subr.mxu0 0.0
    %2319 = vmatpush1.msra.mxu0 0.0
    %2320 = vmatprep.subr.mxu0 0.0
    %2321 = vmatpush1.msra.mxu0 0.0
    %2322 = vmatprep.subr.mxu0 0.0
    %2323 = vmatpush1.msra.mxu0 0.0
    %2324 = vmatprep.subr.mxu0 0.0
    %2325 = vmatpush1.msra.mxu0 0.0
    %2326 = vmatprep.subr.mxu0 0.0
    %2327 = vmatpush1.msra.mxu0 0.0
    %2328 = vmatprep.subr.mxu0 0.0
    %2329 = vmatpush1.msra.mxu0 0.0
    %2330 = vmatprep.subr.mxu0 0.0
    %2331 = vmatpush1.msra.mxu0 0.0
    %2332 = vmatprep.subr.mxu0 0.0
    %2333 = vmatpush1.msra.mxu0 0.0
    %2334 = vmatprep.subr.mxu0 0.0
    %2335 = vmatpush1.msra.mxu0 0.0
    %2336 = vmatprep.subr.mxu0 0.0
    %2337 = vmatpush1.msra.mxu0 0.0
    %2338 = vmatprep.subr.mxu0 0.0
    %2339 = vmatpush1.msra.mxu0 0.0
    %2340 = vmatprep.subr.mxu0 0.0
    %2341 = vmatpush1.msra.mxu0 0.0
    %2342 = vmatprep.subr.mxu0 0.0
    %2343 = vmatpush1.msra.mxu0 0.0
    %2344 = vmatprep.subr.mxu0 0.0
    %2345 = vmatpush1.msra.mxu0 0.0
    %2346 = vmatprep.subr.mxu0 0.0
    %2347 = vmatpush1.msra.mxu0 0.0
    %2348 = vmatprep.subr.mxu0 0.0
    %2349 = vmatpush1.msra.mxu0 0.0
    %2350 = vmatprep.subr.mxu0 0.0
    %2351 = vmatpush1.msra.mxu0 0.0
    %2352 = vmatprep.subr.mxu0 0.0
    %2353 = vmatpush1.msra.mxu0 0.0
    %2354 = vmatprep.subr.mxu0 0.0
    %2355 = vmatpush1.msra.mxu0 0.0
    %2356 = vmatprep.subr.mxu0 0.0
    %2357 = vmatpush1.msra.mxu0 0.0
    %2358 = vmatprep.subr.mxu0 0.0
    %2359 = vmatpush1.msra.mxu0 0.0
    %2360 = vmatprep.subr.mxu0 0.0
    %2361 = vmatpush1.msra.mxu0 0.0
    %2362 = vmatprep.subr.mxu0 0.0
    %2363 = vmatpush1.msra.mxu0 0.0
    %2364 = vmatprep.subr.mxu0 0.0
    %2365 = vmatpush1.msra.mxu0 0.0
    %2366 = vmatprep.subr.mxu0 0.0
    %2367 = vmatpush1.msra.mxu0 0.0
    %2368 = vmatprep.subr.mxu0 0.0
    %2369 = vmatpush1.msra.mxu0 0.0
    %2370 = vmatprep.mubr.f32.mxu0 0.0
    %2371 = vmatmul.mubr.f32.gmra.mrb[0].mxu0 %v2301
    %v2372 = vpop.f32.mrb[0].mxu0
    %v2373 = vadd.f32 %v2298, %v2372
    %v2374 = vpop.f32.mrb[0].mxu0
    %2375 = vmatprep.mubr.f32.mxu0 0.0
    %2376 = vmatmul.mubr.f32.gmra.mrb[0].mxu0 %v2304
    %v2377 = vpop.f32.mrb[0].mxu0
    %v2378 = vadd.f32 %v2298, %v2377
    %v2379 = vpop.f32.mrb[0].mxu0
    %2380 = vdwg.mxu0
    %v2381 = vmax.f32 %v2373, 0.0
    %v2382 = vmax.f32 %v2378, 0.0
    %v2383 = vld [vmem:[%s6] sm:$0xff]
    %v2384 = vld [vmem:[%s6 + $0x8] sm:$0xff]
    %v2385 = vld [vmem:[%s6 + $0x10] sm:$0xff]
    %v2386 = vld [vmem:[%s6 + $0x18] sm:$0xff]
    %v2387 = vld [vmem:[%s6 + $0x20] sm:$0xff]
    %v2388 = vld [vmem:[%s6 + $0x28] sm:$0xff]
    %v2389 = vld [vmem:[%s6 + $0x30] sm:$0xff]
    %v2390 = vld [vmem:[%s6 + $0x38] sm:$0xff]
    %v2391 = vlaneseq
    %v2392 = vshrl.u32 %v2391, 7
    %v2393 = vsub.s32 6, %v2392
    %v2394 = vrot.slane %v76, %v2393
    %vm2395 = vcmask 523264
    %v2397 = vsel %vm2395, %v2381, 0
    %v2400 = vsel %vm2395, %v2382, 0
    %2402 = vmatprep.subr.mxu0 0.0
    %2403 = vmatpush1.msra.mxu0 %v2383
    %2404 = vmatprep.subr.mxu0 0.0
    %2405 = vmatpush1.msra.mxu0 %v2384
    %2406 = vmatprep.subr.mxu0 0.0
    %2407 = vmatpush1.msra.mxu0 %v2385
    %2408 = vmatprep.subr.mxu0 0.0
    %2409 = vmatpush1.msra.mxu0 %v2386
    %2410 = vmatprep.subr.mxu0 0.0
    %2411 = vmatpush1.msra.mxu0 %v2387
    %2412 = vmatprep.subr.mxu0 0.0
    %2413 = vmatpush1.msra.mxu0 %v2388
    %2414 = vmatprep.subr.mxu0 0.0
    %2415 = vmatpush1.msra.mxu0 %v2389
    %2416 = vmatprep.subr.mxu0 0.0
    %2417 = vmatpush1.msra.mxu0 %v2390
    %2418 = vmatprep.subr.mxu0 0.0
    %2419 = vmatpush1.msra.mxu0 0.0
    %2420 = vmatprep.subr.mxu0 0.0
    %2421 = vmatpush1.msra.mxu0 0.0
    %2422 = vmatprep.subr.mxu0 0.0
    %2423 = vmatpush1.msra.mxu0 0.0
    %2424 = vmatprep.subr.mxu0 0.0
    %2425 = vmatpush1.msra.mxu0 0.0
    %2426 = vmatprep.subr.mxu0 0.0
    %2427 = vmatpush1.msra.mxu0 0.0
    %2428 = vmatprep.subr.mxu0 0.0
    %2429 = vmatpush1.msra.mxu0 0.0
    %2430 = vmatprep.subr.mxu0 0.0
    %2431 = vmatpush1.msra.mxu0 0.0
    %2432 = vmatprep.subr.mxu0 0.0
    %2433 = vmatpush1.msra.mxu0 0.0
    %2434 = vmatprep.subr.mxu0 0.0
    %2435 = vmatpush1.msra.mxu0 0.0
    %2436 = vmatprep.subr.mxu0 0.0
    %2437 = vmatpush1.msra.mxu0 0.0
    %2438 = vmatprep.subr.mxu0 0.0
    %2439 = vmatpush1.msra.mxu0 0.0
    %2440 = vmatprep.subr.mxu0 0.0
    %2441 = vmatpush1.msra.mxu0 0.0
    %2442 = vmatprep.subr.mxu0 0.0
    %2443 = vmatpush1.msra.mxu0 0.0
    %2444 = vmatprep.subr.mxu0 0.0
    %2445 = vmatpush1.msra.mxu0 0.0
    %2446 = vmatprep.subr.mxu0 0.0
    %2447 = vmatpush1.msra.mxu0 0.0
    %2448 = vmatprep.subr.mxu0 0.0
    %2449 = vmatpush1.msra.mxu0 0.0
    %2450 = vmatprep.subr.mxu0 0.0
    %2451 = vmatpush1.msra.mxu0 0.0
    %2452 = vmatprep.subr.mxu0 0.0
    %2453 = vmatpush1.msra.mxu0 0.0
    %2454 = vmatprep.subr.mxu0 0.0
    %2455 = vmatpush1.msra.mxu0 0.0
    %2456 = vmatprep.subr.mxu0 0.0
    %2457 = vmatpush1.msra.mxu0 0.0
    %2458 = vmatprep.subr.mxu0 0.0
    %2459 = vmatpush1.msra.mxu0 0.0
    %2460 = vmatprep.subr.mxu0 0.0
    %2461 = vmatpush1.msra.mxu0 0.0
    %2462 = vmatprep.subr.mxu0 0.0
    %2463 = vmatpush1.msra.mxu0 0.0
    %2464 = vmatprep.subr.mxu0 0.0
    %2465 = vmatpush1.msra.mxu0 0.0
    %2466 = vmatprep.mubr.f32.mxu0 0.0
    %2467 = vmatmul.mubr.f32.gmra.mrb[0].mxu0 %v2397
    %v2468 = vpop.f32.mrb[0].mxu0
    %v2469 = vadd.f32 %v2394, %v2468
    %v2470 = vpop.f32.mrb[0].mxu0
    %2471 = vmatprep.mubr.f32.mxu0 0.0
    %2472 = vmatmul.mubr.f32.gmra.mrb[0].mxu0 %v2400
    %v2473 = vpop.f32.mrb[0].mxu0
    %v2474 = vadd.f32 %v2394, %v2473
    %v2475 = vpop.f32.mrb[0].mxu0
    %2476 = vdwg.mxu0
    %v2477 = vsel %vm86, %v2469, 0.0
    %2478 = vadd.xlane.f32.xlu0 %v2477
    %v2479 = vpop.xlane.xlu0 %2478
    %v2480 = vsel %vm86, %v2474, 0.0
    %2481 = vadd.xlane.f32.xlu0 %v2480
    %v2482 = vpop.xlane.xlu0 %2481
    %v2483 = vmul.f32 %v2479, %v2256
    %v2484 = vmul.f32 %v2482, %v2256
    %v2485 = vsub.f32 %v2469, %v2483
    %v2486 = vsub.f32 %v2474, %v2484
    %v2487 = vmul.f32 %v2485, %v2485
    %v2488 = vmul.f32 %v2486, %v2486
    %v2489 = vsel %vm86, %v2487, 0.0
    %2490 = vadd.xlane.f32.xlu0 %v2489
    %v2491 = vpop.xlane.xlu0 %2490
    %v2492 = vsel %vm86, %v2488, 0.0
    %2493 = vadd.xlane.f32.xlu0 %v2492
    %v2494 = vpop.xlane.xlu0 %2493
    %v2495 = vmul.f32 %v2491, %v2256
    %v2496 = vmul.f32 %v2494, %v2256
    %v2497 = vadd.f32 %v2495, 1e-05
    %v2498 = vadd.f32 %v2496, 1e-05
    %v2499 = vrsqrt.pop %v2497
    %v2500 = vrsqrt.pop %v2498
    %v2501 = vmul.f32 %v2485, %v2499
    %v2502 = vmul.f32 %v2486, %v2500
    %v2503 = vlaneseq
    %v2504 = vshrl.u32 %v2503, 7
    %v2505 = vsub.s32 7, %v2504
    %v2506 = vrot.slane %v76, %v2505
    %v2507 = vmul.f32 %v2501, %v2506
    %v2508 = vmul.f32 %v2502, %v2506
    %v2509 = vlaneseq
    %v2510 = vshrl.u32 %v2509, 7
    %v2511 = vsub.s32 0, %v2510
    %v2512 = vrot.slane %v77, %v2511
    %v2513 = vadd.f32 %v2507, %v2512
    %v2514 = vadd.f32 %v2508, %v2512
    %2515 = vst.msk [vmem:[#allocation8] sm:$0xff] %vm86, %v2513
    %2516 = vst.msk [vmem:[#allocation8 + $0x8] sm:$0xff] %vm86, %v2514
    // Predicated region
    $region50: #{tpu_custom_call.1} parent=1 // pred_check
      _
    $region51: #{tpu_custom_call.1} parent=1 // pred_check_branch
      %2518 = sbr.rel (0) target = $region53
    $region52: #{tpu_custom_call.1} parent=1 // pred_region
      %s2520 = ssub.s32 256, 256
      %2521 = vsyncadd [#allocation4], %s2520
      %s2522 = sshll.u32 [#allocation8], 4
      %s2523 = int_to_ptr.vmem [resolvable:$true] %s2522
      %2528 = dma.vmem_to_hbm [thread:$0]  %s2523, 256, %s9, [#allocation4], 128, 128, 8
    $region53: #{tpu_custom_call.1} parent=1 // pred_fallthru
      _
    // Predicated region
    $region54: #{tpu_custom_call.1} parent=1 // pred_check
      _
    $region55: #{tpu_custom_call.1} parent=1 // pred_check_branch
      %2530 = sbr.rel (0) target = $region57
    $region56: #{tpu_custom_call.1} parent=1 // pred_region
      %2531 = dma.done [#allocation4], 256
    $region57: #{tpu_custom_call.1} parent=1 // pred_fallthru
      _
    %2532 = vsyncpa [#allocation3], 1
    %2533 = vsyncpa [#allocation6], 1
    %2534 = vsyncpa [#allocation4], 1

</llo_original>
